<compile_context>
chip_gen: v7x
topology: tpu7x:2x2x1
jax: 0.10.0
libtpu: 0.0.40
codegen_flags: <defaults>
</compile_context>

<pallas_src>
import functools

import jax
import jax.numpy as jnp
import numpy as np
from jax.experimental import pallas as pl
from jax.experimental.pallas import tpu as pltpu

_EPS = 1e-5
_LANES = 128


def residual_block_kernel(x_ref,
                          w1_ref, g1_ref, b1_ref,
                          w2_ref, g2_ref, b2_ref,
                          wres_ref, bres_ref,
                          out_ref, y_ref,
                          *, h, bp, k_taps, count, b_valid, lane_padded):
    L = h * bp
    pad = k_taps // 2

    # Lane-validity mask (column c -> b = c mod Bp; b >= b_valid is zero pad),
    # generated in-kernel from an iota instead of a (1, L) HBM->VMEM DMA.
    # Float math is exact here since L << 2^24.
    if lane_padded:
        col = jax.lax.broadcasted_iota(jnp.int32, (1, L), 1).astype(jnp.float32)
        b_idx = col - jnp.floor(col / float(bp)) * float(bp)
        mask = (b_idx < float(b_valid)).astype(jnp.float32)
    else:
        mask = None

    def conv_vertical(src_ref, w_ref, dst_ref):
        # K accumulated MXU matmuls over lane-aligned shifted slices of src.
        # A +-s step along H is a +-s*Bp column offset (Bp multiple of 128), so
        # every slice is lane-aligned and unmasked; the zero-pad edge rows
        # simply receive no contribution from out-of-range taps.
        dst_ref[...] = jnp.dot(w_ref[pad], src_ref[...],
                               preferred_element_type=jnp.float32)
        for k in range(k_taps):
            s = k - pad
            if s == 0:
                continue
            sh = abs(s) * bp
            if s < 0:    # tap reads h - |s|
                dst_ref[:, sh:] += jnp.dot(w_ref[k], src_ref[:, :L - sh],
                                           preferred_element_type=jnp.float32)
            else:        # tap reads h + s
                dst_ref[:, :L - sh] += jnp.dot(w_ref[k], src_ref[:, sh:],
                                               preferred_element_type=jnp.float32)

    def bn_elu(v, gamma, beta):
        # Training-mode BatchNorm refactored into a per-channel scale/shift.
        # Sums use the true (unpadded) element count; padded lanes hold exact
        # zeros so they add nothing to the mean, and the centered squares are
        # masked so they do not bias the variance (centered form avoids the
        # E[x^2]-E[x]^2 cancellation).
        inv_n = 1.0 / count
        mean = jnp.sum(v, axis=1, keepdims=True) * inv_n
        c = v - mean
        c2 = c * c
        if mask is not None:
            c2 = c2 * mask
        var = jnp.sum(c2, axis=1, keepdims=True) * inv_n
        scale = gamma * jax.lax.rsqrt(var + _EPS)
        y = v * scale + (beta - mean * scale)
        # torch ELU uses expm1 on the negative branch; exp(min(y,0))-1 agrees
        # to within f32 rounding at these magnitudes (expm1 lowering is not
        # guaranteed in Mosaic).
        return jnp.where(y > 0, y, jnp.exp(jnp.minimum(y, 0.0)) - 1.0)

    # ---- conv1 -> BN -> ELU (result written back into the same scratch) ----
    conv_vertical(x_ref, w1_ref, y_ref)
    y1 = bn_elu(y_ref[...], g1_ref[...], b1_ref[...])
    if mask is not None:
        # Keep padded lanes exactly zero: conv2 only reads lane-aligned
        # H-shifts of y1 (padded lanes map to padded lanes), so its raw output
        # - and hence its BatchNorm statistics - stays exact.
        y1 = y1 * mask
    y_ref[...] = y1

    # ---- conv2 accumulated straight into the output block ------------------
    conv_vertical(y_ref, w2_ref, out_ref)
    y2 = bn_elu(out_ref[...], g2_ref[...], b2_ref[...])

    # ---- residual 1x1 conv, sliced straight from the input ref -------------
    out_ref[...] = y2 + jnp.dot(wres_ref[...], x_ref[...],
                                preferred_element_type=jnp.float32) + bres_ref[...]


def residual_block_1d(x_nchw, params):
    """x_nchw: (N, Cin, H, W) float32 -> (N, Cout, H, W) float32."""
    w1, g1, b1, w2, g2, b2, wres, bres = params
    N, Cin, H, W = x_nchw.shape
    K, _, Cout = w1.shape
    B = N * W
    Bp = ((B + _LANES - 1) // _LANES) * _LANES
    L = H * Bp
    lane_padded = Bp != B

    # Layout plumbing only: NCHW -> (Cin, H, B) -> lane-pad B -> (Cin, H*Bp).
    x_chb = jnp.transpose(x_nchw, (1, 2, 0, 3)).reshape(Cin, H, B)
    if lane_padded:
        x_chb = jnp.pad(x_chb, ((0, 0), (0, 0), (0, Bp - B)))
    x2d = x_chb.reshape(Cin, L)

    # Per-tap weight matrices (one MXU matmul per tap).
    w1m = jnp.transpose(w1, (0, 2, 1))          # (K, Cout, Cin)
    w2m = jnp.transpose(w2, (0, 2, 1))          # (K, Cout, Cout)
    wrm = jnp.transpose(wres)                   # (Cout, Cin)

    kernel = functools.partial(
        residual_block_kernel,
        h=H, bp=Bp, k_taps=K, count=float(N * H * W),
        b_valid=B, lane_padded=lane_padded)

    # Generation-aware VMEM budget (v5e/v6e: 128 MiB physical, v7x: 64 MiB);
    # take ~75% of the reported capacity and leave headroom for Mosaic scratch.
    try:
        vmem_cap = pltpu.get_tpu_info().vmem_capacity_bytes
    except Exception:  # best effort; fall back to a safe (v7x-compatible) value
        vmem_cap = 64 * 1024 * 1024
    vmem_limit = max(32 * 1024 * 1024,
                     min(int(vmem_cap * 3 // 4), 100 * 1024 * 1024))

    vmem = pl.BlockSpec(memory_space=pltpu.MemorySpace.VMEM)
    # TODO(synk): for large N*W, grid over lane-tiles of Bp (block (C, H, TB),
    # TB a multiple of 128) with a two-pass BatchNorm (partial sum/sumsq pass,
    # then normalize) and dimension_semantics=("parallel", ...) so v7x's two
    # TensorCores split the tiles and HBM DMA pipelines with compute; BN
    # couples all of (N, H, W), so a naive per-tile grid would change stats.
    # TODO(synk): on v6e/v7x, bf16 storage for x / y1 / out would halve HBM and
    # VMEM traffic (keep BN statistics and scale/shift math in f32).
    out2d = pl.pallas_call(
        kernel,
        out_shape=jax.ShapeDtypeStruct((Cout, L), jnp.float32),
        in_specs=[vmem] * 9,
        out_specs=vmem,
        scratch_shapes=[pltpu.VMEM((Cout, L), jnp.float32)],   # conv1 / y1 buffer
        compiler_params=pltpu.CompilerParams(vmem_limit_bytes=vmem_limit),
    )(x2d,
      w1m, g1.reshape(Cout, 1), b1.reshape(Cout, 1),
      w2m, g2.reshape(Cout, 1), b2.reshape(Cout, 1),
      wrm, bres.reshape(Cout, 1))

    out = out2d.reshape(Cout, H, Bp)[:, :, :B].reshape(Cout, H, N, W)
    return jnp.transpose(out, (2, 0, 1, 3))


# ------------------------- pure-JAX reference -------------------------------
def ref_forward(x, params):
    w1, g1, b1, w2, g2, b2, wres, bres = params
    K = w1.shape[0]
    pad = K // 2

    def conv_v(v, w_kio):  # w_kio: (K, Cin, Cout) -> OIHW (Cout, Cin, K, 1)
        w = jnp.transpose(w_kio, (2, 1, 0))[:, :, :, None]
        return jax.lax.conv_general_dilated(
            v, w, (1, 1), [(pad, pad), (0, 0)],
            dimension_numbers=('NCHW', 'OIHW', 'NCHW'))

    def bn(v, g, b):
        mean = jnp.mean(v, axis=(0, 2, 3), keepdims=True)
        var = jnp.mean((v - mean) ** 2, axis=(0, 2, 3), keepdims=True)
        return ((v - mean) / jnp.sqrt(var + _EPS)
                * g.reshape(1, -1, 1, 1) + b.reshape(1, -1, 1, 1))

    def elu(v):
        return jnp.where(v > 0, v, jnp.expm1(v))

    y = elu(bn(conv_v(x, w1), g1, b1))
    y = elu(bn(conv_v(y, w2), g2, b2))
    res = jax.lax.conv_general_dilated(
        x, jnp.transpose(wres, (1, 0))[:, :, None, None], (1, 1),
        [(0, 0), (0, 0)], dimension_numbers=('NCHW', 'OIHW', 'NCHW'))
    res = res + bres.reshape(1, -1, 1, 1)
    return y + res


if __name__ == "__main__":
    # Module config: in_channels=4, out_channels=8, kernel_size=3
    N, Cin, Cout, H, W, K = 2, 4, 8, 16, 16, 3

    key = jax.random.PRNGKey(0)
    k = jax.random.split(key, 9)
    x = jax.random.normal(k[0], (N, Cin, H, W), jnp.float32)

    # Deterministic synthetic parameters (shapes dictated by the module).
    w1 = jax.random.normal(k[1], (K, Cin, Cout), jnp.float32) * 0.3   # conv1 weight
    g1 = 1.0 + 0.1 * jax.random.normal(k[2], (Cout,), jnp.float32)    # BN1 gamma
    b1 = 0.1 * jax.random.normal(k[3], (Cout,), jnp.float32)          # BN1 beta
    w2 = jax.random.normal(k[4], (K, Cout, Cout), jnp.float32) * 0.3  # conv2 weight
    g2 = 1.0 + 0.1 * jax.random.normal(k[5], (Cout,), jnp.float32)    # BN2 gamma
    b2 = 0.1 * jax.random.normal(k[6], (Cout,), jnp.float32)          # BN2 beta
    wres = jax.random.normal(k[7], (Cin, Cout), jnp.float32) * 0.3    # re_sample weight
    bres = 0.1 * jax.random.normal(k[8], (Cout,), jnp.float32)        # re_sample bias
    # (If Cin == Cout, pass wres = identity and bres = 0 to reproduce the
    #  "re_sample is None" branch exactly.)
    params = (w1, g1, b1, w2, g2, b2, wres, bres)

    out = residual_block_1d(x, params)
    out = jax.block_until_ready(out)

    ref = jax.block_until_ready(ref_forward(x, params))
    np.testing.assert_allclose(np.asarray(out), np.asarray(ref),
                               rtol=2e-3, atol=2e-3)

    # TODO(synk): BatchNorm running_mean/running_var buffer updates (module
    # state mutation) are not reproduced; only the forward math is.
    print("KERNEL_OK")
</pallas_src>

<mosaic_0001>
module attributes {stable_mosaic.version = 11 : i64} {
  func.func @residual_block_kernel(%arg0: memref<4x2048xf32, #tpu.memory_space<vmem>>, %arg1: memref<3x8x4xf32, #tpu.memory_space<vmem>>, %arg2: memref<8x1xf32, #tpu.memory_space<vmem>>, %arg3: memref<8x1xf32, #tpu.memory_space<vmem>>, %arg4: memref<3x8x8xf32, #tpu.memory_space<vmem>>, %arg5: memref<8x1xf32, #tpu.memory_space<vmem>>, %arg6: memref<8x1xf32, #tpu.memory_space<vmem>>, %arg7: memref<8x4xf32, #tpu.memory_space<vmem>>, %arg8: memref<8x1xf32, #tpu.memory_space<vmem>>, %arg9: memref<8x2048xf32, #tpu.memory_space<vmem>>, %arg10: memref<8x2048xf32, #tpu.memory_space<vmem>>) attributes {dimension_semantics = [], scalar_prefetch = 0 : i64, scratch_operands = 1 : i64, tpu.core_type = #tpu.core_type<tc>} {
    %0 = tpu.iota {dimensions = array<i32: 1>} : vector<1x2048xi32>
    %1 = arith.sitofp %0 : vector<1x2048xi32> to vector<1x2048xf32>
    %cst = arith.constant 1.280000e+02 : f32
    %2 = vector.broadcast %cst : f32 to vector<1x2048xf32>
    %3 = arith.divf %1, %2 : vector<1x2048xf32>
    %4 = math.floor %3 : vector<1x2048xf32>
    %cst_0 = arith.constant 1.280000e+02 : f32
    %5 = vector.broadcast %cst_0 : f32 to vector<1x2048xf32>
    %6 = arith.mulf %4, %5 : vector<1x2048xf32>
    %7 = arith.subf %1, %6 : vector<1x2048xf32>
    %cst_1 = arith.constant 3.200000e+01 : f32
    %8 = vector.broadcast %cst_1 : f32 to vector<1x2048xf32>
    %9 = arith.cmpf olt, %7, %8 : vector<1x2048xf32>
    %10 = arith.extui %9 : vector<1x2048xi1> to vector<1x2048xi32>
    %11 = arith.sitofp %10 : vector<1x2048xi32> to vector<1x2048xf32>
    %c1 = arith.constant 1 : index
    %c0 = arith.constant 0 : index
    %c0_2 = arith.constant 0 : index
    %12 = vector.load %arg1[%c1, %c0, %c0_2] : memref<3x8x4xf32, #tpu.memory_space<vmem>>, vector<1x8x4xf32>
    %13 = vector.shape_cast %12 : vector<1x8x4xf32> to vector<8x4xf32>
    %c0_3 = arith.constant 0 : index
    %c0_4 = arith.constant 0 : index
    %14 = vector.load %arg0[%c0_3, %c0_4] : memref<4x2048xf32, #tpu.memory_space<vmem>>, vector<4x2048xf32>
    %cst_5 = arith.constant dense<0.000000e+00> : vector<8x2048xf32>
    %15 = tpu.matmul %13, %14, %cst_5 {dimension_numbers = #tpu.dot_dimension_numbers<[1], [0], [0], [1], [0, 0, 1, 1], [], []>} : vector<8x4xf32>, vector<4x2048xf32>, vector<8x2048xf32> -> vector<8x2048xf32>
    %c0_6 = arith.constant 0 : index
    %c0_7 = arith.constant 0 : index
    %16 = vector.load %arg10[%c0_6, %c0_7] : memref<8x2048xf32, #tpu.memory_space<vmem>>, vector<8x2048xf32>
    tpu.vector_store %arg10[%c0_6, %c0_7], %15 {strides = array<i32>} : memref<8x2048xf32, #tpu.memory_space<vmem>>, vector<8x2048xf32>,
    %c0_8 = arith.constant 0 : index
    %c128 = arith.constant 128 : index
    %17 = vector.load %arg10[%c0_8, %c128] : memref<8x2048xf32, #tpu.memory_space<vmem>>, vector<8x1920xf32>
    %c0_9 = arith.constant 0 : index
    %c0_10 = arith.constant 0 : index
    %c0_11 = arith.constant 0 : index
    %18 = vector.load %arg1[%c0_9, %c0_10, %c0_11] : memref<3x8x4xf32, #tpu.memory_space<vmem>>, vector<1x8x4xf32>
    %19 = vector.shape_cast %18 : vector<1x8x4xf32> to vector<8x4xf32>
    %c0_12 = arith.constant 0 : index
    %c0_13 = arith.constant 0 : index
    %20 = vector.load %arg0[%c0_12, %c0_13] : memref<4x2048xf32, #tpu.memory_space<vmem>>, vector<4x1920xf32>
    %cst_14 = arith.constant dense<0.000000e+00> : vector<8x1920xf32>
    %21 = tpu.matmul %19, %20, %cst_14 {dimension_numbers = #tpu.dot_dimension_numbers<[1], [0], [0], [1], [0, 0, 1, 1], [], []>} : vector<8x4xf32>, vector<4x1920xf32>, vector<8x1920xf32> -> vector<8x1920xf32>
    %22 = arith.addf %17, %21 : vector<8x1920xf32>
    %c0_15 = arith.constant 0 : index
    %c128_16 = arith.constant 128 : index
    %23 = vector.load %arg10[%c0_15, %c128_16] : memref<8x2048xf32, #tpu.memory_space<vmem>>, vector<8x1920xf32>
    tpu.vector_store %arg10[%c0_15, %c128_16], %22 {strides = array<i32>} : memref<8x2048xf32, #tpu.memory_space<vmem>>, vector<8x1920xf32>,
    %c0_17 = arith.constant 0 : index
    %c0_18 = arith.constant 0 : index
    %24 = vector.load %arg10[%c0_17, %c0_18] : memref<8x2048xf32, #tpu.memory_space<vmem>>, vector<8x1920xf32>
    %c2 = arith.constant 2 : index
    %c0_19 = arith.constant 0 : index
    %c0_20 = arith.constant 0 : index
    %25 = vector.load %arg1[%c2, %c0_19, %c0_20] : memref<3x8x4xf32, #tpu.memory_space<vmem>>, vector<1x8x4xf32>
    %26 = vector.shape_cast %25 : vector<1x8x4xf32> to vector<8x4xf32>
    %c0_21 = arith.constant 0 : index
    %c128_22 = arith.constant 128 : index
    %27 = vector.load %arg0[%c0_21, %c128_22] : memref<4x2048xf32, #tpu.memory_space<vmem>>, vector<4x1920xf32>
    %cst_23 = arith.constant dense<0.000000e+00> : vector<8x1920xf32>
    %28 = tpu.matmul %26, %27, %cst_23 {dimension_numbers = #tpu.dot_dimension_numbers<[1], [0], [0], [1], [0, 0, 1, 1], [], []>} : vector<8x4xf32>, vector<4x1920xf32>, vector<8x1920xf32> -> vector<8x1920xf32>
    %29 = arith.addf %24, %28 : vector<8x1920xf32>
    %c0_24 = arith.constant 0 : index
    %c0_25 = arith.constant 0 : index
    %30 = vector.load %arg10[%c0_24, %c0_25] : memref<8x2048xf32, #tpu.memory_space<vmem>>, vector<8x1920xf32>
    tpu.vector_store %arg10[%c0_24, %c0_25], %29 {strides = array<i32>} : memref<8x2048xf32, #tpu.memory_space<vmem>>, vector<8x1920xf32>,
    %c0_26 = arith.constant 0 : index
    %c0_27 = arith.constant 0 : index
    %31 = vector.load %arg10[%c0_26, %c0_27] : memref<8x2048xf32, #tpu.memory_space<vmem>>, vector<8x2048xf32>
    %c0_28 = arith.constant 0 : index
    %c0_29 = arith.constant 0 : index
    %32 = vector.load %arg2[%c0_28, %c0_29] : memref<8x1xf32, #tpu.memory_space<vmem>>, vector<8x1xf32>
    %c0_30 = arith.constant 0 : index
    %c0_31 = arith.constant 0 : index
    %33 = vector.load %arg3[%c0_30, %c0_31] : memref<8x1xf32, #tpu.memory_space<vmem>>, vector<8x1xf32>
    %cst_32 = arith.constant dense<0.000000e+00> : vector<8xf32>
    %34 = vector.multi_reduction <add>, %31, %cst_32 [1] : vector<8x2048xf32> to vector<8xf32>
    %35 = vector.shape_cast %34 : vector<8xf32> to vector<8x1xf32>
    %cst_33 = arith.constant 0.001953125 : f32
    %36 = vector.broadcast %cst_33 : f32 to vector<8x1xf32>
    %37 = arith.mulf %35, %36 : vector<8x1xf32>
    %38 = vector.broadcast %37 : vector<8x1xf32> to vector<8x2048xf32>
    %39 = arith.subf %31, %38 : vector<8x2048xf32>
    %40 = arith.mulf %39, %39 : vector<8x2048xf32>
    %41 = vector.broadcast %11 : vector<1x2048xf32> to vector<8x2048xf32>
    %42 = arith.mulf %40, %41 : vector<8x2048xf32>
    %cst_34 = arith.constant dense<0.000000e+00> : vector<8xf32>
    %43 = vector.multi_reduction <add>, %42, %cst_34 [1] : vector<8x2048xf32> to vector<8xf32>
    %44 = vector.shape_cast %43 : vector<8xf32> to vector<8x1xf32>
    %cst_35 = arith.constant 0.001953125 : f32
    %45 = vector.broadcast %cst_35 : f32 to vector<8x1xf32>
    %46 = arith.mulf %44, %45 : vector<8x1xf32>
    %cst_36 = arith.constant 9.99999974E-6 : f32
    %47 = vector.broadcast %cst_36 : f32 to vector<8x1xf32>
    %48 = arith.addf %46, %47 : vector<8x1xf32>
    %49 = math.rsqrt %48 : vector<8x1xf32>
    %50 = arith.mulf %32, %49 : vector<8x1xf32>
    %51 = vector.broadcast %50 : vector<8x1xf32> to vector<8x2048xf32>
    %52 = arith.mulf %31, %51 : vector<8x2048xf32>
    %53 = arith.mulf %37, %50 : vector<8x1xf32>
    %54 = arith.subf %33, %53 : vector<8x1xf32>
    %55 = vector.broadcast %54 : vector<8x1xf32> to vector<8x2048xf32>
    %56 = arith.addf %52, %55 : vector<8x2048xf32>
    %cst_37 = arith.constant 0.000000e+00 : f32
    %57 = vector.broadcast %cst_37 : f32 to vector<8x2048xf32>
    %58 = arith.cmpf ogt, %56, %57 : vector<8x2048xf32>
    %cst_38 = arith.constant 0.000000e+00 : f32
    %59 = vector.broadcast %cst_38 : f32 to vector<8x2048xf32>
    %60 = arith.minimumf %56, %59 : vector<8x2048xf32>
    %61 = math.exp %60 : vector<8x2048xf32>
    %cst_39 = arith.constant 1.000000e+00 : f32
    %62 = vector.broadcast %cst_39 : f32 to vector<8x2048xf32>
    %63 = arith.subf %61, %62 : vector<8x2048xf32>
    %64 = arith.select %58, %56, %63 : vector<8x2048xi1>, vector<8x2048xf32>
    %65 = vector.broadcast %11 : vector<1x2048xf32> to vector<8x2048xf32>
    %66 = arith.mulf %64, %65 : vector<8x2048xf32>
    %c0_40 = arith.constant 0 : index
    %c0_41 = arith.constant 0 : index
    %67 = vector.load %arg10[%c0_40, %c0_41] : memref<8x2048xf32, #tpu.memory_space<vmem>>, vector<8x2048xf32>
    tpu.vector_store %arg10[%c0_40, %c0_41], %66 {strides = array<i32>} : memref<8x2048xf32, #tpu.memory_space<vmem>>, vector<8x2048xf32>,
    %c1_42 = arith.constant 1 : index
    %c0_43 = arith.constant 0 : index
    %c0_44 = arith.constant 0 : index
    %68 = vector.load %arg4[%c1_42, %c0_43, %c0_44] : memref<3x8x8xf32, #tpu.memory_space<vmem>>, vector<1x8x8xf32>
    %69 = vector.shape_cast %68 : vector<1x8x8xf32> to vector<8x8xf32>
    %c0_45 = arith.constant 0 : index
    %c0_46 = arith.constant 0 : index
    %70 = vector.load %arg10[%c0_45, %c0_46] : memref<8x2048xf32, #tpu.memory_space<vmem>>, vector<8x2048xf32>
    %cst_47 = arith.constant dense<0.000000e+00> : vector<8x2048xf32>
    %71 = tpu.matmul %69, %70, %cst_47 {dimension_numbers = #tpu.dot_dimension_numbers<[1], [0], [0], [1], [0, 0, 1, 1], [], []>} : vector<8x8xf32>, vector<8x2048xf32>, vector<8x2048xf32> -> vector<8x2048xf32>
    %c0_48 = arith.constant 0 : index
    %c0_49 = arith.constant 0 : index
    %72 = vector.load %arg9[%c0_48, %c0_49] : memref<8x2048xf32, #tpu.memory_space<vmem>>, vector<8x2048xf32>
    tpu.vector_store %arg9[%c0_48, %c0_49], %71 {strides = array<i32>} : memref<8x2048xf32, #tpu.memory_space<vmem>>, vector<8x2048xf32>,
    %c0_50 = arith.constant 0 : index
    %c128_51 = arith.constant 128 : index
    %73 = vector.load %arg9[%c0_50, %c128_51] : memref<8x2048xf32, #tpu.memory_space<vmem>>, vector<8x1920xf32>
    %c0_52 = arith.constant 0 : index
    %c0_53 = arith.constant 0 : index
    %c0_54 = arith.constant 0 : index
    %74 = vector.load %arg4[%c0_52, %c0_53, %c0_54] : memref<3x8x8xf32, #tpu.memory_space<vmem>>, vector<1x8x8xf32>
    %75 = vector.shape_cast %74 : vector<1x8x8xf32> to vector<8x8xf32>
    %c0_55 = arith.constant 0 : index
    %c0_56 = arith.constant 0 : index
    %76 = vector.load %arg10[%c0_55, %c0_56] : memref<8x2048xf32, #tpu.memory_space<vmem>>, vector<8x1920xf32>
    %cst_57 = arith.constant dense<0.000000e+00> : vector<8x1920xf32>
    %77 = tpu.matmul %75, %76, %cst_57 {dimension_numbers = #tpu.dot_dimension_numbers<[1], [0], [0], [1], [0, 0, 1, 1], [], []>} : vector<8x8xf32>, vector<8x1920xf32>, vector<8x1920xf32> -> vector<8x1920xf32>
    %78 = arith.addf %73, %77 : vector<8x1920xf32>
    %c0_58 = arith.constant 0 : index
    %c128_59 = arith.constant 128 : index
    %79 = vector.load %arg9[%c0_58, %c128_59] : memref<8x2048xf32, #tpu.memory_space<vmem>>, vector<8x1920xf32>
    tpu.vector_store %arg9[%c0_58, %c128_59], %78 {strides = array<i32>} : memref<8x2048xf32, #tpu.memory_space<vmem>>, vector<8x1920xf32>,
    %c0_60 = arith.constant 0 : index
    %c0_61 = arith.constant 0 : index
    %80 = vector.load %arg9[%c0_60, %c0_61] : memref<8x2048xf32, #tpu.memory_space<vmem>>, vector<8x1920xf32>
    %c2_62 = arith.constant 2 : index
    %c0_63 = arith.constant 0 : index
    %c0_64 = arith.constant 0 : index
    %81 = vector.load %arg4[%c2_62, %c0_63, %c0_64] : memref<3x8x8xf32, #tpu.memory_space<vmem>>, vector<1x8x8xf32>
    %82 = vector.shape_cast %81 : vector<1x8x8xf32> to vector<8x8xf32>
    %c0_65 = arith.constant 0 : index
    %c128_66 = arith.constant 128 : index
    %83 = vector.load %arg10[%c0_65, %c128_66] : memref<8x2048xf32, #tpu.memory_space<vmem>>, vector<8x1920xf32>
    %cst_67 = arith.constant dense<0.000000e+00> : vector<8x1920xf32>
    %84 = tpu.matmul %82, %83, %cst_67 {dimension_numbers = #tpu.dot_dimension_numbers<[1], [0], [0], [1], [0, 0, 1, 1], [], []>} : vector<8x8xf32>, vector<8x1920xf32>, vector<8x1920xf32> -> vector<8x1920xf32>
    %85 = arith.addf %80, %84 : vector<8x1920xf32>
    %c0_68 = arith.constant 0 : index
    %c0_69 = arith.constant 0 : index
    %86 = vector.load %arg9[%c0_68, %c0_69] : memref<8x2048xf32, #tpu.memory_space<vmem>>, vector<8x1920xf32>
    tpu.vector_store %arg9[%c0_68, %c0_69], %85 {strides = array<i32>} : memref<8x2048xf32, #tpu.memory_space<vmem>>, vector<8x1920xf32>,
    %c0_70 = arith.constant 0 : index
    %c0_71 = arith.constant 0 : index
    %87 = vector.load %arg9[%c0_70, %c0_71] : memref<8x2048xf32, #tpu.memory_space<vmem>>, vector<8x2048xf32>
    %c0_72 = arith.constant 0 : index
    %c0_73 = arith.constant 0 : index
    %88 = vector.load %arg5[%c0_72, %c0_73] : memref<8x1xf32, #tpu.memory_space<vmem>>, vector<8x1xf32>
    %c0_74 = arith.constant 0 : index
    %c0_75 = arith.constant 0 : index
    %89 = vector.load %arg6[%c0_74, %c0_75] : memref<8x1xf32, #tpu.memory_space<vmem>>, vector<8x1xf32>
    %cst_76 = arith.constant dense<0.000000e+00> : vector<8xf32>
    %90 = vector.multi_reduction <add>, %87, %cst_76 [1] : vector<8x2048xf32> to vector<8xf32>
    %91 = vector.shape_cast %90 : vector<8xf32> to vector<8x1xf32>
    %cst_77 = arith.constant 0.001953125 : f32
    %92 = vector.broadcast %cst_77 : f32 to vector<8x1xf32>
    %93 = arith.mulf %91, %92 : vector<8x1xf32>
    %94 = vector.broadcast %93 : vector<8x1xf32> to vector<8x2048xf32>
    %95 = arith.subf %87, %94 : vector<8x2048xf32>
    %96 = arith.mulf %95, %95 : vector<8x2048xf32>
    %97 = vector.broadcast %11 : vector<1x2048xf32> to vector<8x2048xf32>
    %98 = arith.mulf %96, %97 : vector<8x2048xf32>
    %cst_78 = arith.constant dense<0.000000e+00> : vector<8xf32>
    %99 = vector.multi_reduction <add>, %98, %cst_78 [1] : vector<8x2048xf32> to vector<8xf32>
    %100 = vector.shape_cast %99 : vector<8xf32> to vector<8x1xf32>
    %cst_79 = arith.constant 0.001953125 : f32
    %101 = vector.broadcast %cst_79 : f32 to vector<8x1xf32>
    %102 = arith.mulf %100, %101 : vector<8x1xf32>
    %cst_80 = arith.constant 9.99999974E-6 : f32
    %103 = vector.broadcast %cst_80 : f32 to vector<8x1xf32>
    %104 = arith.addf %102, %103 : vector<8x1xf32>
    %105 = math.rsqrt %104 : vector<8x1xf32>
    %106 = arith.mulf %88, %105 : vector<8x1xf32>
    %107 = vector.broadcast %106 : vector<8x1xf32> to vector<8x2048xf32>
    %108 = arith.mulf %87, %107 : vector<8x2048xf32>
    %109 = arith.mulf %93, %106 : vector<8x1xf32>
    %110 = arith.subf %89, %109 : vector<8x1xf32>
    %111 = vector.broadcast %110 : vector<8x1xf32> to vector<8x2048xf32>
    %112 = arith.addf %108, %111 : vector<8x2048xf32>
    %cst_81 = arith.constant 0.000000e+00 : f32
    %113 = vector.broadcast %cst_81 : f32 to vector<8x2048xf32>
    %114 = arith.cmpf ogt, %112, %113 : vector<8x2048xf32>
    %cst_82 = arith.constant 0.000000e+00 : f32
    %115 = vector.broadcast %cst_82 : f32 to vector<8x2048xf32>
    %116 = arith.minimumf %112, %115 : vector<8x2048xf32>
    %117 = math.exp %116 : vector<8x2048xf32>
    %cst_83 = arith.constant 1.000000e+00 : f32
    %118 = vector.broadcast %cst_83 : f32 to vector<8x2048xf32>
    %119 = arith.subf %117, %118 : vector<8x2048xf32>
    %120 = arith.select %114, %112, %119 : vector<8x2048xi1>, vector<8x2048xf32>
    %c0_84 = arith.constant 0 : index
    %c0_85 = arith.constant 0 : index
    %121 = vector.load %arg7[%c0_84, %c0_85] : memref<8x4xf32, #tpu.memory_space<vmem>>, vector<8x4xf32>
    %c0_86 = arith.constant 0 : index
    %c0_87 = arith.constant 0 : index
    %122 = vector.load %arg0[%c0_86, %c0_87] : memref<4x2048xf32, #tpu.memory_space<vmem>>, vector<4x2048xf32>
    %cst_88 = arith.constant dense<0.000000e+00> : vector<8x2048xf32>
    %123 = tpu.matmul %121, %122, %cst_88 {dimension_numbers = #tpu.dot_dimension_numbers<[1], [0], [0], [1], [0, 0, 1, 1], [], []>} : vector<8x4xf32>, vector<4x2048xf32>, vector<8x2048xf32> -> vector<8x2048xf32>
    %124 = arith.addf %120, %123 : vector<8x2048xf32>
    %c0_89 = arith.constant 0 : index
    %c0_90 = arith.constant 0 : index
    %125 = vector.load %arg8[%c0_89, %c0_90] : memref<8x1xf32, #tpu.memory_space<vmem>>, vector<8x1xf32>
    %126 = vector.broadcast %125 : vector<8x1xf32> to vector<8x2048xf32>
    %127 = arith.addf %124, %126 : vector<8x2048xf32>
    %c0_91 = arith.constant 0 : index
    %c0_92 = arith.constant 0 : index
    %128 = vector.load %arg9[%c0_91, %c0_92] : memref<8x2048xf32, #tpu.memory_space<vmem>>, vector<8x2048xf32>
    tpu.vector_store %arg9[%c0_91, %c0_92], %127 {strides = array<i32>} : memref<8x2048xf32, #tpu.memory_space<vmem>>, vector<8x2048xf32>,
    return
  }
}

</mosaic_0001>

<llo_original>
// kernel: tpu_custom_call.1
$region0: #{tpu_custom_call.1}
  #allocation0 [shape = 'u32[]', space=smem, size = 0x4, offset = 0x4, fixed_abs, tag = 'smem constant byte address 0x4 - core index']
  #allocation1 [shape = 'u32[144,128]{1,0:T(1,128)}', space=vmem, size = 0x12000, scoped, tag = 'internal scratch']
  #allocation2 [shape = 'f32[8,2048]{1,0:T(8,128)}', space=vmem, size = 0x10000, scoped, tag = 'scratch operand']
  %s0 = inlined_call_operand.vmem [shape: f32[4,2048], index: 0, kind: input, shape index: {}]
  %s1 = inlined_call_operand.vmem [shape: f32[3,8,4], index: 1, kind: input, shape index: {}]
  %s2 = inlined_call_operand.vmem [shape: f32[8,1], index: 2, kind: input, shape index: {}]
  %s3 = inlined_call_operand.vmem [shape: f32[8,1], index: 3, kind: input, shape index: {}]
  %s4 = inlined_call_operand.vmem [shape: f32[3,8,8], index: 4, kind: input, shape index: {}]
  %s5 = inlined_call_operand.vmem [shape: f32[8,1], index: 5, kind: input, shape index: {}]
  %s6 = inlined_call_operand.vmem [shape: f32[8,1], index: 6, kind: input, shape index: {}]
  %s7 = inlined_call_operand.vmem [shape: f32[8,4], index: 7, kind: input, shape index: {}]
  %s8 = inlined_call_operand.vmem [shape: f32[8,1], index: 8, kind: input, shape index: {}]
  %s9 = inlined_call_operand.hbm [shape: f32[8,2048], index: 9, kind: output, shape index: {}]
  %s10 = sld [smem:[#allocation0]]
  $region46: #{tpu_custom_call.1} parent=0
    _
  %s12 = ssub.s32 1, %s10
  %s13 = scalar_select 0, %s12, %s10
  $region1: #{tpu_custom_call.1} parent=0
    #allocation3 [shape = 'u8[65536]{0}', space=vmem, size = 0x10000, scoped, tag = 'output window, operand 0, single buffered']
    #allocation4 [shape = 's32[1]{0}', space=sflag, size = 0x4, scoped, tag = 'scoped memory for tpu_custom_call.1']
    %14 = vsyncpa [#allocation4], 0
    // Predicated region
    $region2: #{tpu_custom_call.1} parent=1 // pred_check
      _
    $region3: #{tpu_custom_call.1} parent=1 // pred_check_branch
      %16 = sbr.rel (0) target = $region5
    $region4: #{tpu_custom_call.1} parent=1 // pred_region
      _
    $region5: #{tpu_custom_call.1} parent=1 // pred_fallthru
      _
    // Predicated region
    $region6: #{tpu_custom_call.1} parent=1 // pred_check
      _
    $region7: #{tpu_custom_call.1} parent=1 // pred_check_branch
      %18 = sbr.rel (0) target = $region9
    $region8: #{tpu_custom_call.1} parent=1 // pred_region
      _
    $region9: #{tpu_custom_call.1} parent=1 // pred_fallthru
      _
    // Predicated region
    $region10: #{tpu_custom_call.1} parent=1 // pred_check
      _
    $region11: #{tpu_custom_call.1} parent=1 // pred_check_branch
      %20 = sbr.rel (0) target = $region13
    $region12: #{tpu_custom_call.1} parent=1 // pred_region
      _
    $region13: #{tpu_custom_call.1} parent=1 // pred_fallthru
      _
    // Predicated region
    $region14: #{tpu_custom_call.1} parent=1 // pred_check
      _
    $region15: #{tpu_custom_call.1} parent=1 // pred_check_branch
      %22 = sbr.rel (0) target = $region17
    $region16: #{tpu_custom_call.1} parent=1 // pred_region
      _
    $region17: #{tpu_custom_call.1} parent=1 // pred_fallthru
      _
    // Predicated region
    $region18: #{tpu_custom_call.1} parent=1 // pred_check
      _
    $region19: #{tpu_custom_call.1} parent=1 // pred_check_branch
      %24 = sbr.rel (0) target = $region21
    $region20: #{tpu_custom_call.1} parent=1 // pred_region
      _
    $region21: #{tpu_custom_call.1} parent=1 // pred_fallthru
      _
    // Predicated region
    $region22: #{tpu_custom_call.1} parent=1 // pred_check
      _
    $region23: #{tpu_custom_call.1} parent=1 // pred_check_branch
      %26 = sbr.rel (0) target = $region25
    $region24: #{tpu_custom_call.1} parent=1 // pred_region
      _
    $region25: #{tpu_custom_call.1} parent=1 // pred_fallthru
      _
    // Predicated region
    $region26: #{tpu_custom_call.1} parent=1 // pred_check
      _
    $region27: #{tpu_custom_call.1} parent=1 // pred_check_branch
      %28 = sbr.rel (0) target = $region29
    $region28: #{tpu_custom_call.1} parent=1 // pred_region
      _
    $region29: #{tpu_custom_call.1} parent=1 // pred_fallthru
      _
    // Predicated region
    $region30: #{tpu_custom_call.1} parent=1 // pred_check
      _
    $region31: #{tpu_custom_call.1} parent=1 // pred_check_branch
      %30 = sbr.rel (0) target = $region33
    $region32: #{tpu_custom_call.1} parent=1 // pred_region
      _
    $region33: #{tpu_custom_call.1} parent=1 // pred_fallthru
      _
    // Predicated region
    $region34: #{tpu_custom_call.1} parent=1 // pred_check
      _
    $region35: #{tpu_custom_call.1} parent=1 // pred_check_branch
      %32 = sbr.rel (0) target = $region37
    $region36: #{tpu_custom_call.1} parent=1 // pred_region
      _
    $region37: #{tpu_custom_call.1} parent=1 // pred_fallthru
      _
    %v33 = vlaneseq
    %v34 = vand.u32 %v33, 127
    %v35 = vadd.s32 %v34, 128
    %v36 = vadd.s32 %v34, 256
    %v37 = vadd.s32 %v34, 384
    %v38 = vadd.s32 %v34, 512
    %v39 = vadd.s32 %v34, 640
    %v40 = vadd.s32 %v34, 768
    %v41 = vadd.s32 %v34, 896
    %v42 = vadd.s32 %v34, 1024
    %v43 = vadd.s32 %v34, 1152
    %v44 = vadd.s32 %v34, 1280
    %v45 = vadd.s32 %v34, 1408
    %v46 = vadd.s32 %v34, 1536
    %v47 = vadd.s32 %v34, 1664
    %v48 = vadd.s32 %v34, 1792
    %v49 = vadd.s32 %v34, 1920
    %v50 = vcvt.s32.f32 %v34
    %v51 = vcvt.s32.f32 %v35
    %v52 = vcvt.s32.f32 %v36
    %v53 = vcvt.s32.f32 %v37
    %v54 = vcvt.s32.f32 %v38
    %v55 = vcvt.s32.f32 %v39
    %v56 = vcvt.s32.f32 %v40
    %v57 = vcvt.s32.f32 %v41
    %v58 = vcvt.s32.f32 %v42
    %v59 = vcvt.s32.f32 %v43
    %v60 = vcvt.s32.f32 %v44
    %v61 = vcvt.s32.f32 %v45
    %v62 = vcvt.s32.f32 %v46
    %v63 = vcvt.s32.f32 %v47
    %v64 = vcvt.s32.f32 %v48
    %v65 = vcvt.s32.f32 %v49
    %v66 = vrcp.pop 128.0
    %v67 = vmul.f32 %v50, %v66
    %v68 = vmul.f32 %v51, %v66
    %v69 = vmul.f32 %v52, %v66
    %v70 = vmul.f32 %v53, %v66
    %v71 = vmul.f32 %v54, %v66
    %v72 = vmul.f32 %v55, %v66
    %v73 = vmul.f32 %v56, %v66
    %v74 = vmul.f32 %v57, %v66
    %v75 = vmul.f32 %v58, %v66
    %v76 = vmul.f32 %v59, %v66
    %v77 = vmul.f32 %v60, %v66
    %v78 = vmul.f32 %v61, %v66
    %v79 = vmul.f32 %v62, %v66
    %v80 = vmul.f32 %v63, %v66
    %v81 = vmul.f32 %v64, %v66
    %v82 = vmul.f32 %v65, %v66
    %v83 = vfloor.f32 %v67
    %v84 = vfloor.f32 %v68
    %v85 = vfloor.f32 %v69
    %v86 = vfloor.f32 %v70
    %v87 = vfloor.f32 %v71
    %v88 = vfloor.f32 %v72
    %v89 = vfloor.f32 %v73
    %v90 = vfloor.f32 %v74
    %v91 = vfloor.f32 %v75
    %v92 = vfloor.f32 %v76
    %v93 = vfloor.f32 %v77
    %v94 = vfloor.f32 %v78
    %v95 = vfloor.f32 %v79
    %v96 = vfloor.f32 %v80
    %v97 = vfloor.f32 %v81
    %v98 = vfloor.f32 %v82
    %v99 = vmul.f32 %v83, 128.0
    %v100 = vmul.f32 %v84, 128.0
    %v101 = vmul.f32 %v85, 128.0
    %v102 = vmul.f32 %v86, 128.0
    %v103 = vmul.f32 %v87, 128.0
    %v104 = vmul.f32 %v88, 128.0
    %v105 = vmul.f32 %v89, 128.0
    %v106 = vmul.f32 %v90, 128.0
    %v107 = vmul.f32 %v91, 128.0
    %v108 = vmul.f32 %v92, 128.0
    %v109 = vmul.f32 %v93, 128.0
    %v110 = vmul.f32 %v94, 128.0
    %v111 = vmul.f32 %v95, 128.0
    %v112 = vmul.f32 %v96, 128.0
    %v113 = vmul.f32 %v97, 128.0
    %v114 = vmul.f32 %v98, 128.0
    %v115 = vsub.f32 %v50, %v99
    %v116 = vsub.f32 %v51, %v100
    %v117 = vsub.f32 %v52, %v101
    %v118 = vsub.f32 %v53, %v102
    %v119 = vsub.f32 %v54, %v103
    %v120 = vsub.f32 %v55, %v104
    %v121 = vsub.f32 %v56, %v105
    %v122 = vsub.f32 %v57, %v106
    %v123 = vsub.f32 %v58, %v107
    %v124 = vsub.f32 %v59, %v108
    %v125 = vsub.f32 %v60, %v109
    %v126 = vsub.f32 %v61, %v110
    %v127 = vsub.f32 %v62, %v111
    %v128 = vsub.f32 %v63, %v112
    %v129 = vsub.f32 %v64, %v113
    %v130 = vsub.f32 %v65, %v114
    %vm131 = vcmp.lt.f32.partialorder %v115, 32.0
    %vm132 = vcmp.lt.f32.partialorder %v116, 32.0
    %vm133 = vcmp.lt.f32.partialorder %v117, 32.0
    %vm134 = vcmp.lt.f32.partialorder %v118, 32.0
    %vm135 = vcmp.lt.f32.partialorder %v119, 32.0
    %vm136 = vcmp.lt.f32.partialorder %v120, 32.0
    %vm137 = vcmp.lt.f32.partialorder %v121, 32.0
    %vm138 = vcmp.lt.f32.partialorder %v122, 32.0
    %vm139 = vcmp.lt.f32.partialorder %v123, 32.0
    %vm140 = vcmp.lt.f32.partialorder %v124, 32.0
    %vm141 = vcmp.lt.f32.partialorder %v125, 32.0
    %vm142 = vcmp.lt.f32.partialorder %v126, 32.0
    %vm143 = vcmp.lt.f32.partialorder %v127, 32.0
    %vm144 = vcmp.lt.f32.partialorder %v128, 32.0
    %vm145 = vcmp.lt.f32.partialorder %v129, 32.0
    %vm146 = vcmp.lt.f32.partialorder %v130, 32.0
    %v147 = vsel %vm131, 1, 0
    %v148 = vsel %vm132, 1, 0
    %v149 = vsel %vm133, 1, 0
    %v150 = vsel %vm134, 1, 0
    %v151 = vsel %vm135, 1, 0
    %v152 = vsel %vm136, 1, 0
    %v153 = vsel %vm137, 1, 0
    %v154 = vsel %vm138, 1, 0
    %v155 = vsel %vm139, 1, 0
    %v156 = vsel %vm140, 1, 0
    %v157 = vsel %vm141, 1, 0
    %v158 = vsel %vm142, 1, 0
    %v159 = vsel %vm143, 1, 0
    %v160 = vsel %vm144, 1, 0
    %v161 = vsel %vm145, 1, 0
    %v162 = vsel %vm146, 1, 0
    %v163 = vcvt.s32.f32 %v147
    %v164 = vcvt.s32.f32 %v148
    %v165 = vcvt.s32.f32 %v149
    %v166 = vcvt.s32.f32 %v150
    %v167 = vcvt.s32.f32 %v151
    %v168 = vcvt.s32.f32 %v152
    %v169 = vcvt.s32.f32 %v153
    %v170 = vcvt.s32.f32 %v154
    %v171 = vcvt.s32.f32 %v155
    %v172 = vcvt.s32.f32 %v156
    %v173 = vcvt.s32.f32 %v157
    %v174 = vcvt.s32.f32 %v158
    %v175 = vcvt.s32.f32 %v159
    %v176 = vcvt.s32.f32 %v160
    %v177 = vcvt.s32.f32 %v161
    %v178 = vcvt.s32.f32 %v162
    %s179 = scalar_lea.vmem %s1, 8
    %v180 = vld [vmem:[%s179] sm:$0xff]
    %v181 = vld [vmem:[%s0] sm:$0xff]
    %v182 = vld [vmem:[%s0 + $0x8] sm:$0xff]
    %v183 = vld [vmem:[%s0 + $0x10] sm:$0xff]
    %v184 = vld [vmem:[%s0 + $0x18] sm:$0xff]
    %v185 = vld [vmem:[%s0 + $0x20] sm:$0xff]
    %v186 = vld [vmem:[%s0 + $0x28] sm:$0xff]
    %v187 = vld [vmem:[%s0 + $0x30] sm:$0xff]
    %v188 = vld [vmem:[%s0 + $0x38] sm:$0xff]
    %v197 = vcombine.high %v181, %v181
    %v198 = vcombine.high %v182, %v182
    %v199 = vcombine.high %v183, %v183
    %v200 = vcombine.high %v184, %v184
    %v201 = vcombine.high %v185, %v185
    %v202 = vcombine.high %v186, %v186
    %v203 = vcombine.high %v187, %v187
    %v204 = vcombine.high %v188, %v188
    %vm205 = vcmask 31744
    %v207 = vsel %vm205, %v180, 0
    %vm209 = vcmask 1043456
    %v210 = vsel %vm209, %v181, 0
    %v212 = vsel %vm209, %v197, 0
    %v214 = vsel %vm209, %v182, 0
    %v216 = vsel %vm209, %v198, 0
    %v218 = vsel %vm209, %v183, 0
    %v220 = vsel %vm209, %v199, 0
    %v222 = vsel %vm209, %v184, 0
    %v224 = vsel %vm209, %v200, 0
    %v226 = vsel %vm209, %v185, 0
    %v228 = vsel %vm209, %v201, 0
    %v230 = vsel %vm209, %v186, 0
    %v232 = vsel %vm209, %v202, 0
    %v234 = vsel %vm209, %v187, 0
    %v236 = vsel %vm209, %v203, 0
    %v238 = vsel %vm209, %v188, 0
    %v240 = vsel %vm209, %v204, 0
    %242 = vmatprep.subr.mxu0 %v212
    %243 = vmatpush1.msra.mxu0 %v210
    %244 = vmatprep.subr.mxu0 0.0
    %245 = vmatpush1.msra.mxu0 0.0
    %246 = vmatprep.subr.mxu0 0.0
    %247 = vmatpush1.msra.mxu0 0.0
    %248 = vmatprep.subr.mxu0 0.0
    %249 = vmatpush1.msra.mxu0 0.0
    %250 = vmatprep.subr.mxu0 0.0
    %251 = vmatpush1.msra.mxu0 0.0
    %252 = vmatprep.subr.mxu0 0.0
    %253 = vmatpush1.msra.mxu0 0.0
    %254 = vmatprep.subr.mxu0 0.0
    %255 = vmatpush1.msra.mxu0 0.0
    %256 = vmatprep.subr.mxu0 0.0
    %257 = vmatpush1.msra.mxu0 0.0
    %258 = vmatprep.subr.mxu0 0.0
    %259 = vmatpush1.msra.mxu0 0.0
    %260 = vmatprep.subr.mxu0 0.0
    %261 = vmatpush1.msra.mxu0 0.0
    %262 = vmatprep.subr.mxu0 0.0
    %263 = vmatpush1.msra.mxu0 0.0
    %264 = vmatprep.subr.mxu0 0.0
    %265 = vmatpush1.msra.mxu0 0.0
    %266 = vmatprep.subr.mxu0 0.0
    %267 = vmatpush1.msra.mxu0 0.0
    %268 = vmatprep.subr.mxu0 0.0
    %269 = vmatpush1.msra.mxu0 0.0
    %270 = vmatprep.subr.mxu0 0.0
    %271 = vmatpush1.msra.mxu0 0.0
    %272 = vmatprep.subr.mxu0 0.0
    %273 = vmatpush1.msra.mxu0 0.0
    %274 = vmatprep.subr.mxu0 0.0
    %275 = vmatpush1.msra.mxu0 0.0
    %276 = vmatprep.subr.mxu0 0.0
    %277 = vmatpush1.msra.mxu0 0.0
    %278 = vmatprep.subr.mxu0 0.0
    %279 = vmatpush1.msra.mxu0 0.0
    %280 = vmatprep.subr.mxu0 0.0
    %281 = vmatpush1.msra.mxu0 0.0
    %282 = vmatprep.subr.mxu0 0.0
    %283 = vmatpush1.msra.mxu0 0.0
    %284 = vmatprep.subr.mxu0 0.0
    %285 = vmatpush1.msra.mxu0 0.0
    %286 = vmatprep.subr.mxu0 0.0
    %287 = vmatpush1.msra.mxu0 0.0
    %288 = vmatprep.subr.mxu0 0.0
    %289 = vmatpush1.msra.mxu0 0.0
    %290 = vmatprep.subr.mxu0 0.0
    %291 = vmatpush1.msra.mxu0 0.0
    %292 = vmatprep.subr.mxu0 0.0
    %293 = vmatpush1.msra.mxu0 0.0
    %294 = vmatprep.subr.mxu0 0.0
    %295 = vmatpush1.msra.mxu0 0.0
    %296 = vmatprep.subr.mxu0 0.0
    %297 = vmatpush1.msra.mxu0 0.0
    %298 = vmatprep.subr.mxu0 0.0
    %299 = vmatpush1.msra.mxu0 0.0
    %300 = vmatprep.subr.mxu0 0.0
    %301 = vmatpush1.msra.mxu0 0.0
    %302 = vmatprep.subr.mxu0 0.0
    %303 = vmatpush1.msra.mxu0 0.0
    %304 = vmatprep.subr.mxu0 0.0
    %305 = vmatpush1.msra.mxu0 0.0
    %306 = vmatprep.mubr.f32.mxu0 0.0
    %307 = vmatmul.mubr.f32.gmra.mrb[0].mxu0 %v207
    %v308 = vpop.f32.mrb[0].mxu0
    %v309 = vadd.f32 0.0, %v308
    %v310 = vpop.f32.mrb[0].mxu0
    %v311 = vadd.f32 0.0, %v310
    %312 = vdwg.mxu0
    %313 = vmatprep.subr.mxu0 %v216
    %314 = vmatpush1.msra.mxu0 %v214
    %315 = vmatprep.subr.mxu0 0.0
    %316 = vmatpush1.msra.mxu0 0.0
    %317 = vmatprep.subr.mxu0 0.0
    %318 = vmatpush1.msra.mxu0 0.0
    %319 = vmatprep.subr.mxu0 0.0
    %320 = vmatpush1.msra.mxu0 0.0
    %321 = vmatprep.subr.mxu0 0.0
    %322 = vmatpush1.msra.mxu0 0.0
    %323 = vmatprep.subr.mxu0 0.0
    %324 = vmatpush1.msra.mxu0 0.0
    %325 = vmatprep.subr.mxu0 0.0
    %326 = vmatpush1.msra.mxu0 0.0
    %327 = vmatprep.subr.mxu0 0.0
    %328 = vmatpush1.msra.mxu0 0.0
    %329 = vmatprep.subr.mxu0 0.0
    %330 = vmatpush1.msra.mxu0 0.0
    %331 = vmatprep.subr.mxu0 0.0
    %332 = vmatpush1.msra.mxu0 0.0
    %333 = vmatprep.subr.mxu0 0.0
    %334 = vmatpush1.msra.mxu0 0.0
    %335 = vmatprep.subr.mxu0 0.0
    %336 = vmatpush1.msra.mxu0 0.0
    %337 = vmatprep.subr.mxu0 0.0
    %338 = vmatpush1.msra.mxu0 0.0
    %339 = vmatprep.subr.mxu0 0.0
    %340 = vmatpush1.msra.mxu0 0.0
    %341 = vmatprep.subr.mxu0 0.0
    %342 = vmatpush1.msra.mxu0 0.0
    %343 = vmatprep.subr.mxu0 0.0
    %344 = vmatpush1.msra.mxu0 0.0
    %345 = vmatprep.subr.mxu0 0.0
    %346 = vmatpush1.msra.mxu0 0.0
    %347 = vmatprep.subr.mxu0 0.0
    %348 = vmatpush1.msra.mxu0 0.0
    %349 = vmatprep.subr.mxu0 0.0
    %350 = vmatpush1.msra.mxu0 0.0
    %351 = vmatprep.subr.mxu0 0.0
    %352 = vmatpush1.msra.mxu0 0.0
    %353 = vmatprep.subr.mxu0 0.0
    %354 = vmatpush1.msra.mxu0 0.0
    %355 = vmatprep.subr.mxu0 0.0
    %356 = vmatpush1.msra.mxu0 0.0
    %357 = vmatprep.subr.mxu0 0.0
    %358 = vmatpush1.msra.mxu0 0.0
    %359 = vmatprep.subr.mxu0 0.0
    %360 = vmatpush1.msra.mxu0 0.0
    %361 = vmatprep.subr.mxu0 0.0
    %362 = vmatpush1.msra.mxu0 0.0
    %363 = vmatprep.subr.mxu0 0.0
    %364 = vmatpush1.msra.mxu0 0.0
    %365 = vmatprep.subr.mxu0 0.0
    %366 = vmatpush1.msra.mxu0 0.0
    %367 = vmatprep.subr.mxu0 0.0
    %368 = vmatpush1.msra.mxu0 0.0
    %369 = vmatprep.subr.mxu0 0.0
    %370 = vmatpush1.msra.mxu0 0.0
    %371 = vmatprep.subr.mxu0 0.0
    %372 = vmatpush1.msra.mxu0 0.0
    %373 = vmatprep.subr.mxu0 0.0
    %374 = vmatpush1.msra.mxu0 0.0
    %375 = vmatprep.subr.mxu0 0.0
    %376 = vmatpush1.msra.mxu0 0.0
    %377 = vmatprep.mubr.f32.mxu0 0.0
    %378 = vmatmul.mubr.f32.gmra.mrb[0].mxu0 %v207
    %v379 = vpop.f32.mrb[0].mxu0
    %v380 = vadd.f32 0.0, %v379
    %v381 = vpop.f32.mrb[0].mxu0
    %v382 = vadd.f32 0.0, %v381
    %383 = vdwg.mxu0
    %384 = vmatprep.subr.mxu0 %v220
    %385 = vmatpush1.msra.mxu0 %v218
    %386 = vmatprep.subr.mxu0 0.0
    %387 = vmatpush1.msra.mxu0 0.0
    %388 = vmatprep.subr.mxu0 0.0
    %389 = vmatpush1.msra.mxu0 0.0
    %390 = vmatprep.subr.mxu0 0.0
    %391 = vmatpush1.msra.mxu0 0.0
    %392 = vmatprep.subr.mxu0 0.0
    %393 = vmatpush1.msra.mxu0 0.0
    %394 = vmatprep.subr.mxu0 0.0
    %395 = vmatpush1.msra.mxu0 0.0
    %396 = vmatprep.subr.mxu0 0.0
    %397 = vmatpush1.msra.mxu0 0.0
    %398 = vmatprep.subr.mxu0 0.0
    %399 = vmatpush1.msra.mxu0 0.0
    %400 = vmatprep.subr.mxu0 0.0
    %401 = vmatpush1.msra.mxu0 0.0
    %402 = vmatprep.subr.mxu0 0.0
    %403 = vmatpush1.msra.mxu0 0.0
    %404 = vmatprep.subr.mxu0 0.0
    %405 = vmatpush1.msra.mxu0 0.0
    %406 = vmatprep.subr.mxu0 0.0
    %407 = vmatpush1.msra.mxu0 0.0
    %408 = vmatprep.subr.mxu0 0.0
    %409 = vmatpush1.msra.mxu0 0.0
    %410 = vmatprep.subr.mxu0 0.0
    %411 = vmatpush1.msra.mxu0 0.0
    %412 = vmatprep.subr.mxu0 0.0
    %413 = vmatpush1.msra.mxu0 0.0
    %414 = vmatprep.subr.mxu0 0.0
    %415 = vmatpush1.msra.mxu0 0.0
    %416 = vmatprep.subr.mxu0 0.0
    %417 = vmatpush1.msra.mxu0 0.0
    %418 = vmatprep.subr.mxu0 0.0
    %419 = vmatpush1.msra.mxu0 0.0
    %420 = vmatprep.subr.mxu0 0.0
    %421 = vmatpush1.msra.mxu0 0.0
    %422 = vmatprep.subr.mxu0 0.0
    %423 = vmatpush1.msra.mxu0 0.0
    %424 = vmatprep.subr.mxu0 0.0
    %425 = vmatpush1.msra.mxu0 0.0
    %426 = vmatprep.subr.mxu0 0.0
    %427 = vmatpush1.msra.mxu0 0.0
    %428 = vmatprep.subr.mxu0 0.0
    %429 = vmatpush1.msra.mxu0 0.0
    %430 = vmatprep.subr.mxu0 0.0
    %431 = vmatpush1.msra.mxu0 0.0
    %432 = vmatprep.subr.mxu0 0.0
    %433 = vmatpush1.msra.mxu0 0.0
    %434 = vmatprep.subr.mxu0 0.0
    %435 = vmatpush1.msra.mxu0 0.0
    %436 = vmatprep.subr.mxu0 0.0
    %437 = vmatpush1.msra.mxu0 0.0
    %438 = vmatprep.subr.mxu0 0.0
    %439 = vmatpush1.msra.mxu0 0.0
    %440 = vmatprep.subr.mxu0 0.0
    %441 = vmatpush1.msra.mxu0 0.0
    %442 = vmatprep.subr.mxu0 0.0
    %443 = vmatpush1.msra.mxu0 0.0
    %444 = vmatprep.subr.mxu0 0.0
    %445 = vmatpush1.msra.mxu0 0.0
    %446 = vmatprep.subr.mxu0 0.0
    %447 = vmatpush1.msra.mxu0 0.0
    %448 = vmatprep.mubr.f32.mxu0 0.0
    %449 = vmatmul.mubr.f32.gmra.mrb[0].mxu0 %v207
    %v450 = vpop.f32.mrb[0].mxu0
    %v451 = vadd.f32 0.0, %v450
    %v452 = vpop.f32.mrb[0].mxu0
    %v453 = vadd.f32 0.0, %v452
    %454 = vdwg.mxu0
    %455 = vmatprep.subr.mxu0 %v224
    %456 = vmatpush1.msra.mxu0 %v222
    %457 = vmatprep.subr.mxu0 0.0
    %458 = vmatpush1.msra.mxu0 0.0
    %459 = vmatprep.subr.mxu0 0.0
    %460 = vmatpush1.msra.mxu0 0.0
    %461 = vmatprep.subr.mxu0 0.0
    %462 = vmatpush1.msra.mxu0 0.0
    %463 = vmatprep.subr.mxu0 0.0
    %464 = vmatpush1.msra.mxu0 0.0
    %465 = vmatprep.subr.mxu0 0.0
    %466 = vmatpush1.msra.mxu0 0.0
    %467 = vmatprep.subr.mxu0 0.0
    %468 = vmatpush1.msra.mxu0 0.0
    %469 = vmatprep.subr.mxu0 0.0
    %470 = vmatpush1.msra.mxu0 0.0
    %471 = vmatprep.subr.mxu0 0.0
    %472 = vmatpush1.msra.mxu0 0.0
    %473 = vmatprep.subr.mxu0 0.0
    %474 = vmatpush1.msra.mxu0 0.0
    %475 = vmatprep.subr.mxu0 0.0
    %476 = vmatpush1.msra.mxu0 0.0
    %477 = vmatprep.subr.mxu0 0.0
    %478 = vmatpush1.msra.mxu0 0.0
    %479 = vmatprep.subr.mxu0 0.0
    %480 = vmatpush1.msra.mxu0 0.0
    %481 = vmatprep.subr.mxu0 0.0
    %482 = vmatpush1.msra.mxu0 0.0
    %483 = vmatprep.subr.mxu0 0.0
    %484 = vmatpush1.msra.mxu0 0.0
    %485 = vmatprep.subr.mxu0 0.0
    %486 = vmatpush1.msra.mxu0 0.0
    %487 = vmatprep.subr.mxu0 0.0
    %488 = vmatpush1.msra.mxu0 0.0
    %489 = vmatprep.subr.mxu0 0.0
    %490 = vmatpush1.msra.mxu0 0.0
    %491 = vmatprep.subr.mxu0 0.0
    %492 = vmatpush1.msra.mxu0 0.0
    %493 = vmatprep.subr.mxu0 0.0
    %494 = vmatpush1.msra.mxu0 0.0
    %495 = vmatprep.subr.mxu0 0.0
    %496 = vmatpush1.msra.mxu0 0.0
    %497 = vmatprep.subr.mxu0 0.0
    %498 = vmatpush1.msra.mxu0 0.0
    %499 = vmatprep.subr.mxu0 0.0
    %500 = vmatpush1.msra.mxu0 0.0
    %501 = vmatprep.subr.mxu0 0.0
    %502 = vmatpush1.msra.mxu0 0.0
    %503 = vmatprep.subr.mxu0 0.0
    %504 = vmatpush1.msra.mxu0 0.0
    %505 = vmatprep.subr.mxu0 0.0
    %506 = vmatpush1.msra.mxu0 0.0
    %507 = vmatprep.subr.mxu0 0.0
    %508 = vmatpush1.msra.mxu0 0.0
    %509 = vmatprep.subr.mxu0 0.0
    %510 = vmatpush1.msra.mxu0 0.0
    %511 = vmatprep.subr.mxu0 0.0
    %512 = vmatpush1.msra.mxu0 0.0
    %513 = vmatprep.subr.mxu0 0.0
    %514 = vmatpush1.msra.mxu0 0.0
    %515 = vmatprep.subr.mxu0 0.0
    %516 = vmatpush1.msra.mxu0 0.0
    %517 = vmatprep.subr.mxu0 0.0
    %518 = vmatpush1.msra.mxu0 0.0
    %519 = vmatprep.mubr.f32.mxu0 0.0
    %520 = vmatmul.mubr.f32.gmra.mrb[0].mxu0 %v207
    %v521 = vpop.f32.mrb[0].mxu0
    %v522 = vadd.f32 0.0, %v521
    %v523 = vpop.f32.mrb[0].mxu0
    %v524 = vadd.f32 0.0, %v523
    %525 = vdwg.mxu0
    %526 = vmatprep.subr.mxu0 %v228
    %527 = vmatpush1.msra.mxu0 %v226
    %528 = vmatprep.subr.mxu0 0.0
    %529 = vmatpush1.msra.mxu0 0.0
    %530 = vmatprep.subr.mxu0 0.0
    %531 = vmatpush1.msra.mxu0 0.0
    %532 = vmatprep.subr.mxu0 0.0
    %533 = vmatpush1.msra.mxu0 0.0
    %534 = vmatprep.subr.mxu0 0.0
    %535 = vmatpush1.msra.mxu0 0.0
    %536 = vmatprep.subr.mxu0 0.0
    %537 = vmatpush1.msra.mxu0 0.0
    %538 = vmatprep.subr.mxu0 0.0
    %539 = vmatpush1.msra.mxu0 0.0
    %540 = vmatprep.subr.mxu0 0.0
    %541 = vmatpush1.msra.mxu0 0.0
    %542 = vmatprep.subr.mxu0 0.0
    %543 = vmatpush1.msra.mxu0 0.0
    %544 = vmatprep.subr.mxu0 0.0
    %545 = vmatpush1.msra.mxu0 0.0
    %546 = vmatprep.subr.mxu0 0.0
    %547 = vmatpush1.msra.mxu0 0.0
    %548 = vmatprep.subr.mxu0 0.0
    %549 = vmatpush1.msra.mxu0 0.0
    %550 = vmatprep.subr.mxu0 0.0
    %551 = vmatpush1.msra.mxu0 0.0
    %552 = vmatprep.subr.mxu0 0.0
    %553 = vmatpush1.msra.mxu0 0.0
    %554 = vmatprep.subr.mxu0 0.0
    %555 = vmatpush1.msra.mxu0 0.0
    %556 = vmatprep.subr.mxu0 0.0
    %557 = vmatpush1.msra.mxu0 0.0
    %558 = vmatprep.subr.mxu0 0.0
    %559 = vmatpush1.msra.mxu0 0.0
    %560 = vmatprep.subr.mxu0 0.0
    %561 = vmatpush1.msra.mxu0 0.0
    %562 = vmatprep.subr.mxu0 0.0
    %563 = vmatpush1.msra.mxu0 0.0
    %564 = vmatprep.subr.mxu0 0.0
    %565 = vmatpush1.msra.mxu0 0.0
    %566 = vmatprep.subr.mxu0 0.0
    %567 = vmatpush1.msra.mxu0 0.0
    %568 = vmatprep.subr.mxu0 0.0
    %569 = vmatpush1.msra.mxu0 0.0
    %570 = vmatprep.subr.mxu0 0.0
    %571 = vmatpush1.msra.mxu0 0.0
    %572 = vmatprep.subr.mxu0 0.0
    %573 = vmatpush1.msra.mxu0 0.0
    %574 = vmatprep.subr.mxu0 0.0
    %575 = vmatpush1.msra.mxu0 0.0
    %576 = vmatprep.subr.mxu0 0.0
    %577 = vmatpush1.msra.mxu0 0.0
    %578 = vmatprep.subr.mxu0 0.0
    %579 = vmatpush1.msra.mxu0 0.0
    %580 = vmatprep.subr.mxu0 0.0
    %581 = vmatpush1.msra.mxu0 0.0
    %582 = vmatprep.subr.mxu0 0.0
    %583 = vmatpush1.msra.mxu0 0.0
    %584 = vmatprep.subr.mxu0 0.0
    %585 = vmatpush1.msra.mxu0 0.0
    %586 = vmatprep.subr.mxu0 0.0
    %587 = vmatpush1.msra.mxu0 0.0
    %588 = vmatprep.subr.mxu0 0.0
    %589 = vmatpush1.msra.mxu0 0.0
    %590 = vmatprep.mubr.f32.mxu0 0.0
    %591 = vmatmul.mubr.f32.gmra.mrb[0].mxu0 %v207
    %v592 = vpop.f32.mrb[0].mxu0
    %v593 = vadd.f32 0.0, %v592
    %v594 = vpop.f32.mrb[0].mxu0
    %v595 = vadd.f32 0.0, %v594
    %596 = vdwg.mxu0
    %597 = vmatprep.subr.mxu0 %v232
    %598 = vmatpush1.msra.mxu0 %v230
    %599 = vmatprep.subr.mxu0 0.0
    %600 = vmatpush1.msra.mxu0 0.0
    %601 = vmatprep.subr.mxu0 0.0
    %602 = vmatpush1.msra.mxu0 0.0
    %603 = vmatprep.subr.mxu0 0.0
    %604 = vmatpush1.msra.mxu0 0.0
    %605 = vmatprep.subr.mxu0 0.0
    %606 = vmatpush1.msra.mxu0 0.0
    %607 = vmatprep.subr.mxu0 0.0
    %608 = vmatpush1.msra.mxu0 0.0
    %609 = vmatprep.subr.mxu0 0.0
    %610 = vmatpush1.msra.mxu0 0.0
    %611 = vmatprep.subr.mxu0 0.0
    %612 = vmatpush1.msra.mxu0 0.0
    %613 = vmatprep.subr.mxu0 0.0
    %614 = vmatpush1.msra.mxu0 0.0
    %615 = vmatprep.subr.mxu0 0.0
    %616 = vmatpush1.msra.mxu0 0.0
    %617 = vmatprep.subr.mxu0 0.0
    %618 = vmatpush1.msra.mxu0 0.0
    %619 = vmatprep.subr.mxu0 0.0
    %620 = vmatpush1.msra.mxu0 0.0
    %621 = vmatprep.subr.mxu0 0.0
    %622 = vmatpush1.msra.mxu0 0.0
    %623 = vmatprep.subr.mxu0 0.0
    %624 = vmatpush1.msra.mxu0 0.0
    %625 = vmatprep.subr.mxu0 0.0
    %626 = vmatpush1.msra.mxu0 0.0
    %627 = vmatprep.subr.mxu0 0.0
    %628 = vmatpush1.msra.mxu0 0.0
    %629 = vmatprep.subr.mxu0 0.0
    %630 = vmatpush1.msra.mxu0 0.0
    %631 = vmatprep.subr.mxu0 0.0
    %632 = vmatpush1.msra.mxu0 0.0
    %633 = vmatprep.subr.mxu0 0.0
    %634 = vmatpush1.msra.mxu0 0.0
    %635 = vmatprep.subr.mxu0 0.0
    %636 = vmatpush1.msra.mxu0 0.0
    %637 = vmatprep.subr.mxu0 0.0
    %638 = vmatpush1.msra.mxu0 0.0
    %639 = vmatprep.subr.mxu0 0.0
    %640 = vmatpush1.msra.mxu0 0.0
    %641 = vmatprep.subr.mxu0 0.0
    %642 = vmatpush1.msra.mxu0 0.0
    %643 = vmatprep.subr.mxu0 0.0
    %644 = vmatpush1.msra.mxu0 0.0
    %645 = vmatprep.subr.mxu0 0.0
    %646 = vmatpush1.msra.mxu0 0.0
    %647 = vmatprep.subr.mxu0 0.0
    %648 = vmatpush1.msra.mxu0 0.0
    %649 = vmatprep.subr.mxu0 0.0
    %650 = vmatpush1.msra.mxu0 0.0
    %651 = vmatprep.subr.mxu0 0.0
    %652 = vmatpush1.msra.mxu0 0.0
    %653 = vmatprep.subr.mxu0 0.0
    %654 = vmatpush1.msra.mxu0 0.0
    %655 = vmatprep.subr.mxu0 0.0
    %656 = vmatpush1.msra.mxu0 0.0
    %657 = vmatprep.subr.mxu0 0.0
    %658 = vmatpush1.msra.mxu0 0.0
    %659 = vmatprep.subr.mxu0 0.0
    %660 = vmatpush1.msra.mxu0 0.0
    %661 = vmatprep.mubr.f32.mxu0 0.0
    %662 = vmatmul.mubr.f32.gmra.mrb[0].mxu0 %v207
    %v663 = vpop.f32.mrb[0].mxu0
    %v664 = vadd.f32 0.0, %v663
    %v665 = vpop.f32.mrb[0].mxu0
    %v666 = vadd.f32 0.0, %v665
    %667 = vdwg.mxu0
    %668 = vmatprep.subr.mxu0 %v236
    %669 = vmatpush1.msra.mxu0 %v234
    %670 = vmatprep.subr.mxu0 0.0
    %671 = vmatpush1.msra.mxu0 0.0
    %672 = vmatprep.subr.mxu0 0.0
    %673 = vmatpush1.msra.mxu0 0.0
    %674 = vmatprep.subr.mxu0 0.0
    %675 = vmatpush1.msra.mxu0 0.0
    %676 = vmatprep.subr.mxu0 0.0
    %677 = vmatpush1.msra.mxu0 0.0
    %678 = vmatprep.subr.mxu0 0.0
    %679 = vmatpush1.msra.mxu0 0.0
    %680 = vmatprep.subr.mxu0 0.0
    %681 = vmatpush1.msra.mxu0 0.0
    %682 = vmatprep.subr.mxu0 0.0
    %683 = vmatpush1.msra.mxu0 0.0
    %684 = vmatprep.subr.mxu0 0.0
    %685 = vmatpush1.msra.mxu0 0.0
    %686 = vmatprep.subr.mxu0 0.0
    %687 = vmatpush1.msra.mxu0 0.0
    %688 = vmatprep.subr.mxu0 0.0
    %689 = vmatpush1.msra.mxu0 0.0
    %690 = vmatprep.subr.mxu0 0.0
    %691 = vmatpush1.msra.mxu0 0.0
    %692 = vmatprep.subr.mxu0 0.0
    %693 = vmatpush1.msra.mxu0 0.0
    %694 = vmatprep.subr.mxu0 0.0
    %695 = vmatpush1.msra.mxu0 0.0
    %696 = vmatprep.subr.mxu0 0.0
    %697 = vmatpush1.msra.mxu0 0.0
    %698 = vmatprep.subr.mxu0 0.0
    %699 = vmatpush1.msra.mxu0 0.0
    %700 = vmatprep.subr.mxu0 0.0
    %701 = vmatpush1.msra.mxu0 0.0
    %702 = vmatprep.subr.mxu0 0.0
    %703 = vmatpush1.msra.mxu0 0.0
    %704 = vmatprep.subr.mxu0 0.0
    %705 = vmatpush1.msra.mxu0 0.0
    %706 = vmatprep.subr.mxu0 0.0
    %707 = vmatpush1.msra.mxu0 0.0
    %708 = vmatprep.subr.mxu0 0.0
    %709 = vmatpush1.msra.mxu0 0.0
    %710 = vmatprep.subr.mxu0 0.0
    %711 = vmatpush1.msra.mxu0 0.0
    %712 = vmatprep.subr.mxu0 0.0
    %713 = vmatpush1.msra.mxu0 0.0
    %714 = vmatprep.subr.mxu0 0.0
    %715 = vmatpush1.msra.mxu0 0.0
    %716 = vmatprep.subr.mxu0 0.0
    %717 = vmatpush1.msra.mxu0 0.0
    %718 = vmatprep.subr.mxu0 0.0
    %719 = vmatpush1.msra.mxu0 0.0
    %720 = vmatprep.subr.mxu0 0.0
    %721 = vmatpush1.msra.mxu0 0.0
    %722 = vmatprep.subr.mxu0 0.0
    %723 = vmatpush1.msra.mxu0 0.0
    %724 = vmatprep.subr.mxu0 0.0
    %725 = vmatpush1.msra.mxu0 0.0
    %726 = vmatprep.subr.mxu0 0.0
    %727 = vmatpush1.msra.mxu0 0.0
    %728 = vmatprep.subr.mxu0 0.0
    %729 = vmatpush1.msra.mxu0 0.0
    %730 = vmatprep.subr.mxu0 0.0
    %731 = vmatpush1.msra.mxu0 0.0
    %732 = vmatprep.mubr.f32.mxu0 0.0
    %733 = vmatmul.mubr.f32.gmra.mrb[0].mxu0 %v207
    %v734 = vpop.f32.mrb[0].mxu0
    %v735 = vadd.f32 0.0, %v734
    %v736 = vpop.f32.mrb[0].mxu0
    %v737 = vadd.f32 0.0, %v736
    %738 = vdwg.mxu0
    %739 = vmatprep.subr.mxu0 %v240
    %740 = vmatpush1.msra.mxu0 %v238
    %741 = vmatprep.subr.mxu0 0.0
    %742 = vmatpush1.msra.mxu0 0.0
    %743 = vmatprep.subr.mxu0 0.0
    %744 = vmatpush1.msra.mxu0 0.0
    %745 = vmatprep.subr.mxu0 0.0
    %746 = vmatpush1.msra.mxu0 0.0
    %747 = vmatprep.subr.mxu0 0.0
    %748 = vmatpush1.msra.mxu0 0.0
    %749 = vmatprep.subr.mxu0 0.0
    %750 = vmatpush1.msra.mxu0 0.0
    %751 = vmatprep.subr.mxu0 0.0
    %752 = vmatpush1.msra.mxu0 0.0
    %753 = vmatprep.subr.mxu0 0.0
    %754 = vmatpush1.msra.mxu0 0.0
    %755 = vmatprep.subr.mxu0 0.0
    %756 = vmatpush1.msra.mxu0 0.0
    %757 = vmatprep.subr.mxu0 0.0
    %758 = vmatpush1.msra.mxu0 0.0
    %759 = vmatprep.subr.mxu0 0.0
    %760 = vmatpush1.msra.mxu0 0.0
    %761 = vmatprep.subr.mxu0 0.0
    %762 = vmatpush1.msra.mxu0 0.0
    %763 = vmatprep.subr.mxu0 0.0
    %764 = vmatpush1.msra.mxu0 0.0
    %765 = vmatprep.subr.mxu0 0.0
    %766 = vmatpush1.msra.mxu0 0.0
    %767 = vmatprep.subr.mxu0 0.0
    %768 = vmatpush1.msra.mxu0 0.0
    %769 = vmatprep.subr.mxu0 0.0
    %770 = vmatpush1.msra.mxu0 0.0
    %771 = vmatprep.subr.mxu0 0.0
    %772 = vmatpush1.msra.mxu0 0.0
    %773 = vmatprep.subr.mxu0 0.0
    %774 = vmatpush1.msra.mxu0 0.0
    %775 = vmatprep.subr.mxu0 0.0
    %776 = vmatpush1.msra.mxu0 0.0
    %777 = vmatprep.subr.mxu0 0.0
    %778 = vmatpush1.msra.mxu0 0.0
    %779 = vmatprep.subr.mxu0 0.0
    %780 = vmatpush1.msra.mxu0 0.0
    %781 = vmatprep.subr.mxu0 0.0
    %782 = vmatpush1.msra.mxu0 0.0
    %783 = vmatprep.subr.mxu0 0.0
    %784 = vmatpush1.msra.mxu0 0.0
    %785 = vmatprep.subr.mxu0 0.0
    %786 = vmatpush1.msra.mxu0 0.0
    %787 = vmatprep.subr.mxu0 0.0
    %788 = vmatpush1.msra.mxu0 0.0
    %789 = vmatprep.subr.mxu0 0.0
    %790 = vmatpush1.msra.mxu0 0.0
    %791 = vmatprep.subr.mxu0 0.0
    %792 = vmatpush1.msra.mxu0 0.0
    %793 = vmatprep.subr.mxu0 0.0
    %794 = vmatpush1.msra.mxu0 0.0
    %795 = vmatprep.subr.mxu0 0.0
    %796 = vmatpush1.msra.mxu0 0.0
    %797 = vmatprep.subr.mxu0 0.0
    %798 = vmatpush1.msra.mxu0 0.0
    %799 = vmatprep.subr.mxu0 0.0
    %800 = vmatpush1.msra.mxu0 0.0
    %801 = vmatprep.subr.mxu0 0.0
    %802 = vmatpush1.msra.mxu0 0.0
    %803 = vmatprep.mubr.f32.mxu0 0.0
    %804 = vmatmul.mubr.f32.gmra.mrb[0].mxu0 %v207
    %v805 = vpop.f32.mrb[0].mxu0
    %v806 = vadd.f32 0.0, %v805
    %v807 = vpop.f32.mrb[0].mxu0
    %v808 = vadd.f32 0.0, %v807
    %809 = vdwg.mxu0
    %810 = vst [vmem:[#allocation2] sm:$0xff] %v309
    %811 = vst [vmem:[#allocation2 + $0x8] sm:$0xff] %v311
    %812 = vst [vmem:[#allocation2 + $0x10] sm:$0xff] %v380
    %813 = vst [vmem:[#allocation2 + $0x18] sm:$0xff] %v382
    %814 = vst [vmem:[#allocation2 + $0x20] sm:$0xff] %v451
    %815 = vst [vmem:[#allocation2 + $0x28] sm:$0xff] %v453
    %816 = vst [vmem:[#allocation2 + $0x30] sm:$0xff] %v522
    %817 = vst [vmem:[#allocation2 + $0x38] sm:$0xff] %v524
    %818 = vst [vmem:[#allocation2 + $0x40] sm:$0xff] %v593
    %819 = vst [vmem:[#allocation2 + $0x48] sm:$0xff] %v595
    %820 = vst [vmem:[#allocation2 + $0x50] sm:$0xff] %v664
    %821 = vst [vmem:[#allocation2 + $0x58] sm:$0xff] %v666
    %822 = vst [vmem:[#allocation2 + $0x60] sm:$0xff] %v735
    %823 = vst [vmem:[#allocation2 + $0x68] sm:$0xff] %v737
    %824 = vst [vmem:[#allocation2 + $0x70] sm:$0xff] %v806
    %825 = vst [vmem:[#allocation2 + $0x78] sm:$0xff] %v808
    %v826 = vld [vmem:[#allocation2 + $0x8] sm:$0xff]
    %v827 = vld [vmem:[#allocation2 + $0x10] sm:$0xff]
    %v828 = vld [vmem:[#allocation2 + $0x18] sm:$0xff]
    %v829 = vld [vmem:[#allocation2 + $0x20] sm:$0xff]
    %v830 = vld [vmem:[#allocation2 + $0x28] sm:$0xff]
    %v831 = vld [vmem:[#allocation2 + $0x30] sm:$0xff]
    %v832 = vld [vmem:[#allocation2 + $0x38] sm:$0xff]
    %v833 = vld [vmem:[#allocation2 + $0x40] sm:$0xff]
    %v834 = vld [vmem:[#allocation2 + $0x48] sm:$0xff]
    %v835 = vld [vmem:[#allocation2 + $0x50] sm:$0xff]
    %v836 = vld [vmem:[#allocation2 + $0x58] sm:$0xff]
    %v837 = vld [vmem:[#allocation2 + $0x60] sm:$0xff]
    %v838 = vld [vmem:[#allocation2 + $0x68] sm:$0xff]
    %v839 = vld [vmem:[#allocation2 + $0x70] sm:$0xff]
    %v840 = vld [vmem:[#allocation2 + $0x78] sm:$0xff]
    %v841 = vld [vmem:[%s1] sm:$0xff]
    %v842 = vld [vmem:[%s0] sm:$0xff]
    %v843 = vld [vmem:[%s0 + $0x8] sm:$0xff]
    %v844 = vld [vmem:[%s0 + $0x10] sm:$0xff]
    %v845 = vld [vmem:[%s0 + $0x18] sm:$0xff]
    %v846 = vld [vmem:[%s0 + $0x20] sm:$0xff]
    %v847 = vld [vmem:[%s0 + $0x28] sm:$0xff]
    %v848 = vld [vmem:[%s0 + $0x30] sm:$0xff]
    %v849 = vld [vmem:[%s0 + $0x38] sm:$0xf]
    %v858 = vcombine.high %v842, %v842
    %v859 = vcombine.high %v843, %v843
    %v860 = vcombine.high %v844, %v844
    %v861 = vcombine.high %v845, %v845
    %v862 = vcombine.high %v846, %v846
    %v863 = vcombine.high %v847, %v847
    %v864 = vcombine.high %v848, %v848
    %v866 = vsel %vm205, %v841, 0
    %v868 = vsel %vm209, %v842, 0
    %v870 = vsel %vm209, %v858, 0
    %v872 = vsel %vm209, %v843, 0
    %v874 = vsel %vm209, %v859, 0
    %v876 = vsel %vm209, %v844, 0
    %v878 = vsel %vm209, %v860, 0
    %v880 = vsel %vm209, %v845, 0
    %v882 = vsel %vm209, %v861, 0
    %v884 = vsel %vm209, %v846, 0
    %v886 = vsel %vm209, %v862, 0
    %v888 = vsel %vm209, %v847, 0
    %v890 = vsel %vm209, %v863, 0
    %v892 = vsel %vm209, %v848, 0
    %v894 = vsel %vm209, %v864, 0
    %v896 = vsel %vm209, %v849, 0
    %898 = vmatprep.subr.mxu0 %v870
    %899 = vmatpush1.msra.mxu0 %v868
    %900 = vmatprep.subr.mxu0 0.0
    %901 = vmatpush1.msra.mxu0 0.0
    %902 = vmatprep.subr.mxu0 0.0
    %903 = vmatpush1.msra.mxu0 0.0
    %904 = vmatprep.subr.mxu0 0.0
    %905 = vmatpush1.msra.mxu0 0.0
    %906 = vmatprep.subr.mxu0 0.0
    %907 = vmatpush1.msra.mxu0 0.0
    %908 = vmatprep.subr.mxu0 0.0
    %909 = vmatpush1.msra.mxu0 0.0
    %910 = vmatprep.subr.mxu0 0.0
    %911 = vmatpush1.msra.mxu0 0.0
    %912 = vmatprep.subr.mxu0 0.0
    %913 = vmatpush1.msra.mxu0 0.0
    %914 = vmatprep.subr.mxu0 0.0
    %915 = vmatpush1.msra.mxu0 0.0
    %916 = vmatprep.subr.mxu0 0.0
    %917 = vmatpush1.msra.mxu0 0.0
    %918 = vmatprep.subr.mxu0 0.0
    %919 = vmatpush1.msra.mxu0 0.0
    %920 = vmatprep.subr.mxu0 0.0
    %921 = vmatpush1.msra.mxu0 0.0
    %922 = vmatprep.subr.mxu0 0.0
    %923 = vmatpush1.msra.mxu0 0.0
    %924 = vmatprep.subr.mxu0 0.0
    %925 = vmatpush1.msra.mxu0 0.0
    %926 = vmatprep.subr.mxu0 0.0
    %927 = vmatpush1.msra.mxu0 0.0
    %928 = vmatprep.subr.mxu0 0.0
    %929 = vmatpush1.msra.mxu0 0.0
    %930 = vmatprep.subr.mxu0 0.0
    %931 = vmatpush1.msra.mxu0 0.0
    %932 = vmatprep.subr.mxu0 0.0
    %933 = vmatpush1.msra.mxu0 0.0
    %934 = vmatprep.subr.mxu0 0.0
    %935 = vmatpush1.msra.mxu0 0.0
    %936 = vmatprep.subr.mxu0 0.0
    %937 = vmatpush1.msra.mxu0 0.0
    %938 = vmatprep.subr.mxu0 0.0
    %939 = vmatpush1.msra.mxu0 0.0
    %940 = vmatprep.subr.mxu0 0.0
    %941 = vmatpush1.msra.mxu0 0.0
    %942 = vmatprep.subr.mxu0 0.0
    %943 = vmatpush1.msra.mxu0 0.0
    %944 = vmatprep.subr.mxu0 0.0
    %945 = vmatpush1.msra.mxu0 0.0
    %946 = vmatprep.subr.mxu0 0.0
    %947 = vmatpush1.msra.mxu0 0.0
    %948 = vmatprep.subr.mxu0 0.0
    %949 = vmatpush1.msra.mxu0 0.0
    %950 = vmatprep.subr.mxu0 0.0
    %951 = vmatpush1.msra.mxu0 0.0
    %952 = vmatprep.subr.mxu0 0.0
    %953 = vmatpush1.msra.mxu0 0.0
    %954 = vmatprep.subr.mxu0 0.0
    %955 = vmatpush1.msra.mxu0 0.0
    %956 = vmatprep.subr.mxu0 0.0
    %957 = vmatpush1.msra.mxu0 0.0
    %958 = vmatprep.subr.mxu0 0.0
    %959 = vmatpush1.msra.mxu0 0.0
    %960 = vmatprep.subr.mxu0 0.0
    %961 = vmatpush1.msra.mxu0 0.0
    %962 = vmatprep.mubr.f32.mxu0 0.0
    %963 = vmatmul.mubr.f32.gmra.mrb[0].mxu0 %v866
    %v964 = vpop.f32.mrb[0].mxu0
    %v965 = vadd.f32 0.0, %v964
    %v966 = vpop.f32.mrb[0].mxu0
    %v967 = vadd.f32 0.0, %v966
    %968 = vdwg.mxu0
    %969 = vmatprep.subr.mxu0 %v874
    %970 = vmatpush1.msra.mxu0 %v872
    %971 = vmatprep.subr.mxu0 0.0
    %972 = vmatpush1.msra.mxu0 0.0
    %973 = vmatprep.subr.mxu0 0.0
    %974 = vmatpush1.msra.mxu0 0.0
    %975 = vmatprep.subr.mxu0 0.0
    %976 = vmatpush1.msra.mxu0 0.0
    %977 = vmatprep.subr.mxu0 0.0
    %978 = vmatpush1.msra.mxu0 0.0
    %979 = vmatprep.subr.mxu0 0.0
    %980 = vmatpush1.msra.mxu0 0.0
    %981 = vmatprep.subr.mxu0 0.0
    %982 = vmatpush1.msra.mxu0 0.0
    %983 = vmatprep.subr.mxu0 0.0
    %984 = vmatpush1.msra.mxu0 0.0
    %985 = vmatprep.subr.mxu0 0.0
    %986 = vmatpush1.msra.mxu0 0.0
    %987 = vmatprep.subr.mxu0 0.0
    %988 = vmatpush1.msra.mxu0 0.0
    %989 = vmatprep.subr.mxu0 0.0
    %990 = vmatpush1.msra.mxu0 0.0
    %991 = vmatprep.subr.mxu0 0.0
    %992 = vmatpush1.msra.mxu0 0.0
    %993 = vmatprep.subr.mxu0 0.0
    %994 = vmatpush1.msra.mxu0 0.0
    %995 = vmatprep.subr.mxu0 0.0
    %996 = vmatpush1.msra.mxu0 0.0
    %997 = vmatprep.subr.mxu0 0.0
    %998 = vmatpush1.msra.mxu0 0.0
    %999 = vmatprep.subr.mxu0 0.0
    %1000 = vmatpush1.msra.mxu0 0.0
    %1001 = vmatprep.subr.mxu0 0.0
    %1002 = vmatpush1.msra.mxu0 0.0
    %1003 = vmatprep.subr.mxu0 0.0
    %1004 = vmatpush1.msra.mxu0 0.0
    %1005 = vmatprep.subr.mxu0 0.0
    %1006 = vmatpush1.msra.mxu0 0.0
    %1007 = vmatprep.subr.mxu0 0.0
    %1008 = vmatpush1.msra.mxu0 0.0
    %1009 = vmatprep.subr.mxu0 0.0
    %1010 = vmatpush1.msra.mxu0 0.0
    %1011 = vmatprep.subr.mxu0 0.0
    %1012 = vmatpush1.msra.mxu0 0.0
    %1013 = vmatprep.subr.mxu0 0.0
    %1014 = vmatpush1.msra.mxu0 0.0
    %1015 = vmatprep.subr.mxu0 0.0
    %1016 = vmatpush1.msra.mxu0 0.0
    %1017 = vmatprep.subr.mxu0 0.0
    %1018 = vmatpush1.msra.mxu0 0.0
    %1019 = vmatprep.subr.mxu0 0.0
    %1020 = vmatpush1.msra.mxu0 0.0
    %1021 = vmatprep.subr.mxu0 0.0
    %1022 = vmatpush1.msra.mxu0 0.0
    %1023 = vmatprep.subr.mxu0 0.0
    %1024 = vmatpush1.msra.mxu0 0.0
    %1025 = vmatprep.subr.mxu0 0.0
    %1026 = vmatpush1.msra.mxu0 0.0
    %1027 = vmatprep.subr.mxu0 0.0
    %1028 = vmatpush1.msra.mxu0 0.0
    %1029 = vmatprep.subr.mxu0 0.0
    %1030 = vmatpush1.msra.mxu0 0.0
    %1031 = vmatprep.subr.mxu0 0.0
    %1032 = vmatpush1.msra.mxu0 0.0
    %1033 = vmatprep.mubr.f32.mxu0 0.0
    %1034 = vmatmul.mubr.f32.gmra.mrb[0].mxu0 %v866
    %v1035 = vpop.f32.mrb[0].mxu0
    %v1036 = vadd.f32 0.0, %v1035
    %v1037 = vpop.f32.mrb[0].mxu0
    %v1038 = vadd.f32 0.0, %v1037
    %1039 = vdwg.mxu0
    %1040 = vmatprep.subr.mxu0 %v878
    %1041 = vmatpush1.msra.mxu0 %v876
    %1042 = vmatprep.subr.mxu0 0.0
    %1043 = vmatpush1.msra.mxu0 0.0
    %1044 = vmatprep.subr.mxu0 0.0
    %1045 = vmatpush1.msra.mxu0 0.0
    %1046 = vmatprep.subr.mxu0 0.0
    %1047 = vmatpush1.msra.mxu0 0.0
    %1048 = vmatprep.subr.mxu0 0.0
    %1049 = vmatpush1.msra.mxu0 0.0
    %1050 = vmatprep.subr.mxu0 0.0
    %1051 = vmatpush1.msra.mxu0 0.0
    %1052 = vmatprep.subr.mxu0 0.0
    %1053 = vmatpush1.msra.mxu0 0.0
    %1054 = vmatprep.subr.mxu0 0.0
    %1055 = vmatpush1.msra.mxu0 0.0
    %1056 = vmatprep.subr.mxu0 0.0
    %1057 = vmatpush1.msra.mxu0 0.0
    %1058 = vmatprep.subr.mxu0 0.0
    %1059 = vmatpush1.msra.mxu0 0.0
    %1060 = vmatprep.subr.mxu0 0.0
    %1061 = vmatpush1.msra.mxu0 0.0
    %1062 = vmatprep.subr.mxu0 0.0
    %1063 = vmatpush1.msra.mxu0 0.0
    %1064 = vmatprep.subr.mxu0 0.0
    %1065 = vmatpush1.msra.mxu0 0.0
    %1066 = vmatprep.subr.mxu0 0.0
    %1067 = vmatpush1.msra.mxu0 0.0
    %1068 = vmatprep.subr.mxu0 0.0
    %1069 = vmatpush1.msra.mxu0 0.0
    %1070 = vmatprep.subr.mxu0 0.0
    %1071 = vmatpush1.msra.mxu0 0.0
    %1072 = vmatprep.subr.mxu0 0.0
    %1073 = vmatpush1.msra.mxu0 0.0
    %1074 = vmatprep.subr.mxu0 0.0
    %1075 = vmatpush1.msra.mxu0 0.0
    %1076 = vmatprep.subr.mxu0 0.0
    %1077 = vmatpush1.msra.mxu0 0.0
    %1078 = vmatprep.subr.mxu0 0.0
    %1079 = vmatpush1.msra.mxu0 0.0
    %1080 = vmatprep.subr.mxu0 0.0
    %1081 = vmatpush1.msra.mxu0 0.0
    %1082 = vmatprep.subr.mxu0 0.0
    %1083 = vmatpush1.msra.mxu0 0.0
    %1084 = vmatprep.subr.mxu0 0.0
    %1085 = vmatpush1.msra.mxu0 0.0
    %1086 = vmatprep.subr.mxu0 0.0
    %1087 = vmatpush1.msra.mxu0 0.0
    %1088 = vmatprep.subr.mxu0 0.0
    %1089 = vmatpush1.msra.mxu0 0.0
    %1090 = vmatprep.subr.mxu0 0.0
    %1091 = vmatpush1.msra.mxu0 0.0
    %1092 = vmatprep.subr.mxu0 0.0
    %1093 = vmatpush1.msra.mxu0 0.0
    %1094 = vmatprep.subr.mxu0 0.0
    %1095 = vmatpush1.msra.mxu0 0.0
    %1096 = vmatprep.subr.mxu0 0.0
    %1097 = vmatpush1.msra.mxu0 0.0
    %1098 = vmatprep.subr.mxu0 0.0
    %1099 = vmatpush1.msra.mxu0 0.0
    %1100 = vmatprep.subr.mxu0 0.0
    %1101 = vmatpush1.msra.mxu0 0.0
    %1102 = vmatprep.subr.mxu0 0.0
    %1103 = vmatpush1.msra.mxu0 0.0
    %1104 = vmatprep.mubr.f32.mxu0 0.0
    %1105 = vmatmul.mubr.f32.gmra.mrb[0].mxu0 %v866
    %v1106 = vpop.f32.mrb[0].mxu0
    %v1107 = vadd.f32 0.0, %v1106
    %v1108 = vpop.f32.mrb[0].mxu0
    %v1109 = vadd.f32 0.0, %v1108
    %1110 = vdwg.mxu0
    %1111 = vmatprep.subr.mxu0 %v882
    %1112 = vmatpush1.msra.mxu0 %v880
    %1113 = vmatprep.subr.mxu0 0.0
    %1114 = vmatpush1.msra.mxu0 0.0
    %1115 = vmatprep.subr.mxu0 0.0
    %1116 = vmatpush1.msra.mxu0 0.0
    %1117 = vmatprep.subr.mxu0 0.0
    %1118 = vmatpush1.msra.mxu0 0.0
    %1119 = vmatprep.subr.mxu0 0.0
    %1120 = vmatpush1.msra.mxu0 0.0
    %1121 = vmatprep.subr.mxu0 0.0
    %1122 = vmatpush1.msra.mxu0 0.0
    %1123 = vmatprep.subr.mxu0 0.0
    %1124 = vmatpush1.msra.mxu0 0.0
    %1125 = vmatprep.subr.mxu0 0.0
    %1126 = vmatpush1.msra.mxu0 0.0
    %1127 = vmatprep.subr.mxu0 0.0
    %1128 = vmatpush1.msra.mxu0 0.0
    %1129 = vmatprep.subr.mxu0 0.0
    %1130 = vmatpush1.msra.mxu0 0.0
    %1131 = vmatprep.subr.mxu0 0.0
    %1132 = vmatpush1.msra.mxu0 0.0
    %1133 = vmatprep.subr.mxu0 0.0
    %1134 = vmatpush1.msra.mxu0 0.0
    %1135 = vmatprep.subr.mxu0 0.0
    %1136 = vmatpush1.msra.mxu0 0.0
    %1137 = vmatprep.subr.mxu0 0.0
    %1138 = vmatpush1.msra.mxu0 0.0
    %1139 = vmatprep.subr.mxu0 0.0
    %1140 = vmatpush1.msra.mxu0 0.0
    %1141 = vmatprep.subr.mxu0 0.0
    %1142 = vmatpush1.msra.mxu0 0.0
    %1143 = vmatprep.subr.mxu0 0.0
    %1144 = vmatpush1.msra.mxu0 0.0
    %1145 = vmatprep.subr.mxu0 0.0
    %1146 = vmatpush1.msra.mxu0 0.0
    %1147 = vmatprep.subr.mxu0 0.0
    %1148 = vmatpush1.msra.mxu0 0.0
    %1149 = vmatprep.subr.mxu0 0.0
    %1150 = vmatpush1.msra.mxu0 0.0
    %1151 = vmatprep.subr.mxu0 0.0
    %1152 = vmatpush1.msra.mxu0 0.0
    %1153 = vmatprep.subr.mxu0 0.0
    %1154 = vmatpush1.msra.mxu0 0.0
    %1155 = vmatprep.subr.mxu0 0.0
    %1156 = vmatpush1.msra.mxu0 0.0
    %1157 = vmatprep.subr.mxu0 0.0
    %1158 = vmatpush1.msra.mxu0 0.0
    %1159 = vmatprep.subr.mxu0 0.0
    %1160 = vmatpush1.msra.mxu0 0.0
    %1161 = vmatprep.subr.mxu0 0.0
    %1162 = vmatpush1.msra.mxu0 0.0
    %1163 = vmatprep.subr.mxu0 0.0
    %1164 = vmatpush1.msra.mxu0 0.0
    %1165 = vmatprep.subr.mxu0 0.0
    %1166 = vmatpush1.msra.mxu0 0.0
    %1167 = vmatprep.subr.mxu0 0.0
    %1168 = vmatpush1.msra.mxu0 0.0
    %1169 = vmatprep.subr.mxu0 0.0
    %1170 = vmatpush1.msra.mxu0 0.0
    %1171 = vmatprep.subr.mxu0 0.0
    %1172 = vmatpush1.msra.mxu0 0.0
    %1173 = vmatprep.subr.mxu0 0.0
    %1174 = vmatpush1.msra.mxu0 0.0
    %1175 = vmatprep.mubr.f32.mxu0 0.0
    %1176 = vmatmul.mubr.f32.gmra.mrb[0].mxu0 %v866
    %v1177 = vpop.f32.mrb[0].mxu0
    %v1178 = vadd.f32 0.0, %v1177
    %v1179 = vpop.f32.mrb[0].mxu0
    %v1180 = vadd.f32 0.0, %v1179
    %1181 = vdwg.mxu0
    %1182 = vmatprep.subr.mxu0 %v886
    %1183 = vmatpush1.msra.mxu0 %v884
    %1184 = vmatprep.subr.mxu0 0.0
    %1185 = vmatpush1.msra.mxu0 0.0
    %1186 = vmatprep.subr.mxu0 0.0
    %1187 = vmatpush1.msra.mxu0 0.0
    %1188 = vmatprep.subr.mxu0 0.0
    %1189 = vmatpush1.msra.mxu0 0.0
    %1190 = vmatprep.subr.mxu0 0.0
    %1191 = vmatpush1.msra.mxu0 0.0
    %1192 = vmatprep.subr.mxu0 0.0
    %1193 = vmatpush1.msra.mxu0 0.0
    %1194 = vmatprep.subr.mxu0 0.0
    %1195 = vmatpush1.msra.mxu0 0.0
    %1196 = vmatprep.subr.mxu0 0.0
    %1197 = vmatpush1.msra.mxu0 0.0
    %1198 = vmatprep.subr.mxu0 0.0
    %1199 = vmatpush1.msra.mxu0 0.0
    %1200 = vmatprep.subr.mxu0 0.0
    %1201 = vmatpush1.msra.mxu0 0.0
    %1202 = vmatprep.subr.mxu0 0.0
    %1203 = vmatpush1.msra.mxu0 0.0
    %1204 = vmatprep.subr.mxu0 0.0
    %1205 = vmatpush1.msra.mxu0 0.0
    %1206 = vmatprep.subr.mxu0 0.0
    %1207 = vmatpush1.msra.mxu0 0.0
    %1208 = vmatprep.subr.mxu0 0.0
    %1209 = vmatpush1.msra.mxu0 0.0
    %1210 = vmatprep.subr.mxu0 0.0
    %1211 = vmatpush1.msra.mxu0 0.0
    %1212 = vmatprep.subr.mxu0 0.0
    %1213 = vmatpush1.msra.mxu0 0.0
    %1214 = vmatprep.subr.mxu0 0.0
    %1215 = vmatpush1.msra.mxu0 0.0
    %1216 = vmatprep.subr.mxu0 0.0
    %1217 = vmatpush1.msra.mxu0 0.0
    %1218 = vmatprep.subr.mxu0 0.0
    %1219 = vmatpush1.msra.mxu0 0.0
    %1220 = vmatprep.subr.mxu0 0.0
    %1221 = vmatpush1.msra.mxu0 0.0
    %1222 = vmatprep.subr.mxu0 0.0
    %1223 = vmatpush1.msra.mxu0 0.0
    %1224 = vmatprep.subr.mxu0 0.0
    %1225 = vmatpush1.msra.mxu0 0.0
    %1226 = vmatprep.subr.mxu0 0.0
    %1227 = vmatpush1.msra.mxu0 0.0
    %1228 = vmatprep.subr.mxu0 0.0
    %1229 = vmatpush1.msra.mxu0 0.0
    %1230 = vmatprep.subr.mxu0 0.0
    %1231 = vmatpush1.msra.mxu0 0.0
    %1232 = vmatprep.subr.mxu0 0.0
    %1233 = vmatpush1.msra.mxu0 0.0
    %1234 = vmatprep.subr.mxu0 0.0
    %1235 = vmatpush1.msra.mxu0 0.0
    %1236 = vmatprep.subr.mxu0 0.0
    %1237 = vmatpush1.msra.mxu0 0.0
    %1238 = vmatprep.subr.mxu0 0.0
    %1239 = vmatpush1.msra.mxu0 0.0
    %1240 = vmatprep.subr.mxu0 0.0
    %1241 = vmatpush1.msra.mxu0 0.0
    %1242 = vmatprep.subr.mxu0 0.0
    %1243 = vmatpush1.msra.mxu0 0.0
    %1244 = vmatprep.subr.mxu0 0.0
    %1245 = vmatpush1.msra.mxu0 0.0
    %1246 = vmatprep.mubr.f32.mxu0 0.0
    %1247 = vmatmul.mubr.f32.gmra.mrb[0].mxu0 %v866
    %v1248 = vpop.f32.mrb[0].mxu0
    %v1249 = vadd.f32 0.0, %v1248
    %v1250 = vpop.f32.mrb[0].mxu0
    %v1251 = vadd.f32 0.0, %v1250
    %1252 = vdwg.mxu0
    %1253 = vmatprep.subr.mxu0 %v890
    %1254 = vmatpush1.msra.mxu0 %v888
    %1255 = vmatprep.subr.mxu0 0.0
    %1256 = vmatpush1.msra.mxu0 0.0
    %1257 = vmatprep.subr.mxu0 0.0
    %1258 = vmatpush1.msra.mxu0 0.0
    %1259 = vmatprep.subr.mxu0 0.0
    %1260 = vmatpush1.msra.mxu0 0.0
    %1261 = vmatprep.subr.mxu0 0.0
    %1262 = vmatpush1.msra.mxu0 0.0
    %1263 = vmatprep.subr.mxu0 0.0
    %1264 = vmatpush1.msra.mxu0 0.0
    %1265 = vmatprep.subr.mxu0 0.0
    %1266 = vmatpush1.msra.mxu0 0.0
    %1267 = vmatprep.subr.mxu0 0.0
    %1268 = vmatpush1.msra.mxu0 0.0
    %1269 = vmatprep.subr.mxu0 0.0
    %1270 = vmatpush1.msra.mxu0 0.0
    %1271 = vmatprep.subr.mxu0 0.0
    %1272 = vmatpush1.msra.mxu0 0.0
    %1273 = vmatprep.subr.mxu0 0.0
    %1274 = vmatpush1.msra.mxu0 0.0
    %1275 = vmatprep.subr.mxu0 0.0
    %1276 = vmatpush1.msra.mxu0 0.0
    %1277 = vmatprep.subr.mxu0 0.0
    %1278 = vmatpush1.msra.mxu0 0.0
    %1279 = vmatprep.subr.mxu0 0.0
    %1280 = vmatpush1.msra.mxu0 0.0
    %1281 = vmatprep.subr.mxu0 0.0
    %1282 = vmatpush1.msra.mxu0 0.0
    %1283 = vmatprep.subr.mxu0 0.0
    %1284 = vmatpush1.msra.mxu0 0.0
    %1285 = vmatprep.subr.mxu0 0.0
    %1286 = vmatpush1.msra.mxu0 0.0
    %1287 = vmatprep.subr.mxu0 0.0
    %1288 = vmatpush1.msra.mxu0 0.0
    %1289 = vmatprep.subr.mxu0 0.0
    %1290 = vmatpush1.msra.mxu0 0.0
    %1291 = vmatprep.subr.mxu0 0.0
    %1292 = vmatpush1.msra.mxu0 0.0
    %1293 = vmatprep.subr.mxu0 0.0
    %1294 = vmatpush1.msra.mxu0 0.0
    %1295 = vmatprep.subr.mxu0 0.0
    %1296 = vmatpush1.msra.mxu0 0.0
    %1297 = vmatprep.subr.mxu0 0.0
    %1298 = vmatpush1.msra.mxu0 0.0
    %1299 = vmatprep.subr.mxu0 0.0
    %1300 = vmatpush1.msra.mxu0 0.0
    %1301 = vmatprep.subr.mxu0 0.0
    %1302 = vmatpush1.msra.mxu0 0.0
    %1303 = vmatprep.subr.mxu0 0.0
    %1304 = vmatpush1.msra.mxu0 0.0
    %1305 = vmatprep.subr.mxu0 0.0
    %1306 = vmatpush1.msra.mxu0 0.0
    %1307 = vmatprep.subr.mxu0 0.0
    %1308 = vmatpush1.msra.mxu0 0.0
    %1309 = vmatprep.subr.mxu0 0.0
    %1310 = vmatpush1.msra.mxu0 0.0
    %1311 = vmatprep.subr.mxu0 0.0
    %1312 = vmatpush1.msra.mxu0 0.0
    %1313 = vmatprep.subr.mxu0 0.0
    %1314 = vmatpush1.msra.mxu0 0.0
    %1315 = vmatprep.subr.mxu0 0.0
    %1316 = vmatpush1.msra.mxu0 0.0
    %1317 = vmatprep.mubr.f32.mxu0 0.0
    %1318 = vmatmul.mubr.f32.gmra.mrb[0].mxu0 %v866
    %v1319 = vpop.f32.mrb[0].mxu0
    %v1320 = vadd.f32 0.0, %v1319
    %v1321 = vpop.f32.mrb[0].mxu0
    %v1322 = vadd.f32 0.0, %v1321
    %1323 = vdwg.mxu0
    %1324 = vmatprep.subr.mxu0 %v894
    %1325 = vmatpush1.msra.mxu0 %v892
    %1326 = vmatprep.subr.mxu0 0.0
    %1327 = vmatpush1.msra.mxu0 0.0
    %1328 = vmatprep.subr.mxu0 0.0
    %1329 = vmatpush1.msra.mxu0 0.0
    %1330 = vmatprep.subr.mxu0 0.0
    %1331 = vmatpush1.msra.mxu0 0.0
    %1332 = vmatprep.subr.mxu0 0.0
    %1333 = vmatpush1.msra.mxu0 0.0
    %1334 = vmatprep.subr.mxu0 0.0
    %1335 = vmatpush1.msra.mxu0 0.0
    %1336 = vmatprep.subr.mxu0 0.0
    %1337 = vmatpush1.msra.mxu0 0.0
    %1338 = vmatprep.subr.mxu0 0.0
    %1339 = vmatpush1.msra.mxu0 0.0
    %1340 = vmatprep.subr.mxu0 0.0
    %1341 = vmatpush1.msra.mxu0 0.0
    %1342 = vmatprep.subr.mxu0 0.0
    %1343 = vmatpush1.msra.mxu0 0.0
    %1344 = vmatprep.subr.mxu0 0.0
    %1345 = vmatpush1.msra.mxu0 0.0
    %1346 = vmatprep.subr.mxu0 0.0
    %1347 = vmatpush1.msra.mxu0 0.0
    %1348 = vmatprep.subr.mxu0 0.0
    %1349 = vmatpush1.msra.mxu0 0.0
    %1350 = vmatprep.subr.mxu0 0.0
    %1351 = vmatpush1.msra.mxu0 0.0
    %1352 = vmatprep.subr.mxu0 0.0
    %1353 = vmatpush1.msra.mxu0 0.0
    %1354 = vmatprep.subr.mxu0 0.0
    %1355 = vmatpush1.msra.mxu0 0.0
    %1356 = vmatprep.subr.mxu0 0.0
    %1357 = vmatpush1.msra.mxu0 0.0
    %1358 = vmatprep.subr.mxu0 0.0
    %1359 = vmatpush1.msra.mxu0 0.0
    %1360 = vmatprep.subr.mxu0 0.0
    %1361 = vmatpush1.msra.mxu0 0.0
    %1362 = vmatprep.subr.mxu0 0.0
    %1363 = vmatpush1.msra.mxu0 0.0
    %1364 = vmatprep.subr.mxu0 0.0
    %1365 = vmatpush1.msra.mxu0 0.0
    %1366 = vmatprep.subr.mxu0 0.0
    %1367 = vmatpush1.msra.mxu0 0.0
    %1368 = vmatprep.subr.mxu0 0.0
    %1369 = vmatpush1.msra.mxu0 0.0
    %1370 = vmatprep.subr.mxu0 0.0
    %1371 = vmatpush1.msra.mxu0 0.0
    %1372 = vmatprep.subr.mxu0 0.0
    %1373 = vmatpush1.msra.mxu0 0.0
    %1374 = vmatprep.subr.mxu0 0.0
    %1375 = vmatpush1.msra.mxu0 0.0
    %1376 = vmatprep.subr.mxu0 0.0
    %1377 = vmatpush1.msra.mxu0 0.0
    %1378 = vmatprep.subr.mxu0 0.0
    %1379 = vmatpush1.msra.mxu0 0.0
    %1380 = vmatprep.subr.mxu0 0.0
    %1381 = vmatpush1.msra.mxu0 0.0
    %1382 = vmatprep.subr.mxu0 0.0
    %1383 = vmatpush1.msra.mxu0 0.0
    %1384 = vmatprep.subr.mxu0 0.0
    %1385 = vmatpush1.msra.mxu0 0.0
    %1386 = vmatprep.subr.mxu0 0.0
    %1387 = vmatpush1.msra.mxu0 0.0
    %1388 = vmatprep.mubr.f32.mxu0 0.0
    %1389 = vmatmul.mubr.f32.gmra.mrb[0].mxu0 %v866
    %v1390 = vpop.f32.mrb[0].mxu0
    %v1391 = vadd.f32 0.0, %v1390
    %v1392 = vpop.f32.mrb[0].mxu0
    %v1393 = vadd.f32 0.0, %v1392
    %1394 = vdwg.mxu0
    %1395 = vmatprep.subr.mxu0 0.0
    %1396 = vmatpush1.msra.mxu0 %v896
    %1397 = vmatprep.subr.mxu0 0.0
    %1398 = vmatpush1.msra.mxu0 0.0
    %1399 = vmatprep.subr.mxu0 0.0
    %1400 = vmatpush1.msra.mxu0 0.0
    %1401 = vmatprep.subr.mxu0 0.0
    %1402 = vmatpush1.msra.mxu0 0.0
    %1403 = vmatprep.subr.mxu0 0.0
    %1404 = vmatpush1.msra.mxu0 0.0
    %1405 = vmatprep.subr.mxu0 0.0
    %1406 = vmatpush1.msra.mxu0 0.0
    %1407 = vmatprep.subr.mxu0 0.0
    %1408 = vmatpush1.msra.mxu0 0.0
    %1409 = vmatprep.subr.mxu0 0.0
    %1410 = vmatpush1.msra.mxu0 0.0
    %1411 = vmatprep.subr.mxu0 0.0
    %1412 = vmatpush1.msra.mxu0 0.0
    %1413 = vmatprep.subr.mxu0 0.0
    %1414 = vmatpush1.msra.mxu0 0.0
    %1415 = vmatprep.subr.mxu0 0.0
    %1416 = vmatpush1.msra.mxu0 0.0
    %1417 = vmatprep.subr.mxu0 0.0
    %1418 = vmatpush1.msra.mxu0 0.0
    %1419 = vmatprep.subr.mxu0 0.0
    %1420 = vmatpush1.msra.mxu0 0.0
    %1421 = vmatprep.subr.mxu0 0.0
    %1422 = vmatpush1.msra.mxu0 0.0
    %1423 = vmatprep.subr.mxu0 0.0
    %1424 = vmatpush1.msra.mxu0 0.0
    %1425 = vmatprep.subr.mxu0 0.0
    %1426 = vmatpush1.msra.mxu0 0.0
    %1427 = vmatprep.subr.mxu0 0.0
    %1428 = vmatpush1.msra.mxu0 0.0
    %1429 = vmatprep.subr.mxu0 0.0
    %1430 = vmatpush1.msra.mxu0 0.0
    %1431 = vmatprep.subr.mxu0 0.0
    %1432 = vmatpush1.msra.mxu0 0.0
    %1433 = vmatprep.subr.mxu0 0.0
    %1434 = vmatpush1.msra.mxu0 0.0
    %1435 = vmatprep.subr.mxu0 0.0
    %1436 = vmatpush1.msra.mxu0 0.0
    %1437 = vmatprep.subr.mxu0 0.0
    %1438 = vmatpush1.msra.mxu0 0.0
    %1439 = vmatprep.subr.mxu0 0.0
    %1440 = vmatpush1.msra.mxu0 0.0
    %1441 = vmatprep.subr.mxu0 0.0
    %1442 = vmatpush1.msra.mxu0 0.0
    %1443 = vmatprep.subr.mxu0 0.0
    %1444 = vmatpush1.msra.mxu0 0.0
    %1445 = vmatprep.subr.mxu0 0.0
    %1446 = vmatpush1.msra.mxu0 0.0
    %1447 = vmatprep.subr.mxu0 0.0
    %1448 = vmatpush1.msra.mxu0 0.0
    %1449 = vmatprep.subr.mxu0 0.0
    %1450 = vmatpush1.msra.mxu0 0.0
    %1451 = vmatprep.subr.mxu0 0.0
    %1452 = vmatpush1.msra.mxu0 0.0
    %1453 = vmatprep.subr.mxu0 0.0
    %1454 = vmatpush1.msra.mxu0 0.0
    %1455 = vmatprep.subr.mxu0 0.0
    %1456 = vmatpush1.msra.mxu0 0.0
    %1457 = vmatprep.subr.mxu0 0.0
    %1458 = vmatpush1.msra.mxu0 0.0
    %1459 = vmatprep.mubr.f32.mxu0 0.0
    %1460 = vmatmul.mubr.f32.gmra.mrb[0].mxu0 %v866
    %v1461 = vpop.f32.mrb[0].mxu0
    %v1462 = vadd.f32 0.0, %v1461
    %v1463 = vpop.f32.mrb[0].mxu0
    %1464 = vdwg.mxu0
    %v1465 = vadd.f32 %v826, %v965
    %v1466 = vadd.f32 %v827, %v967
    %v1467 = vadd.f32 %v828, %v1036
    %v1468 = vadd.f32 %v829, %v1038
    %v1469 = vadd.f32 %v830, %v1107
    %v1470 = vadd.f32 %v831, %v1109
    %v1471 = vadd.f32 %v832, %v1178
    %v1472 = vadd.f32 %v833, %v1180
    %v1473 = vadd.f32 %v834, %v1249
    %v1474 = vadd.f32 %v835, %v1251
    %v1475 = vadd.f32 %v836, %v1320
    %v1476 = vadd.f32 %v837, %v1322
    %v1477 = vadd.f32 %v838, %v1391
    %v1478 = vadd.f32 %v839, %v1393
    %v1479 = vadd.f32 %v840, %v1462
    %1480 = vst [vmem:[#allocation2 + $0x8] sm:$0xff] %v1465
    %1481 = vst [vmem:[#allocation2 + $0x10] sm:$0xff] %v1466
    %1482 = vst [vmem:[#allocation2 + $0x18] sm:$0xff] %v1467
    %1483 = vst [vmem:[#allocation2 + $0x20] sm:$0xff] %v1468
    %1484 = vst [vmem:[#allocation2 + $0x28] sm:$0xff] %v1469
    %1485 = vst [vmem:[#allocation2 + $0x30] sm:$0xff] %v1470
    %1486 = vst [vmem:[#allocation2 + $0x38] sm:$0xff] %v1471
    %1487 = vst [vmem:[#allocation2 + $0x40] sm:$0xff] %v1472
    %1488 = vst [vmem:[#allocation2 + $0x48] sm:$0xff] %v1473
    %1489 = vst [vmem:[#allocation2 + $0x50] sm:$0xff] %v1474
    %1490 = vst [vmem:[#allocation2 + $0x58] sm:$0xff] %v1475
    %1491 = vst [vmem:[#allocation2 + $0x60] sm:$0xff] %v1476
    %1492 = vst [vmem:[#allocation2 + $0x68] sm:$0xff] %v1477
    %1493 = vst [vmem:[#allocation2 + $0x70] sm:$0xff] %v1478
    %1494 = vst [vmem:[#allocation2 + $0x78] sm:$0xff] %v1479
    %v1495 = vld [vmem:[#allocation2] sm:$0xff]
    %v1496 = vld [vmem:[#allocation2 + $0x8] sm:$0xff]
    %v1497 = vld [vmem:[#allocation2 + $0x10] sm:$0xff]
    %v1498 = vld [vmem:[#allocation2 + $0x18] sm:$0xff]
    %v1499 = vld [vmem:[#allocation2 + $0x20] sm:$0xff]
    %v1500 = vld [vmem:[#allocation2 + $0x28] sm:$0xff]
    %v1501 = vld [vmem:[#allocation2 + $0x30] sm:$0xff]
    %v1502 = vld [vmem:[#allocation2 + $0x38] sm:$0xff]
    %v1503 = vld [vmem:[#allocation2 + $0x40] sm:$0xff]
    %v1504 = vld [vmem:[#allocation2 + $0x48] sm:$0xff]
    %v1505 = vld [vmem:[#allocation2 + $0x50] sm:$0xff]
    %v1506 = vld [vmem:[#allocation2 + $0x58] sm:$0xff]
    %v1507 = vld [vmem:[#allocation2 + $0x60] sm:$0xff]
    %v1508 = vld [vmem:[#allocation2 + $0x68] sm:$0xff]
    %v1509 = vld [vmem:[#allocation2 + $0x70] sm:$0xff]
    %s1510 = scalar_lea.vmem %s1, 16
    %v1511 = vld [vmem:[%s1510] sm:$0xff]
    %v1512 = vld [vmem:[%s0 + $0x4] sm:$0xff]
    %v1513 = vld [vmem:[%s0 + $0xc] sm:$0xff]
    %v1514 = vld [vmem:[%s0 + $0x14] sm:$0xff]
    %v1515 = vld [vmem:[%s0 + $0x1c] sm:$0xff]
    %v1516 = vld [vmem:[%s0 + $0x24] sm:$0xff]
    %v1517 = vld [vmem:[%s0 + $0x2c] sm:$0xff]
    %v1518 = vld [vmem:[%s0 + $0x34] sm:$0xff]
    %v1519 = vld [vmem:[%s0 + $0x3c] sm:$0xf]
    %v1528 = vcombine.high %v1512, %v1512
    %v1529 = vcombine.high %v1513, %v1513
    %v1530 = vcombine.high %v1514, %v1514
    %v1531 = vcombine.high %v1515, %v1515
    %v1532 = vcombine.high %v1516, %v1516
    %v1533 = vcombine.high %v1517, %v1517
    %v1534 = vcombine.high %v1518, %v1518
    %v1536 = vsel %vm205, %v1511, 0
    %v1538 = vsel %vm209, %v1512, 0
    %v1540 = vsel %vm209, %v1528, 0
    %v1542 = vsel %vm209, %v1513, 0
    %v1544 = vsel %vm209, %v1529, 0
    %v1546 = vsel %vm209, %v1514, 0
    %v1548 = vsel %vm209, %v1530, 0
    %v1550 = vsel %vm209, %v1515, 0
    %v1552 = vsel %vm209, %v1531, 0
    %v1554 = vsel %vm209, %v1516, 0
    %v1556 = vsel %vm209, %v1532, 0
    %v1558 = vsel %vm209, %v1517, 0
    %v1560 = vsel %vm209, %v1533, 0
    %v1562 = vsel %vm209, %v1518, 0
    %v1564 = vsel %vm209, %v1534, 0
    %v1566 = vsel %vm209, %v1519, 0
    %1568 = vmatprep.subr.mxu0 %v1540
    %1569 = vmatpush1.msra.mxu0 %v1538
    %1570 = vmatprep.subr.mxu0 0.0
    %1571 = vmatpush1.msra.mxu0 0.0
    %1572 = vmatprep.subr.mxu0 0.0
    %1573 = vmatpush1.msra.mxu0 0.0
    %1574 = vmatprep.subr.mxu0 0.0
    %1575 = vmatpush1.msra.mxu0 0.0
    %1576 = vmatprep.subr.mxu0 0.0
    %1577 = vmatpush1.msra.mxu0 0.0
    %1578 = vmatprep.subr.mxu0 0.0
    %1579 = vmatpush1.msra.mxu0 0.0
    %1580 = vmatprep.subr.mxu0 0.0
    %1581 = vmatpush1.msra.mxu0 0.0
    %1582 = vmatprep.subr.mxu0 0.0
    %1583 = vmatpush1.msra.mxu0 0.0
    %1584 = vmatprep.subr.mxu0 0.0
    %1585 = vmatpush1.msra.mxu0 0.0
    %1586 = vmatprep.subr.mxu0 0.0
    %1587 = vmatpush1.msra.mxu0 0.0
    %1588 = vmatprep.subr.mxu0 0.0
    %1589 = vmatpush1.msra.mxu0 0.0
    %1590 = vmatprep.subr.mxu0 0.0
    %1591 = vmatpush1.msra.mxu0 0.0
    %1592 = vmatprep.subr.mxu0 0.0
    %1593 = vmatpush1.msra.mxu0 0.0
    %1594 = vmatprep.subr.mxu0 0.0
    %1595 = vmatpush1.msra.mxu0 0.0
    %1596 = vmatprep.subr.mxu0 0.0
    %1597 = vmatpush1.msra.mxu0 0.0
    %1598 = vmatprep.subr.mxu0 0.0
    %1599 = vmatpush1.msra.mxu0 0.0
    %1600 = vmatprep.subr.mxu0 0.0
    %1601 = vmatpush1.msra.mxu0 0.0
    %1602 = vmatprep.subr.mxu0 0.0
    %1603 = vmatpush1.msra.mxu0 0.0
    %1604 = vmatprep.subr.mxu0 0.0
    %1605 = vmatpush1.msra.mxu0 0.0
    %1606 = vmatprep.subr.mxu0 0.0
    %1607 = vmatpush1.msra.mxu0 0.0
    %1608 = vmatprep.subr.mxu0 0.0
    %1609 = vmatpush1.msra.mxu0 0.0
    %1610 = vmatprep.subr.mxu0 0.0
    %1611 = vmatpush1.msra.mxu0 0.0
    %1612 = vmatprep.subr.mxu0 0.0
    %1613 = vmatpush1.msra.mxu0 0.0
    %1614 = vmatprep.subr.mxu0 0.0
    %1615 = vmatpush1.msra.mxu0 0.0
    %1616 = vmatprep.subr.mxu0 0.0
    %1617 = vmatpush1.msra.mxu0 0.0
    %1618 = vmatprep.subr.mxu0 0.0
    %1619 = vmatpush1.msra.mxu0 0.0
    %1620 = vmatprep.subr.mxu0 0.0
    %1621 = vmatpush1.msra.mxu0 0.0
    %1622 = vmatprep.subr.mxu0 0.0
    %1623 = vmatpush1.msra.mxu0 0.0
    %1624 = vmatprep.subr.mxu0 0.0
    %1625 = vmatpush1.msra.mxu0 0.0
    %1626 = vmatprep.subr.mxu0 0.0
    %1627 = vmatpush1.msra.mxu0 0.0
    %1628 = vmatprep.subr.mxu0 0.0
    %1629 = vmatpush1.msra.mxu0 0.0
    %1630 = vmatprep.subr.mxu0 0.0
    %1631 = vmatpush1.msra.mxu0 0.0
    %1632 = vmatprep.mubr.f32.mxu0 0.0
    %1633 = vmatmul.mubr.f32.gmra.mrb[0].mxu0 %v1536
    %v1634 = vpop.f32.mrb[0].mxu0
    %v1635 = vadd.f32 0.0, %v1634
    %v1636 = vpop.f32.mrb[0].mxu0
    %v1637 = vadd.f32 0.0, %v1636
    %1638 = vdwg.mxu0
    %1639 = vmatprep.subr.mxu0 %v1544
    %1640 = vmatpush1.msra.mxu0 %v1542
    %1641 = vmatprep.subr.mxu0 0.0
    %1642 = vmatpush1.msra.mxu0 0.0
    %1643 = vmatprep.subr.mxu0 0.0
    %1644 = vmatpush1.msra.mxu0 0.0
    %1645 = vmatprep.subr.mxu0 0.0
    %1646 = vmatpush1.msra.mxu0 0.0
    %1647 = vmatprep.subr.mxu0 0.0
    %1648 = vmatpush1.msra.mxu0 0.0
    %1649 = vmatprep.subr.mxu0 0.0
    %1650 = vmatpush1.msra.mxu0 0.0
    %1651 = vmatprep.subr.mxu0 0.0
    %1652 = vmatpush1.msra.mxu0 0.0
    %1653 = vmatprep.subr.mxu0 0.0
    %1654 = vmatpush1.msra.mxu0 0.0
    %1655 = vmatprep.subr.mxu0 0.0
    %1656 = vmatpush1.msra.mxu0 0.0
    %1657 = vmatprep.subr.mxu0 0.0
    %1658 = vmatpush1.msra.mxu0 0.0
    %1659 = vmatprep.subr.mxu0 0.0
    %1660 = vmatpush1.msra.mxu0 0.0
    %1661 = vmatprep.subr.mxu0 0.0
    %1662 = vmatpush1.msra.mxu0 0.0
    %1663 = vmatprep.subr.mxu0 0.0
    %1664 = vmatpush1.msra.mxu0 0.0
    %1665 = vmatprep.subr.mxu0 0.0
    %1666 = vmatpush1.msra.mxu0 0.0
    %1667 = vmatprep.subr.mxu0 0.0
    %1668 = vmatpush1.msra.mxu0 0.0
    %1669 = vmatprep.subr.mxu0 0.0
    %1670 = vmatpush1.msra.mxu0 0.0
    %1671 = vmatprep.subr.mxu0 0.0
    %1672 = vmatpush1.msra.mxu0 0.0
    %1673 = vmatprep.subr.mxu0 0.0
    %1674 = vmatpush1.msra.mxu0 0.0
    %1675 = vmatprep.subr.mxu0 0.0
    %1676 = vmatpush1.msra.mxu0 0.0
    %1677 = vmatprep.subr.mxu0 0.0
    %1678 = vmatpush1.msra.mxu0 0.0
    %1679 = vmatprep.subr.mxu0 0.0
    %1680 = vmatpush1.msra.mxu0 0.0
    %1681 = vmatprep.subr.mxu0 0.0
    %1682 = vmatpush1.msra.mxu0 0.0
    %1683 = vmatprep.subr.mxu0 0.0
    %1684 = vmatpush1.msra.mxu0 0.0
    %1685 = vmatprep.subr.mxu0 0.0
    %1686 = vmatpush1.msra.mxu0 0.0
    %1687 = vmatprep.subr.mxu0 0.0
    %1688 = vmatpush1.msra.mxu0 0.0
    %1689 = vmatprep.subr.mxu0 0.0
    %1690 = vmatpush1.msra.mxu0 0.0
    %1691 = vmatprep.subr.mxu0 0.0
    %1692 = vmatpush1.msra.mxu0 0.0
    %1693 = vmatprep.subr.mxu0 0.0
    %1694 = vmatpush1.msra.mxu0 0.0
    %1695 = vmatprep.subr.mxu0 0.0
    %1696 = vmatpush1.msra.mxu0 0.0
    %1697 = vmatprep.subr.mxu0 0.0
    %1698 = vmatpush1.msra.mxu0 0.0
    %1699 = vmatprep.subr.mxu0 0.0
    %1700 = vmatpush1.msra.mxu0 0.0
    %1701 = vmatprep.subr.mxu0 0.0
    %1702 = vmatpush1.msra.mxu0 0.0
    %1703 = vmatprep.mubr.f32.mxu0 0.0
    %1704 = vmatmul.mubr.f32.gmra.mrb[0].mxu0 %v1536
    %v1705 = vpop.f32.mrb[0].mxu0
    %v1706 = vadd.f32 0.0, %v1705
    %v1707 = vpop.f32.mrb[0].mxu0
    %v1708 = vadd.f32 0.0, %v1707
    %1709 = vdwg.mxu0
    %1710 = vmatprep.subr.mxu0 %v1548
    %1711 = vmatpush1.msra.mxu0 %v1546
    %1712 = vmatprep.subr.mxu0 0.0
    %1713 = vmatpush1.msra.mxu0 0.0
    %1714 = vmatprep.subr.mxu0 0.0
    %1715 = vmatpush1.msra.mxu0 0.0
    %1716 = vmatprep.subr.mxu0 0.0
    %1717 = vmatpush1.msra.mxu0 0.0
    %1718 = vmatprep.subr.mxu0 0.0
    %1719 = vmatpush1.msra.mxu0 0.0
    %1720 = vmatprep.subr.mxu0 0.0
    %1721 = vmatpush1.msra.mxu0 0.0
    %1722 = vmatprep.subr.mxu0 0.0
    %1723 = vmatpush1.msra.mxu0 0.0
    %1724 = vmatprep.subr.mxu0 0.0
    %1725 = vmatpush1.msra.mxu0 0.0
    %1726 = vmatprep.subr.mxu0 0.0
    %1727 = vmatpush1.msra.mxu0 0.0
    %1728 = vmatprep.subr.mxu0 0.0
    %1729 = vmatpush1.msra.mxu0 0.0
    %1730 = vmatprep.subr.mxu0 0.0
    %1731 = vmatpush1.msra.mxu0 0.0
    %1732 = vmatprep.subr.mxu0 0.0
    %1733 = vmatpush1.msra.mxu0 0.0
    %1734 = vmatprep.subr.mxu0 0.0
    %1735 = vmatpush1.msra.mxu0 0.0
    %1736 = vmatprep.subr.mxu0 0.0
    %1737 = vmatpush1.msra.mxu0 0.0
    %1738 = vmatprep.subr.mxu0 0.0
    %1739 = vmatpush1.msra.mxu0 0.0
    %1740 = vmatprep.subr.mxu0 0.0
    %1741 = vmatpush1.msra.mxu0 0.0
    %1742 = vmatprep.subr.mxu0 0.0
    %1743 = vmatpush1.msra.mxu0 0.0
    %1744 = vmatprep.subr.mxu0 0.0
    %1745 = vmatpush1.msra.mxu0 0.0
    %1746 = vmatprep.subr.mxu0 0.0
    %1747 = vmatpush1.msra.mxu0 0.0
    %1748 = vmatprep.subr.mxu0 0.0
    %1749 = vmatpush1.msra.mxu0 0.0
    %1750 = vmatprep.subr.mxu0 0.0
    %1751 = vmatpush1.msra.mxu0 0.0
    %1752 = vmatprep.subr.mxu0 0.0
    %1753 = vmatpush1.msra.mxu0 0.0
    %1754 = vmatprep.subr.mxu0 0.0
    %1755 = vmatpush1.msra.mxu0 0.0
    %1756 = vmatprep.subr.mxu0 0.0
    %1757 = vmatpush1.msra.mxu0 0.0
    %1758 = vmatprep.subr.mxu0 0.0
    %1759 = vmatpush1.msra.mxu0 0.0
    %1760 = vmatprep.subr.mxu0 0.0
    %1761 = vmatpush1.msra.mxu0 0.0
    %1762 = vmatprep.subr.mxu0 0.0
    %1763 = vmatpush1.msra.mxu0 0.0
    %1764 = vmatprep.subr.mxu0 0.0
    %1765 = vmatpush1.msra.mxu0 0.0
    %1766 = vmatprep.subr.mxu0 0.0
    %1767 = vmatpush1.msra.mxu0 0.0
    %1768 = vmatprep.subr.mxu0 0.0
    %1769 = vmatpush1.msra.mxu0 0.0
    %1770 = vmatprep.subr.mxu0 0.0
    %1771 = vmatpush1.msra.mxu0 0.0
    %1772 = vmatprep.subr.mxu0 0.0
    %1773 = vmatpush1.msra.mxu0 0.0
    %1774 = vmatprep.mubr.f32.mxu0 0.0
    %1775 = vmatmul.mubr.f32.gmra.mrb[0].mxu0 %v1536
    %v1776 = vpop.f32.mrb[0].mxu0
    %v1777 = vadd.f32 0.0, %v1776
    %v1778 = vpop.f32.mrb[0].mxu0
    %v1779 = vadd.f32 0.0, %v1778
    %1780 = vdwg.mxu0
    %1781 = vmatprep.subr.mxu0 %v1552
    %1782 = vmatpush1.msra.mxu0 %v1550
    %1783 = vmatprep.subr.mxu0 0.0
    %1784 = vmatpush1.msra.mxu0 0.0
    %1785 = vmatprep.subr.mxu0 0.0
    %1786 = vmatpush1.msra.mxu0 0.0
    %1787 = vmatprep.subr.mxu0 0.0
    %1788 = vmatpush1.msra.mxu0 0.0
    %1789 = vmatprep.subr.mxu0 0.0
    %1790 = vmatpush1.msra.mxu0 0.0
    %1791 = vmatprep.subr.mxu0 0.0
    %1792 = vmatpush1.msra.mxu0 0.0
    %1793 = vmatprep.subr.mxu0 0.0
    %1794 = vmatpush1.msra.mxu0 0.0
    %1795 = vmatprep.subr.mxu0 0.0
    %1796 = vmatpush1.msra.mxu0 0.0
    %1797 = vmatprep.subr.mxu0 0.0
    %1798 = vmatpush1.msra.mxu0 0.0
    %1799 = vmatprep.subr.mxu0 0.0
    %1800 = vmatpush1.msra.mxu0 0.0
    %1801 = vmatprep.subr.mxu0 0.0
    %1802 = vmatpush1.msra.mxu0 0.0
    %1803 = vmatprep.subr.mxu0 0.0
    %1804 = vmatpush1.msra.mxu0 0.0
    %1805 = vmatprep.subr.mxu0 0.0
    %1806 = vmatpush1.msra.mxu0 0.0
    %1807 = vmatprep.subr.mxu0 0.0
    %1808 = vmatpush1.msra.mxu0 0.0
    %1809 = vmatprep.subr.mxu0 0.0
    %1810 = vmatpush1.msra.mxu0 0.0
    %1811 = vmatprep.subr.mxu0 0.0
    %1812 = vmatpush1.msra.mxu0 0.0
    %1813 = vmatprep.subr.mxu0 0.0
    %1814 = vmatpush1.msra.mxu0 0.0
    %1815 = vmatprep.subr.mxu0 0.0
    %1816 = vmatpush1.msra.mxu0 0.0
    %1817 = vmatprep.subr.mxu0 0.0
    %1818 = vmatpush1.msra.mxu0 0.0
    %1819 = vmatprep.subr.mxu0 0.0
    %1820 = vmatpush1.msra.mxu0 0.0
    %1821 = vmatprep.subr.mxu0 0.0
    %1822 = vmatpush1.msra.mxu0 0.0
    %1823 = vmatprep.subr.mxu0 0.0
    %1824 = vmatpush1.msra.mxu0 0.0
    %1825 = vmatprep.subr.mxu0 0.0
    %1826 = vmatpush1.msra.mxu0 0.0
    %1827 = vmatprep.subr.mxu0 0.0
    %1828 = vmatpush1.msra.mxu0 0.0
    %1829 = vmatprep.subr.mxu0 0.0
    %1830 = vmatpush1.msra.mxu0 0.0
    %1831 = vmatprep.subr.mxu0 0.0
    %1832 = vmatpush1.msra.mxu0 0.0
    %1833 = vmatprep.subr.mxu0 0.0
    %1834 = vmatpush1.msra.mxu0 0.0
    %1835 = vmatprep.subr.mxu0 0.0
    %1836 = vmatpush1.msra.mxu0 0.0
    %1837 = vmatprep.subr.mxu0 0.0
    %1838 = vmatpush1.msra.mxu0 0.0
    %1839 = vmatprep.subr.mxu0 0.0
    %1840 = vmatpush1.msra.mxu0 0.0
    %1841 = vmatprep.subr.mxu0 0.0
    %1842 = vmatpush1.msra.mxu0 0.0
    %1843 = vmatprep.subr.mxu0 0.0
    %1844 = vmatpush1.msra.mxu0 0.0
    %1845 = vmatprep.mubr.f32.mxu0 0.0
    %1846 = vmatmul.mubr.f32.gmra.mrb[0].mxu0 %v1536
    %v1847 = vpop.f32.mrb[0].mxu0
    %v1848 = vadd.f32 0.0, %v1847
    %v1849 = vpop.f32.mrb[0].mxu0
    %v1850 = vadd.f32 0.0, %v1849
    %1851 = vdwg.mxu0
    %1852 = vmatprep.subr.mxu0 %v1556
    %1853 = vmatpush1.msra.mxu0 %v1554
    %1854 = vmatprep.subr.mxu0 0.0
    %1855 = vmatpush1.msra.mxu0 0.0
    %1856 = vmatprep.subr.mxu0 0.0
    %1857 = vmatpush1.msra.mxu0 0.0
    %1858 = vmatprep.subr.mxu0 0.0
    %1859 = vmatpush1.msra.mxu0 0.0
    %1860 = vmatprep.subr.mxu0 0.0
    %1861 = vmatpush1.msra.mxu0 0.0
    %1862 = vmatprep.subr.mxu0 0.0
    %1863 = vmatpush1.msra.mxu0 0.0
    %1864 = vmatprep.subr.mxu0 0.0
    %1865 = vmatpush1.msra.mxu0 0.0
    %1866 = vmatprep.subr.mxu0 0.0
    %1867 = vmatpush1.msra.mxu0 0.0
    %1868 = vmatprep.subr.mxu0 0.0
    %1869 = vmatpush1.msra.mxu0 0.0
    %1870 = vmatprep.subr.mxu0 0.0
    %1871 = vmatpush1.msra.mxu0 0.0
    %1872 = vmatprep.subr.mxu0 0.0
    %1873 = vmatpush1.msra.mxu0 0.0
    %1874 = vmatprep.subr.mxu0 0.0
    %1875 = vmatpush1.msra.mxu0 0.0
    %1876 = vmatprep.subr.mxu0 0.0
    %1877 = vmatpush1.msra.mxu0 0.0
    %1878 = vmatprep.subr.mxu0 0.0
    %1879 = vmatpush1.msra.mxu0 0.0
    %1880 = vmatprep.subr.mxu0 0.0
    %1881 = vmatpush1.msra.mxu0 0.0
    %1882 = vmatprep.subr.mxu0 0.0
    %1883 = vmatpush1.msra.mxu0 0.0
    %1884 = vmatprep.subr.mxu0 0.0
    %1885 = vmatpush1.msra.mxu0 0.0
    %1886 = vmatprep.subr.mxu0 0.0
    %1887 = vmatpush1.msra.mxu0 0.0
    %1888 = vmatprep.subr.mxu0 0.0
    %1889 = vmatpush1.msra.mxu0 0.0
    %1890 = vmatprep.subr.mxu0 0.0
    %1891 = vmatpush1.msra.mxu0 0.0
    %1892 = vmatprep.subr.mxu0 0.0
    %1893 = vmatpush1.msra.mxu0 0.0
    %1894 = vmatprep.subr.mxu0 0.0
    %1895 = vmatpush1.msra.mxu0 0.0
    %1896 = vmatprep.subr.mxu0 0.0
    %1897 = vmatpush1.msra.mxu0 0.0
    %1898 = vmatprep.subr.mxu0 0.0
    %1899 = vmatpush1.msra.mxu0 0.0
    %1900 = vmatprep.subr.mxu0 0.0
    %1901 = vmatpush1.msra.mxu0 0.0
    %1902 = vmatprep.subr.mxu0 0.0
    %1903 = vmatpush1.msra.mxu0 0.0
    %1904 = vmatprep.subr.mxu0 0.0
    %1905 = vmatpush1.msra.mxu0 0.0
    %1906 = vmatprep.subr.mxu0 0.0
    %1907 = vmatpush1.msra.mxu0 0.0
    %1908 = vmatprep.subr.mxu0 0.0
    %1909 = vmatpush1.msra.mxu0 0.0
    %1910 = vmatprep.subr.mxu0 0.0
    %1911 = vmatpush1.msra.mxu0 0.0
    %1912 = vmatprep.subr.mxu0 0.0
    %1913 = vmatpush1.msra.mxu0 0.0
    %1914 = vmatprep.subr.mxu0 0.0
    %1915 = vmatpush1.msra.mxu0 0.0
    %1916 = vmatprep.mubr.f32.mxu0 0.0
    %1917 = vmatmul.mubr.f32.gmra.mrb[0].mxu0 %v1536
    %v1918 = vpop.f32.mrb[0].mxu0
    %v1919 = vadd.f32 0.0, %v1918
    %v1920 = vpop.f32.mrb[0].mxu0
    %v1921 = vadd.f32 0.0, %v1920
    %1922 = vdwg.mxu0
    %1923 = vmatprep.subr.mxu0 %v1560
    %1924 = vmatpush1.msra.mxu0 %v1558
    %1925 = vmatprep.subr.mxu0 0.0
    %1926 = vmatpush1.msra.mxu0 0.0
    %1927 = vmatprep.subr.mxu0 0.0
    %1928 = vmatpush1.msra.mxu0 0.0
    %1929 = vmatprep.subr.mxu0 0.0
    %1930 = vmatpush1.msra.mxu0 0.0
    %1931 = vmatprep.subr.mxu0 0.0
    %1932 = vmatpush1.msra.mxu0 0.0
    %1933 = vmatprep.subr.mxu0 0.0
    %1934 = vmatpush1.msra.mxu0 0.0
    %1935 = vmatprep.subr.mxu0 0.0
    %1936 = vmatpush1.msra.mxu0 0.0
    %1937 = vmatprep.subr.mxu0 0.0
    %1938 = vmatpush1.msra.mxu0 0.0
    %1939 = vmatprep.subr.mxu0 0.0
    %1940 = vmatpush1.msra.mxu0 0.0
    %1941 = vmatprep.subr.mxu0 0.0
    %1942 = vmatpush1.msra.mxu0 0.0
    %1943 = vmatprep.subr.mxu0 0.0
    %1944 = vmatpush1.msra.mxu0 0.0
    %1945 = vmatprep.subr.mxu0 0.0
    %1946 = vmatpush1.msra.mxu0 0.0
    %1947 = vmatprep.subr.mxu0 0.0
    %1948 = vmatpush1.msra.mxu0 0.0
    %1949 = vmatprep.subr.mxu0 0.0
    %1950 = vmatpush1.msra.mxu0 0.0
    %1951 = vmatprep.subr.mxu0 0.0
    %1952 = vmatpush1.msra.mxu0 0.0
    %1953 = vmatprep.subr.mxu0 0.0
    %1954 = vmatpush1.msra.mxu0 0.0
    %1955 = vmatprep.subr.mxu0 0.0
    %1956 = vmatpush1.msra.mxu0 0.0
    %1957 = vmatprep.subr.mxu0 0.0
    %1958 = vmatpush1.msra.mxu0 0.0
    %1959 = vmatprep.subr.mxu0 0.0
    %1960 = vmatpush1.msra.mxu0 0.0
    %1961 = vmatprep.subr.mxu0 0.0
    %1962 = vmatpush1.msra.mxu0 0.0
    %1963 = vmatprep.subr.mxu0 0.0
    %1964 = vmatpush1.msra.mxu0 0.0
    %1965 = vmatprep.subr.mxu0 0.0
    %1966 = vmatpush1.msra.mxu0 0.0
    %1967 = vmatprep.subr.mxu0 0.0
    %1968 = vmatpush1.msra.mxu0 0.0
    %1969 = vmatprep.subr.mxu0 0.0
    %1970 = vmatpush1.msra.mxu0 0.0
    %1971 = vmatprep.subr.mxu0 0.0
    %1972 = vmatpush1.msra.mxu0 0.0
    %1973 = vmatprep.subr.mxu0 0.0
    %1974 = vmatpush1.msra.mxu0 0.0
    %1975 = vmatprep.subr.mxu0 0.0
    %1976 = vmatpush1.msra.mxu0 0.0
    %1977 = vmatprep.subr.mxu0 0.0
    %1978 = vmatpush1.msra.mxu0 0.0
    %1979 = vmatprep.subr.mxu0 0.0
    %1980 = vmatpush1.msra.mxu0 0.0
    %1981 = vmatprep.subr.mxu0 0.0
    %1982 = vmatpush1.msra.mxu0 0.0
    %1983 = vmatprep.subr.mxu0 0.0
    %1984 = vmatpush1.msra.mxu0 0.0
    %1985 = vmatprep.subr.mxu0 0.0
    %1986 = vmatpush1.msra.mxu0 0.0
    %1987 = vmatprep.mubr.f32.mxu0 0.0
    %1988 = vmatmul.mubr.f32.gmra.mrb[0].mxu0 %v1536
    %v1989 = vpop.f32.mrb[0].mxu0
    %v1990 = vadd.f32 0.0, %v1989
    %v1991 = vpop.f32.mrb[0].mxu0
    %v1992 = vadd.f32 0.0, %v1991
    %1993 = vdwg.mxu0
    %1994 = vmatprep.subr.mxu0 %v1564
    %1995 = vmatpush1.msra.mxu0 %v1562
    %1996 = vmatprep.subr.mxu0 0.0
    %1997 = vmatpush1.msra.mxu0 0.0
    %1998 = vmatprep.subr.mxu0 0.0
    %1999 = vmatpush1.msra.mxu0 0.0
    %2000 = vmatprep.subr.mxu0 0.0
    %2001 = vmatpush1.msra.mxu0 0.0
    %2002 = vmatprep.subr.mxu0 0.0
    %2003 = vmatpush1.msra.mxu0 0.0
    %2004 = vmatprep.subr.mxu0 0.0
    %2005 = vmatpush1.msra.mxu0 0.0
    %2006 = vmatprep.subr.mxu0 0.0
    %2007 = vmatpush1.msra.mxu0 0.0
    %2008 = vmatprep.subr.mxu0 0.0
    %2009 = vmatpush1.msra.mxu0 0.0
    %2010 = vmatprep.subr.mxu0 0.0
    %2011 = vmatpush1.msra.mxu0 0.0
    %2012 = vmatprep.subr.mxu0 0.0
    %2013 = vmatpush1.msra.mxu0 0.0
    %2014 = vmatprep.subr.mxu0 0.0
    %2015 = vmatpush1.msra.mxu0 0.0
    %2016 = vmatprep.subr.mxu0 0.0
    %2017 = vmatpush1.msra.mxu0 0.0
    %2018 = vmatprep.subr.mxu0 0.0
    %2019 = vmatpush1.msra.mxu0 0.0
    %2020 = vmatprep.subr.mxu0 0.0
    %2021 = vmatpush1.msra.mxu0 0.0
    %2022 = vmatprep.subr.mxu0 0.0
    %2023 = vmatpush1.msra.mxu0 0.0
    %2024 = vmatprep.subr.mxu0 0.0
    %2025 = vmatpush1.msra.mxu0 0.0
    %2026 = vmatprep.subr.mxu0 0.0
    %2027 = vmatpush1.msra.mxu0 0.0
    %2028 = vmatprep.subr.mxu0 0.0
    %2029 = vmatpush1.msra.mxu0 0.0
    %2030 = vmatprep.subr.mxu0 0.0
    %2031 = vmatpush1.msra.mxu0 0.0
    %2032 = vmatprep.subr.mxu0 0.0
    %2033 = vmatpush1.msra.mxu0 0.0
    %2034 = vmatprep.subr.mxu0 0.0
    %2035 = vmatpush1.msra.mxu0 0.0
    %2036 = vmatprep.subr.mxu0 0.0
    %2037 = vmatpush1.msra.mxu0 0.0
    %2038 = vmatprep.subr.mxu0 0.0
    %2039 = vmatpush1.msra.mxu0 0.0
    %2040 = vmatprep.subr.mxu0 0.0
    %2041 = vmatpush1.msra.mxu0 0.0
    %2042 = vmatprep.subr.mxu0 0.0
    %2043 = vmatpush1.msra.mxu0 0.0
    %2044 = vmatprep.subr.mxu0 0.0
    %2045 = vmatpush1.msra.mxu0 0.0
    %2046 = vmatprep.subr.mxu0 0.0
    %2047 = vmatpush1.msra.mxu0 0.0
    %2048 = vmatprep.subr.mxu0 0.0
    %2049 = vmatpush1.msra.mxu0 0.0
    %2050 = vmatprep.subr.mxu0 0.0
    %2051 = vmatpush1.msra.mxu0 0.0
    %2052 = vmatprep.subr.mxu0 0.0
    %2053 = vmatpush1.msra.mxu0 0.0
    %2054 = vmatprep.subr.mxu0 0.0
    %2055 = vmatpush1.msra.mxu0 0.0
    %2056 = vmatprep.subr.mxu0 0.0
    %2057 = vmatpush1.msra.mxu0 0.0
    %2058 = vmatprep.mubr.f32.mxu0 0.0
    %2059 = vmatmul.mubr.f32.gmra.mrb[0].mxu0 %v1536
    %v2060 = vpop.f32.mrb[0].mxu0
    %v2061 = vadd.f32 0.0, %v2060
    %v2062 = vpop.f32.mrb[0].mxu0
    %v2063 = vadd.f32 0.0, %v2062
    %2064 = vdwg.mxu0
    %2065 = vmatprep.subr.mxu0 0.0
    %2066 = vmatpush1.msra.mxu0 %v1566
    %2067 = vmatprep.subr.mxu0 0.0
    %2068 = vmatpush1.msra.mxu0 0.0
    %2069 = vmatprep.subr.mxu0 0.0
    %2070 = vmatpush1.msra.mxu0 0.0
    %2071 = vmatprep.subr.mxu0 0.0
    %2072 = vmatpush1.msra.mxu0 0.0
    %2073 = vmatprep.subr.mxu0 0.0
    %2074 = vmatpush1.msra.mxu0 0.0
    %2075 = vmatprep.subr.mxu0 0.0
    %2076 = vmatpush1.msra.mxu0 0.0
    %2077 = vmatprep.subr.mxu0 0.0
    %2078 = vmatpush1.msra.mxu0 0.0
    %2079 = vmatprep.subr.mxu0 0.0
    %2080 = vmatpush1.msra.mxu0 0.0
    %2081 = vmatprep.subr.mxu0 0.0
    %2082 = vmatpush1.msra.mxu0 0.0
    %2083 = vmatprep.subr.mxu0 0.0
    %2084 = vmatpush1.msra.mxu0 0.0
    %2085 = vmatprep.subr.mxu0 0.0
    %2086 = vmatpush1.msra.mxu0 0.0
    %2087 = vmatprep.subr.mxu0 0.0
    %2088 = vmatpush1.msra.mxu0 0.0
    %2089 = vmatprep.subr.mxu0 0.0
    %2090 = vmatpush1.msra.mxu0 0.0
    %2091 = vmatprep.subr.mxu0 0.0
    %2092 = vmatpush1.msra.mxu0 0.0
    %2093 = vmatprep.subr.mxu0 0.0
    %2094 = vmatpush1.msra.mxu0 0.0
    %2095 = vmatprep.subr.mxu0 0.0
    %2096 = vmatpush1.msra.mxu0 0.0
    %2097 = vmatprep.subr.mxu0 0.0
    %2098 = vmatpush1.msra.mxu0 0.0
    %2099 = vmatprep.subr.mxu0 0.0
    %2100 = vmatpush1.msra.mxu0 0.0
    %2101 = vmatprep.subr.mxu0 0.0
    %2102 = vmatpush1.msra.mxu0 0.0
    %2103 = vmatprep.subr.mxu0 0.0
    %2104 = vmatpush1.msra.mxu0 0.0
    %2105 = vmatprep.subr.mxu0 0.0
    %2106 = vmatpush1.msra.mxu0 0.0
    %2107 = vmatprep.subr.mxu0 0.0
    %2108 = vmatpush1.msra.mxu0 0.0
    %2109 = vmatprep.subr.mxu0 0.0
    %2110 = vmatpush1.msra.mxu0 0.0
    %2111 = vmatprep.subr.mxu0 0.0
    %2112 = vmatpush1.msra.mxu0 0.0
    %2113 = vmatprep.subr.mxu0 0.0
    %2114 = vmatpush1.msra.mxu0 0.0
    %2115 = vmatprep.subr.mxu0 0.0
    %2116 = vmatpush1.msra.mxu0 0.0
    %2117 = vmatprep.subr.mxu0 0.0
    %2118 = vmatpush1.msra.mxu0 0.0
    %2119 = vmatprep.subr.mxu0 0.0
    %2120 = vmatpush1.msra.mxu0 0.0
    %2121 = vmatprep.subr.mxu0 0.0
    %2122 = vmatpush1.msra.mxu0 0.0
    %2123 = vmatprep.subr.mxu0 0.0
    %2124 = vmatpush1.msra.mxu0 0.0
    %2125 = vmatprep.subr.mxu0 0.0
    %2126 = vmatpush1.msra.mxu0 0.0
    %2127 = vmatprep.subr.mxu0 0.0
    %2128 = vmatpush1.msra.mxu0 0.0
    %2129 = vmatprep.mubr.f32.mxu0 0.0
    %2130 = vmatmul.mubr.f32.gmra.mrb[0].mxu0 %v1536
    %v2131 = vpop.f32.mrb[0].mxu0
    %v2132 = vadd.f32 0.0, %v2131
    %v2133 = vpop.f32.mrb[0].mxu0
    %2134 = vdwg.mxu0
    %v2135 = vadd.f32 %v1495, %v1635
    %v2136 = vadd.f32 %v1496, %v1637
    %v2137 = vadd.f32 %v1497, %v1706
    %v2138 = vadd.f32 %v1498, %v1708
    %v2139 = vadd.f32 %v1499, %v1777
    %v2140 = vadd.f32 %v1500, %v1779
    %v2141 = vadd.f32 %v1501, %v1848
    %v2142 = vadd.f32 %v1502, %v1850
    %v2143 = vadd.f32 %v1503, %v1919
    %v2144 = vadd.f32 %v1504, %v1921
    %v2145 = vadd.f32 %v1505, %v1990
    %v2146 = vadd.f32 %v1506, %v1992
    %v2147 = vadd.f32 %v1507, %v2061
    %v2148 = vadd.f32 %v1508, %v2063
    %v2149 = vadd.f32 %v1509, %v2132
    %2150 = vst [vmem:[#allocation2] sm:$0xff] %v2135
    %2151 = vst [vmem:[#allocation2 + $0x8] sm:$0xff] %v2136
    %2152 = vst [vmem:[#allocation2 + $0x10] sm:$0xff] %v2137
    %2153 = vst [vmem:[#allocation2 + $0x18] sm:$0xff] %v2138
    %2154 = vst [vmem:[#allocation2 + $0x20] sm:$0xff] %v2139
    %2155 = vst [vmem:[#allocation2 + $0x28] sm:$0xff] %v2140
    %2156 = vst [vmem:[#allocation2 + $0x30] sm:$0xff] %v2141
    %2157 = vst [vmem:[#allocation2 + $0x38] sm:$0xff] %v2142
    %2158 = vst [vmem:[#allocation2 + $0x40] sm:$0xff] %v2143
    %2159 = vst [vmem:[#allocation2 + $0x48] sm:$0xff] %v2144
    %2160 = vst [vmem:[#allocation2 + $0x50] sm:$0xff] %v2145
    %2161 = vst [vmem:[#allocation2 + $0x58] sm:$0xff] %v2146
    %2162 = vst [vmem:[#allocation2 + $0x60] sm:$0xff] %v2147
    %2163 = vst [vmem:[#allocation2 + $0x68] sm:$0xff] %v2148
    %2164 = vst [vmem:[#allocation2 + $0x70] sm:$0xff] %v2149
    %v2165 = vld [vmem:[#allocation2] sm:$0xff]
    %v2166 = vld [vmem:[#allocation2 + $0x8] sm:$0xff]
    %v2167 = vld [vmem:[#allocation2 + $0x10] sm:$0xff]
    %v2168 = vld [vmem:[#allocation2 + $0x18] sm:$0xff]
    %v2169 = vld [vmem:[#allocation2 + $0x20] sm:$0xff]
    %v2170 = vld [vmem:[#allocation2 + $0x28] sm:$0xff]
    %v2171 = vld [vmem:[#allocation2 + $0x30] sm:$0xff]
    %v2172 = vld [vmem:[#allocation2 + $0x38] sm:$0xff]
    %v2173 = vld [vmem:[#allocation2 + $0x40] sm:$0xff]
    %v2174 = vld [vmem:[#allocation2 + $0x48] sm:$0xff]
    %v2175 = vld [vmem:[#allocation2 + $0x50] sm:$0xff]
    %v2176 = vld [vmem:[#allocation2 + $0x58] sm:$0xff]
    %v2177 = vld [vmem:[#allocation2 + $0x60] sm:$0xff]
    %v2178 = vld [vmem:[#allocation2 + $0x68] sm:$0xff]
    %v2179 = vld [vmem:[#allocation2 + $0x70] sm:$0xff]
    %v2180 = vld [vmem:[#allocation2 + $0x78] sm:$0xff]
    %v2181 = vld [vmem:[%s2] sm:$0xff]
    %v2182 = vld [vmem:[%s3] sm:$0xff]
    %v2183 = vadd.f32 %v2165, %v2166
    %v2184 = vadd.f32 %v2183, %v2167
    %v2185 = vadd.f32 %v2184, %v2168
    %v2186 = vadd.f32 %v2185, %v2169
    %v2187 = vadd.f32 %v2186, %v2170
    %v2188 = vadd.f32 %v2187, %v2171
    %v2189 = vadd.f32 %v2188, %v2172
    %v2190 = vadd.f32 %v2189, %v2173
    %v2191 = vadd.f32 %v2190, %v2174
    %v2192 = vadd.f32 %v2191, %v2175
    %v2193 = vadd.f32 %v2192, %v2176
    %v2194 = vadd.f32 %v2193, %v2177
    %v2195 = vadd.f32 %v2194, %v2178
    %v2196 = vadd.f32 %v2195, %v2179
    %v2197 = vadd.f32 %v2196, %v2180
    %2198 = vadd.xlane.f32.xlu0 %v2197
    %v2199 = vpop.xlane.xlu0 %2198
    %v2200 = vmul.f32 %v2199, 0.001953125
    %v2201 = vsub.f32 %v2165, %v2200
    %v2202 = vsub.f32 %v2166, %v2200
    %v2203 = vsub.f32 %v2167, %v2200
    %v2204 = vsub.f32 %v2168, %v2200
    %v2205 = vsub.f32 %v2169, %v2200
    %v2206 = vsub.f32 %v2170, %v2200
    %v2207 = vsub.f32 %v2171, %v2200
    %v2208 = vsub.f32 %v2172, %v2200
    %v2209 = vsub.f32 %v2173, %v2200
    %v2210 = vsub.f32 %v2174, %v2200
    %v2211 = vsub.f32 %v2175, %v2200
    %v2212 = vsub.f32 %v2176, %v2200
    %v2213 = vsub.f32 %v2177, %v2200
    %v2214 = vsub.f32 %v2178, %v2200
    %v2215 = vsub.f32 %v2179, %v2200
    %v2216 = vsub.f32 %v2180, %v2200
    %v2217 = vmul.f32 %v2201, %v2201
    %v2218 = vmul.f32 %v2202, %v2202
    %v2219 = vmul.f32 %v2203, %v2203
    %v2220 = vmul.f32 %v2204, %v2204
    %v2221 = vmul.f32 %v2205, %v2205
    %v2222 = vmul.f32 %v2206, %v2206
    %v2223 = vmul.f32 %v2207, %v2207
    %v2224 = vmul.f32 %v2208, %v2208
    %v2225 = vmul.f32 %v2209, %v2209
    %v2226 = vmul.f32 %v2210, %v2210
    %v2227 = vmul.f32 %v2211, %v2211
    %v2228 = vmul.f32 %v2212, %v2212
    %v2229 = vmul.f32 %v2213, %v2213
    %v2230 = vmul.f32 %v2214, %v2214
    %v2231 = vmul.f32 %v2215, %v2215
    %v2232 = vmul.f32 %v2216, %v2216
    %v2233 = vmul.f32 %v2217, %v163
    %v2234 = vmul.f32 %v2218, %v164
    %v2235 = vmul.f32 %v2219, %v165
    %v2236 = vmul.f32 %v2220, %v166
    %v2237 = vmul.f32 %v2221, %v167
    %v2238 = vmul.f32 %v2222, %v168
    %v2239 = vmul.f32 %v2223, %v169
    %v2240 = vmul.f32 %v2224, %v170
    %v2241 = vmul.f32 %v2225, %v171
    %v2242 = vmul.f32 %v2226, %v172
    %v2243 = vmul.f32 %v2227, %v173
    %v2244 = vmul.f32 %v2228, %v174
    %v2245 = vmul.f32 %v2229, %v175
    %v2246 = vmul.f32 %v2230, %v176
    %v2247 = vmul.f32 %v2231, %v177
    %v2248 = vmul.f32 %v2232, %v178
    %v2249 = vadd.f32 %v2233, %v2234
    %v2250 = vadd.f32 %v2249, %v2235
    %v2251 = vadd.f32 %v2250, %v2236
    %v2252 = vadd.f32 %v2251, %v2237
    %v2253 = vadd.f32 %v2252, %v2238
    %v2254 = vadd.f32 %v2253, %v2239
    %v2255 = vadd.f32 %v2254, %v2240
    %v2256 = vadd.f32 %v2255, %v2241
    %v2257 = vadd.f32 %v2256, %v2242
    %v2258 = vadd.f32 %v2257, %v2243
    %v2259 = vadd.f32 %v2258, %v2244
    %v2260 = vadd.f32 %v2259, %v2245
    %v2261 = vadd.f32 %v2260, %v2246
    %v2262 = vadd.f32 %v2261, %v2247
    %v2263 = vadd.f32 %v2262, %v2248
    %2264 = vadd.xlane.f32.xlu0 %v2263
    %v2265 = vpop.xlane.xlu0 %2264
    %v2266 = vmul.f32 %v2265, 0.001953125
    %v2267 = vadd.f32 %v2266, 1e-05
    %v2268 = vrsqrt.pop %v2267
    %v2269 = vmul.f32 %v2181, %v2268
    %2271 = vset.pattern.permute.xlu0 0
    %2272 = vperm.xlu0 %2271, %v2269
    %v2273 = vpop.permute.xlu0 %2272
    %v2275 = vmul.f32 %v2165, %v2273
    %v2276 = vmul.f32 %v2166, %v2273
    %v2277 = vmul.f32 %v2167, %v2273
    %v2278 = vmul.f32 %v2168, %v2273
    %v2279 = vmul.f32 %v2169, %v2273
    %v2280 = vmul.f32 %v2170, %v2273
    %v2281 = vmul.f32 %v2171, %v2273
    %v2282 = vmul.f32 %v2172, %v2273
    %v2283 = vmul.f32 %v2173, %v2273
    %v2284 = vmul.f32 %v2174, %v2273
    %v2285 = vmul.f32 %v2175, %v2273
    %v2286 = vmul.f32 %v2176, %v2273
    %v2287 = vmul.f32 %v2177, %v2273
    %v2288 = vmul.f32 %v2178, %v2273
    %v2289 = vmul.f32 %v2179, %v2273
    %v2290 = vmul.f32 %v2180, %v2273
    %v2291 = vmul.f32 %v2200, %v2269
    %v2292 = vsub.f32 %v2182, %v2291
    %2294 = vset.pattern.permute.xlu0 0
    %2295 = vperm.xlu0 %2294, %v2292
    %v2296 = vpop.permute.xlu0 %2295
    %v2298 = vadd.f32 %v2275, %v2296
    %v2299 = vadd.f32 %v2276, %v2296
    %v2300 = vadd.f32 %v2277, %v2296
    %v2301 = vadd.f32 %v2278, %v2296
    %v2302 = vadd.f32 %v2279, %v2296
    %v2303 = vadd.f32 %v2280, %v2296
    %v2304 = vadd.f32 %v2281, %v2296
    %v2305 = vadd.f32 %v2282, %v2296
    %v2306 = vadd.f32 %v2283, %v2296
    %v2307 = vadd.f32 %v2284, %v2296
    %v2308 = vadd.f32 %v2285, %v2296
    %v2309 = vadd.f32 %v2286, %v2296
    %v2310 = vadd.f32 %v2287, %v2296
    %v2311 = vadd.f32 %v2288, %v2296
    %v2312 = vadd.f32 %v2289, %v2296
    %v2313 = vadd.f32 %v2290, %v2296
    %vm2314 = vcmp.gt.f32.partialorder %v2298, 0.0
    %vm2315 = vcmp.gt.f32.partialorder %v2299, 0.0
    %vm2316 = vcmp.gt.f32.partialorder %v2300, 0.0
    %vm2317 = vcmp.gt.f32.partialorder %v2301, 0.0
    %vm2318 = vcmp.gt.f32.partialorder %v2302, 0.0
    %vm2319 = vcmp.gt.f32.partialorder %v2303, 0.0
    %vm2320 = vcmp.gt.f32.partialorder %v2304, 0.0
    %vm2321 = vcmp.gt.f32.partialorder %v2305, 0.0
    %vm2322 = vcmp.gt.f32.partialorder %v2306, 0.0
    %vm2323 = vcmp.gt.f32.partialorder %v2307, 0.0
    %vm2324 = vcmp.gt.f32.partialorder %v2308, 0.0
    %vm2325 = vcmp.gt.f32.partialorder %v2309, 0.0
    %vm2326 = vcmp.gt.f32.partialorder %v2310, 0.0
    %vm2327 = vcmp.gt.f32.partialorder %v2311, 0.0
    %vm2328 = vcmp.gt.f32.partialorder %v2312, 0.0
    %vm2329 = vcmp.gt.f32.partialorder %v2313, 0.0
    %v2330 = vmin.f32 %v2298, 0.0
    %v2331 = vmin.f32 %v2299, 0.0
    %v2332 = vmin.f32 %v2300, 0.0
    %v2333 = vmin.f32 %v2301, 0.0
    %v2334 = vmin.f32 %v2302, 0.0
    %v2335 = vmin.f32 %v2303, 0.0
    %v2336 = vmin.f32 %v2304, 0.0
    %v2337 = vmin.f32 %v2305, 0.0
    %v2338 = vmin.f32 %v2306, 0.0
    %v2339 = vmin.f32 %v2307, 0.0
    %v2340 = vmin.f32 %v2308, 0.0
    %v2341 = vmin.f32 %v2309, 0.0
    %v2342 = vmin.f32 %v2310, 0.0
    %v2343 = vmin.f32 %v2311, 0.0
    %v2344 = vmin.f32 %v2312, 0.0
    %v2345 = vmin.f32 %v2313, 0.0
    %v2346 = vmul.f32 %v2330, 1.442695
    %v2347 = vpow.pop %v2346
    %v2348 = vmul.f32 %v2331, 1.442695
    %v2349 = vpow.pop %v2348
    %v2350 = vmul.f32 %v2332, 1.442695
    %v2351 = vpow.pop %v2350
    %v2352 = vmul.f32 %v2333, 1.442695
    %v2353 = vpow.pop %v2352
    %v2354 = vmul.f32 %v2334, 1.442695
    %v2355 = vpow.pop %v2354
    %v2356 = vmul.f32 %v2335, 1.442695
    %v2357 = vpow.pop %v2356
    %v2358 = vmul.f32 %v2336, 1.442695
    %v2359 = vpow.pop %v2358
    %v2360 = vmul.f32 %v2337, 1.442695
    %v2361 = vpow.pop %v2360
    %v2362 = vmul.f32 %v2338, 1.442695
    %v2363 = vpow.pop %v2362
    %v2364 = vmul.f32 %v2339, 1.442695
    %v2365 = vpow.pop %v2364
    %v2366 = vmul.f32 %v2340, 1.442695
    %v2367 = vpow.pop %v2366
    %v2368 = vmul.f32 %v2341, 1.442695
    %v2369 = vpow.pop %v2368
    %v2370 = vmul.f32 %v2342, 1.442695
    %v2371 = vpow.pop %v2370
    %v2372 = vmul.f32 %v2343, 1.442695
    %v2373 = vpow.pop %v2372
    %v2374 = vmul.f32 %v2344, 1.442695
    %v2375 = vpow.pop %v2374
    %v2376 = vmul.f32 %v2345, 1.442695
    %v2377 = vpow.pop %v2376
    %v2378 = vsub.f32 %v2347, 1.0
    %v2379 = vsub.f32 %v2349, 1.0
    %v2380 = vsub.f32 %v2351, 1.0
    %v2381 = vsub.f32 %v2353, 1.0
    %v2382 = vsub.f32 %v2355, 1.0
    %v2383 = vsub.f32 %v2357, 1.0
    %v2384 = vsub.f32 %v2359, 1.0
    %v2385 = vsub.f32 %v2361, 1.0
    %v2386 = vsub.f32 %v2363, 1.0
    %v2387 = vsub.f32 %v2365, 1.0
    %v2388 = vsub.f32 %v2367, 1.0
    %v2389 = vsub.f32 %v2369, 1.0
    %v2390 = vsub.f32 %v2371, 1.0
    %v2391 = vsub.f32 %v2373, 1.0
    %v2392 = vsub.f32 %v2375, 1.0
    %v2393 = vsub.f32 %v2377, 1.0
    %v2394 = vsel %vm2314, %v2298, %v2378
    %v2395 = vsel %vm2315, %v2299, %v2379
    %v2396 = vsel %vm2316, %v2300, %v2380
    %v2397 = vsel %vm2317, %v2301, %v2381
    %v2398 = vsel %vm2318, %v2302, %v2382
    %v2399 = vsel %vm2319, %v2303, %v2383
    %v2400 = vsel %vm2320, %v2304, %v2384
    %v2401 = vsel %vm2321, %v2305, %v2385
    %v2402 = vsel %vm2322, %v2306, %v2386
    %v2403 = vsel %vm2323, %v2307, %v2387
    %v2404 = vsel %vm2324, %v2308, %v2388
    %v2405 = vsel %vm2325, %v2309, %v2389
    %v2406 = vsel %vm2326, %v2310, %v2390
    %v2407 = vsel %vm2327, %v2311, %v2391
    %v2408 = vsel %vm2328, %v2312, %v2392
    %v2409 = vsel %vm2329, %v2313, %v2393
    %v2410 = vmul.f32 %v2394, %v163
    %v2411 = vmul.f32 %v2395, %v164
    %v2412 = vmul.f32 %v2396, %v165
    %v2413 = vmul.f32 %v2397, %v166
    %v2414 = vmul.f32 %v2398, %v167
    %v2415 = vmul.f32 %v2399, %v168
    %v2416 = vmul.f32 %v2400, %v169
    %v2417 = vmul.f32 %v2401, %v170
    %v2418 = vmul.f32 %v2402, %v171
    %v2419 = vmul.f32 %v2403, %v172
    %v2420 = vmul.f32 %v2404, %v173
    %v2421 = vmul.f32 %v2405, %v174
    %v2422 = vmul.f32 %v2406, %v175
    %v2423 = vmul.f32 %v2407, %v176
    %v2424 = vmul.f32 %v2408, %v177
    %v2425 = vmul.f32 %v2409, %v178
    %2426 = vst [vmem:[#allocation2] sm:$0xff] %v2410
    %2427 = vst [vmem:[#allocation2 + $0x8] sm:$0xff] %v2411
    %2428 = vst [vmem:[#allocation2 + $0x10] sm:$0xff] %v2412
    %2429 = vst [vmem:[#allocation2 + $0x18] sm:$0xff] %v2413
    %2430 = vst [vmem:[#allocation2 + $0x20] sm:$0xff] %v2414
    %2431 = vst [vmem:[#allocation2 + $0x28] sm:$0xff] %v2415
    %2432 = vst [vmem:[#allocation2 + $0x30] sm:$0xff] %v2416
    %2433 = vst [vmem:[#allocation2 + $0x38] sm:$0xff] %v2417
    %2434 = vst [vmem:[#allocation2 + $0x40] sm:$0xff] %v2418
    %2435 = vst [vmem:[#allocation2 + $0x48] sm:$0xff] %v2419
    %2436 = vst [vmem:[#allocation2 + $0x50] sm:$0xff] %v2420
    %2437 = vst [vmem:[#allocation2 + $0x58] sm:$0xff] %v2421
    %2438 = vst [vmem:[#allocation2 + $0x60] sm:$0xff] %v2422
    %2439 = vst [vmem:[#allocation2 + $0x68] sm:$0xff] %v2423
    %2440 = vst [vmem:[#allocation2 + $0x70] sm:$0xff] %v2424
    %2441 = vst [vmem:[#allocation2 + $0x78] sm:$0xff] %v2425
    %s2442 = scalar_lea.vmem %s4, 8
    %v2443 = vld [vmem:[%s2442] sm:$0xff]
    %v2444 = vld [vmem:[#allocation2] sm:$0xff]
    %v2445 = vld [vmem:[#allocation2 + $0x8] sm:$0xff]
    %v2446 = vld [vmem:[#allocation2 + $0x10] sm:$0xff]
    %v2447 = vld [vmem:[#allocation2 + $0x18] sm:$0xff]
    %v2448 = vld [vmem:[#allocation2 + $0x20] sm:$0xff]
    %v2449 = vld [vmem:[#allocation2 + $0x28] sm:$0xff]
    %v2450 = vld [vmem:[#allocation2 + $0x30] sm:$0xff]
    %v2451 = vld [vmem:[#allocation2 + $0x38] sm:$0xff]
    %v2452 = vld [vmem:[#allocation2 + $0x40] sm:$0xff]
    %v2453 = vld [vmem:[#allocation2 + $0x48] sm:$0xff]
    %v2454 = vld [vmem:[#allocation2 + $0x50] sm:$0xff]
    %v2455 = vld [vmem:[#allocation2 + $0x58] sm:$0xff]
    %v2456 = vld [vmem:[#allocation2 + $0x60] sm:$0xff]
    %v2457 = vld [vmem:[#allocation2 + $0x68] sm:$0xff]
    %v2458 = vld [vmem:[#allocation2 + $0x70] sm:$0xff]
    %v2459 = vld [vmem:[#allocation2 + $0x78] sm:$0xff]
    %vm2460 = vcmask 64512
    %v2462 = vsel %vm2460, %v2443, 0
    %2464 = vmatprep.subr.mxu0 %v2445
    %2465 = vmatpush1.msra.mxu0 %v2444
    %2466 = vmatprep.subr.mxu0 0.0
    %2467 = vmatpush1.msra.mxu0 0.0
    %2468 = vmatprep.subr.mxu0 0.0
    %2469 = vmatpush1.msra.mxu0 0.0
    %2470 = vmatprep.subr.mxu0 0.0
    %2471 = vmatpush1.msra.mxu0 0.0
    %2472 = vmatprep.subr.mxu0 0.0
    %2473 = vmatpush1.msra.mxu0 0.0
    %2474 = vmatprep.subr.mxu0 0.0
    %2475 = vmatpush1.msra.mxu0 0.0
    %2476 = vmatprep.subr.mxu0 0.0
    %2477 = vmatpush1.msra.mxu0 0.0
    %2478 = vmatprep.subr.mxu0 0.0
    %2479 = vmatpush1.msra.mxu0 0.0
    %2480 = vmatprep.subr.mxu0 0.0
    %2481 = vmatpush1.msra.mxu0 0.0
    %2482 = vmatprep.subr.mxu0 0.0
    %2483 = vmatpush1.msra.mxu0 0.0
    %2484 = vmatprep.subr.mxu0 0.0
    %2485 = vmatpush1.msra.mxu0 0.0
    %2486 = vmatprep.subr.mxu0 0.0
    %2487 = vmatpush1.msra.mxu0 0.0
    %2488 = vmatprep.subr.mxu0 0.0
    %2489 = vmatpush1.msra.mxu0 0.0
    %2490 = vmatprep.subr.mxu0 0.0
    %2491 = vmatpush1.msra.mxu0 0.0
    %2492 = vmatprep.subr.mxu0 0.0
    %2493 = vmatpush1.msra.mxu0 0.0
    %2494 = vmatprep.subr.mxu0 0.0
    %2495 = vmatpush1.msra.mxu0 0.0
    %2496 = vmatprep.subr.mxu0 0.0
    %2497 = vmatpush1.msra.mxu0 0.0
    %2498 = vmatprep.subr.mxu0 0.0
    %2499 = vmatpush1.msra.mxu0 0.0
    %2500 = vmatprep.subr.mxu0 0.0
    %2501 = vmatpush1.msra.mxu0 0.0
    %2502 = vmatprep.subr.mxu0 0.0
    %2503 = vmatpush1.msra.mxu0 0.0
    %2504 = vmatprep.subr.mxu0 0.0
    %2505 = vmatpush1.msra.mxu0 0.0
    %2506 = vmatprep.subr.mxu0 0.0
    %2507 = vmatpush1.msra.mxu0 0.0
    %2508 = vmatprep.subr.mxu0 0.0
    %2509 = vmatpush1.msra.mxu0 0.0
    %2510 = vmatprep.subr.mxu0 0.0
    %2511 = vmatpush1.msra.mxu0 0.0
    %2512 = vmatprep.subr.mxu0 0.0
    %2513 = vmatpush1.msra.mxu0 0.0
    %2514 = vmatprep.subr.mxu0 0.0
    %2515 = vmatpush1.msra.mxu0 0.0
    %2516 = vmatprep.subr.mxu0 0.0
    %2517 = vmatpush1.msra.mxu0 0.0
    %2518 = vmatprep.subr.mxu0 0.0
    %2519 = vmatpush1.msra.mxu0 0.0
    %2520 = vmatprep.subr.mxu0 0.0
    %2521 = vmatpush1.msra.mxu0 0.0
    %2522 = vmatprep.subr.mxu0 0.0
    %2523 = vmatpush1.msra.mxu0 0.0
    %2524 = vmatprep.subr.mxu0 0.0
    %2525 = vmatpush1.msra.mxu0 0.0
    %2526 = vmatprep.subr.mxu0 0.0
    %2527 = vmatpush1.msra.mxu0 0.0
    %2528 = vmatprep.mubr.f32.mxu0 0.0
    %2529 = vmatmul.mubr.f32.gmra.mrb[0].mxu0 %v2462
    %v2530 = vpop.f32.mrb[0].mxu0
    %v2531 = vadd.f32 0.0, %v2530
    %v2532 = vpop.f32.mrb[0].mxu0
    %v2533 = vadd.f32 0.0, %v2532
    %2534 = vdwg.mxu0
    %2535 = vmatprep.subr.mxu0 %v2447
    %2536 = vmatpush1.msra.mxu0 %v2446
    %2537 = vmatprep.subr.mxu0 0.0
    %2538 = vmatpush1.msra.mxu0 0.0
    %2539 = vmatprep.subr.mxu0 0.0
    %2540 = vmatpush1.msra.mxu0 0.0
    %2541 = vmatprep.subr.mxu0 0.0
    %2542 = vmatpush1.msra.mxu0 0.0
    %2543 = vmatprep.subr.mxu0 0.0
    %2544 = vmatpush1.msra.mxu0 0.0
    %2545 = vmatprep.subr.mxu0 0.0
    %2546 = vmatpush1.msra.mxu0 0.0
    %2547 = vmatprep.subr.mxu0 0.0
    %2548 = vmatpush1.msra.mxu0 0.0
    %2549 = vmatprep.subr.mxu0 0.0
    %2550 = vmatpush1.msra.mxu0 0.0
    %2551 = vmatprep.subr.mxu0 0.0
    %2552 = vmatpush1.msra.mxu0 0.0
    %2553 = vmatprep.subr.mxu0 0.0
    %2554 = vmatpush1.msra.mxu0 0.0
    %2555 = vmatprep.subr.mxu0 0.0
    %2556 = vmatpush1.msra.mxu0 0.0
    %2557 = vmatprep.subr.mxu0 0.0
    %2558 = vmatpush1.msra.mxu0 0.0
    %2559 = vmatprep.subr.mxu0 0.0
    %2560 = vmatpush1.msra.mxu0 0.0
    %2561 = vmatprep.subr.mxu0 0.0
    %2562 = vmatpush1.msra.mxu0 0.0
    %2563 = vmatprep.subr.mxu0 0.0
    %2564 = vmatpush1.msra.mxu0 0.0
    %2565 = vmatprep.subr.mxu0 0.0
    %2566 = vmatpush1.msra.mxu0 0.0
    %2567 = vmatprep.subr.mxu0 0.0
    %2568 = vmatpush1.msra.mxu0 0.0
    %2569 = vmatprep.subr.mxu0 0.0
    %2570 = vmatpush1.msra.mxu0 0.0
    %2571 = vmatprep.subr.mxu0 0.0
    %2572 = vmatpush1.msra.mxu0 0.0
    %2573 = vmatprep.subr.mxu0 0.0
    %2574 = vmatpush1.msra.mxu0 0.0
    %2575 = vmatprep.subr.mxu0 0.0
    %2576 = vmatpush1.msra.mxu0 0.0
    %2577 = vmatprep.subr.mxu0 0.0
    %2578 = vmatpush1.msra.mxu0 0.0
    %2579 = vmatprep.subr.mxu0 0.0
    %2580 = vmatpush1.msra.mxu0 0.0
    %2581 = vmatprep.subr.mxu0 0.0
    %2582 = vmatpush1.msra.mxu0 0.0
    %2583 = vmatprep.subr.mxu0 0.0
    %2584 = vmatpush1.msra.mxu0 0.0
    %2585 = vmatprep.subr.mxu0 0.0
    %2586 = vmatpush1.msra.mxu0 0.0
    %2587 = vmatprep.subr.mxu0 0.0
    %2588 = vmatpush1.msra.mxu0 0.0
    %2589 = vmatprep.subr.mxu0 0.0
    %2590 = vmatpush1.msra.mxu0 0.0
    %2591 = vmatprep.subr.mxu0 0.0
    %2592 = vmatpush1.msra.mxu0 0.0
    %2593 = vmatprep.subr.mxu0 0.0
    %2594 = vmatpush1.msra.mxu0 0.0
    %2595 = vmatprep.subr.mxu0 0.0
    %2596 = vmatpush1.msra.mxu0 0.0
    %2597 = vmatprep.subr.mxu0 0.0
    %2598 = vmatpush1.msra.mxu0 0.0
    %2599 = vmatprep.mubr.f32.mxu0 0.0
    %2600 = vmatmul.mubr.f32.gmra.mrb[0].mxu0 %v2462
    %v2601 = vpop.f32.mrb[0].mxu0
    %v2602 = vadd.f32 0.0, %v2601
    %v2603 = vpop.f32.mrb[0].mxu0
    %v2604 = vadd.f32 0.0, %v2603
    %2605 = vdwg.mxu0
    %2606 = vmatprep.subr.mxu0 %v2449
    %2607 = vmatpush1.msra.mxu0 %v2448
    %2608 = vmatprep.subr.mxu0 0.0
    %2609 = vmatpush1.msra.mxu0 0.0
    %2610 = vmatprep.subr.mxu0 0.0
    %2611 = vmatpush1.msra.mxu0 0.0
    %2612 = vmatprep.subr.mxu0 0.0
    %2613 = vmatpush1.msra.mxu0 0.0
    %2614 = vmatprep.subr.mxu0 0.0
    %2615 = vmatpush1.msra.mxu0 0.0
    %2616 = vmatprep.subr.mxu0 0.0
    %2617 = vmatpush1.msra.mxu0 0.0
    %2618 = vmatprep.subr.mxu0 0.0
    %2619 = vmatpush1.msra.mxu0 0.0
    %2620 = vmatprep.subr.mxu0 0.0
    %2621 = vmatpush1.msra.mxu0 0.0
    %2622 = vmatprep.subr.mxu0 0.0
    %2623 = vmatpush1.msra.mxu0 0.0
    %2624 = vmatprep.subr.mxu0 0.0
    %2625 = vmatpush1.msra.mxu0 0.0
    %2626 = vmatprep.subr.mxu0 0.0
    %2627 = vmatpush1.msra.mxu0 0.0
    %2628 = vmatprep.subr.mxu0 0.0
    %2629 = vmatpush1.msra.mxu0 0.0
    %2630 = vmatprep.subr.mxu0 0.0
    %2631 = vmatpush1.msra.mxu0 0.0
    %2632 = vmatprep.subr.mxu0 0.0
    %2633 = vmatpush1.msra.mxu0 0.0
    %2634 = vmatprep.subr.mxu0 0.0
    %2635 = vmatpush1.msra.mxu0 0.0
    %2636 = vmatprep.subr.mxu0 0.0
    %2637 = vmatpush1.msra.mxu0 0.0
    %2638 = vmatprep.subr.mxu0 0.0
    %2639 = vmatpush1.msra.mxu0 0.0
    %2640 = vmatprep.subr.mxu0 0.0
    %2641 = vmatpush1.msra.mxu0 0.0
    %2642 = vmatprep.subr.mxu0 0.0
    %2643 = vmatpush1.msra.mxu0 0.0
    %2644 = vmatprep.subr.mxu0 0.0
    %2645 = vmatpush1.msra.mxu0 0.0
    %2646 = vmatprep.subr.mxu0 0.0
    %2647 = vmatpush1.msra.mxu0 0.0
    %2648 = vmatprep.subr.mxu0 0.0
    %2649 = vmatpush1.msra.mxu0 0.0
    %2650 = vmatprep.subr.mxu0 0.0
    %2651 = vmatpush1.msra.mxu0 0.0
    %2652 = vmatprep.subr.mxu0 0.0
    %2653 = vmatpush1.msra.mxu0 0.0
    %2654 = vmatprep.subr.mxu0 0.0
    %2655 = vmatpush1.msra.mxu0 0.0
    %2656 = vmatprep.subr.mxu0 0.0
    %2657 = vmatpush1.msra.mxu0 0.0
    %2658 = vmatprep.subr.mxu0 0.0
    %2659 = vmatpush1.msra.mxu0 0.0
    %2660 = vmatprep.subr.mxu0 0.0
    %2661 = vmatpush1.msra.mxu0 0.0
    %2662 = vmatprep.subr.mxu0 0.0
    %2663 = vmatpush1.msra.mxu0 0.0
    %2664 = vmatprep.subr.mxu0 0.0
    %2665 = vmatpush1.msra.mxu0 0.0
    %2666 = vmatprep.subr.mxu0 0.0
    %2667 = vmatpush1.msra.mxu0 0.0
    %2668 = vmatprep.subr.mxu0 0.0
    %2669 = vmatpush1.msra.mxu0 0.0
    %2670 = vmatprep.mubr.f32.mxu0 0.0
    %2671 = vmatmul.mubr.f32.gmra.mrb[0].mxu0 %v2462
    %v2672 = vpop.f32.mrb[0].mxu0
    %v2673 = vadd.f32 0.0, %v2672
    %v2674 = vpop.f32.mrb[0].mxu0
    %v2675 = vadd.f32 0.0, %v2674
    %2676 = vdwg.mxu0
    %2677 = vmatprep.subr.mxu0 %v2451
    %2678 = vmatpush1.msra.mxu0 %v2450
    %2679 = vmatprep.subr.mxu0 0.0
    %2680 = vmatpush1.msra.mxu0 0.0
    %2681 = vmatprep.subr.mxu0 0.0
    %2682 = vmatpush1.msra.mxu0 0.0
    %2683 = vmatprep.subr.mxu0 0.0
    %2684 = vmatpush1.msra.mxu0 0.0
    %2685 = vmatprep.subr.mxu0 0.0
    %2686 = vmatpush1.msra.mxu0 0.0
    %2687 = vmatprep.subr.mxu0 0.0
    %2688 = vmatpush1.msra.mxu0 0.0
    %2689 = vmatprep.subr.mxu0 0.0
    %2690 = vmatpush1.msra.mxu0 0.0
    %2691 = vmatprep.subr.mxu0 0.0
    %2692 = vmatpush1.msra.mxu0 0.0
    %2693 = vmatprep.subr.mxu0 0.0
    %2694 = vmatpush1.msra.mxu0 0.0
    %2695 = vmatprep.subr.mxu0 0.0
    %2696 = vmatpush1.msra.mxu0 0.0
    %2697 = vmatprep.subr.mxu0 0.0
    %2698 = vmatpush1.msra.mxu0 0.0
    %2699 = vmatprep.subr.mxu0 0.0
    %2700 = vmatpush1.msra.mxu0 0.0
    %2701 = vmatprep.subr.mxu0 0.0
    %2702 = vmatpush1.msra.mxu0 0.0
    %2703 = vmatprep.subr.mxu0 0.0
    %2704 = vmatpush1.msra.mxu0 0.0
    %2705 = vmatprep.subr.mxu0 0.0
    %2706 = vmatpush1.msra.mxu0 0.0
    %2707 = vmatprep.subr.mxu0 0.0
    %2708 = vmatpush1.msra.mxu0 0.0
    %2709 = vmatprep.subr.mxu0 0.0
    %2710 = vmatpush1.msra.mxu0 0.0
    %2711 = vmatprep.subr.mxu0 0.0
    %2712 = vmatpush1.msra.mxu0 0.0
    %2713 = vmatprep.subr.mxu0 0.0
    %2714 = vmatpush1.msra.mxu0 0.0
    %2715 = vmatprep.subr.mxu0 0.0
    %2716 = vmatpush1.msra.mxu0 0.0
    %2717 = vmatprep.subr.mxu0 0.0
    %2718 = vmatpush1.msra.mxu0 0.0
    %2719 = vmatprep.subr.mxu0 0.0
    %2720 = vmatpush1.msra.mxu0 0.0
    %2721 = vmatprep.subr.mxu0 0.0
    %2722 = vmatpush1.msra.mxu0 0.0
    %2723 = vmatprep.subr.mxu0 0.0
    %2724 = vmatpush1.msra.mxu0 0.0
    %2725 = vmatprep.subr.mxu0 0.0
    %2726 = vmatpush1.msra.mxu0 0.0
    %2727 = vmatprep.subr.mxu0 0.0
    %2728 = vmatpush1.msra.mxu0 0.0
    %2729 = vmatprep.subr.mxu0 0.0
    %2730 = vmatpush1.msra.mxu0 0.0
    %2731 = vmatprep.subr.mxu0 0.0
    %2732 = vmatpush1.msra.mxu0 0.0
    %2733 = vmatprep.subr.mxu0 0.0
    %2734 = vmatpush1.msra.mxu0 0.0
    %2735 = vmatprep.subr.mxu0 0.0
    %2736 = vmatpush1.msra.mxu0 0.0
    %2737 = vmatprep.subr.mxu0 0.0
    %2738 = vmatpush1.msra.mxu0 0.0
    %2739 = vmatprep.subr.mxu0 0.0
    %2740 = vmatpush1.msra.mxu0 0.0
    %2741 = vmatprep.mubr.f32.mxu0 0.0
    %2742 = vmatmul.mubr.f32.gmra.mrb[0].mxu0 %v2462
    %v2743 = vpop.f32.mrb[0].mxu0
    %v2744 = vadd.f32 0.0, %v2743
    %v2745 = vpop.f32.mrb[0].mxu0
    %v2746 = vadd.f32 0.0, %v2745
    %2747 = vdwg.mxu0
    %2748 = vmatprep.subr.mxu0 %v2453
    %2749 = vmatpush1.msra.mxu0 %v2452
    %2750 = vmatprep.subr.mxu0 0.0
    %2751 = vmatpush1.msra.mxu0 0.0
    %2752 = vmatprep.subr.mxu0 0.0
    %2753 = vmatpush1.msra.mxu0 0.0
    %2754 = vmatprep.subr.mxu0 0.0
    %2755 = vmatpush1.msra.mxu0 0.0
    %2756 = vmatprep.subr.mxu0 0.0
    %2757 = vmatpush1.msra.mxu0 0.0
    %2758 = vmatprep.subr.mxu0 0.0
    %2759 = vmatpush1.msra.mxu0 0.0
    %2760 = vmatprep.subr.mxu0 0.0
    %2761 = vmatpush1.msra.mxu0 0.0
    %2762 = vmatprep.subr.mxu0 0.0
    %2763 = vmatpush1.msra.mxu0 0.0
    %2764 = vmatprep.subr.mxu0 0.0
    %2765 = vmatpush1.msra.mxu0 0.0
    %2766 = vmatprep.subr.mxu0 0.0
    %2767 = vmatpush1.msra.mxu0 0.0
    %2768 = vmatprep.subr.mxu0 0.0
    %2769 = vmatpush1.msra.mxu0 0.0
    %2770 = vmatprep.subr.mxu0 0.0
    %2771 = vmatpush1.msra.mxu0 0.0
    %2772 = vmatprep.subr.mxu0 0.0
    %2773 = vmatpush1.msra.mxu0 0.0
    %2774 = vmatprep.subr.mxu0 0.0
    %2775 = vmatpush1.msra.mxu0 0.0
    %2776 = vmatprep.subr.mxu0 0.0
    %2777 = vmatpush1.msra.mxu0 0.0
    %2778 = vmatprep.subr.mxu0 0.0
    %2779 = vmatpush1.msra.mxu0 0.0
    %2780 = vmatprep.subr.mxu0 0.0
    %2781 = vmatpush1.msra.mxu0 0.0
    %2782 = vmatprep.subr.mxu0 0.0
    %2783 = vmatpush1.msra.mxu0 0.0
    %2784 = vmatprep.subr.mxu0 0.0
    %2785 = vmatpush1.msra.mxu0 0.0
    %2786 = vmatprep.subr.mxu0 0.0
    %2787 = vmatpush1.msra.mxu0 0.0
    %2788 = vmatprep.subr.mxu0 0.0
    %2789 = vmatpush1.msra.mxu0 0.0
    %2790 = vmatprep.subr.mxu0 0.0
    %2791 = vmatpush1.msra.mxu0 0.0
    %2792 = vmatprep.subr.mxu0 0.0
    %2793 = vmatpush1.msra.mxu0 0.0
    %2794 = vmatprep.subr.mxu0 0.0
    %2795 = vmatpush1.msra.mxu0 0.0
    %2796 = vmatprep.subr.mxu0 0.0
    %2797 = vmatpush1.msra.mxu0 0.0
    %2798 = vmatprep.subr.mxu0 0.0
    %2799 = vmatpush1.msra.mxu0 0.0
    %2800 = vmatprep.subr.mxu0 0.0
    %2801 = vmatpush1.msra.mxu0 0.0
    %2802 = vmatprep.subr.mxu0 0.0
    %2803 = vmatpush1.msra.mxu0 0.0
    %2804 = vmatprep.subr.mxu0 0.0
    %2805 = vmatpush1.msra.mxu0 0.0
    %2806 = vmatprep.subr.mxu0 0.0
    %2807 = vmatpush1.msra.mxu0 0.0
    %2808 = vmatprep.subr.mxu0 0.0
    %2809 = vmatpush1.msra.mxu0 0.0
    %2810 = vmatprep.subr.mxu0 0.0
    %2811 = vmatpush1.msra.mxu0 0.0
    %2812 = vmatprep.mubr.f32.mxu0 0.0
    %2813 = vmatmul.mubr.f32.gmra.mrb[0].mxu0 %v2462
    %v2814 = vpop.f32.mrb[0].mxu0
    %v2815 = vadd.f32 0.0, %v2814
    %v2816 = vpop.f32.mrb[0].mxu0
    %v2817 = vadd.f32 0.0, %v2816
    %2818 = vdwg.mxu0
    %2819 = vmatprep.subr.mxu0 %v2455
    %2820 = vmatpush1.msra.mxu0 %v2454
    %2821 = vmatprep.subr.mxu0 0.0
    %2822 = vmatpush1.msra.mxu0 0.0
    %2823 = vmatprep.subr.mxu0 0.0
    %2824 = vmatpush1.msra.mxu0 0.0
    %2825 = vmatprep.subr.mxu0 0.0
    %2826 = vmatpush1.msra.mxu0 0.0
    %2827 = vmatprep.subr.mxu0 0.0
    %2828 = vmatpush1.msra.mxu0 0.0
    %2829 = vmatprep.subr.mxu0 0.0
    %2830 = vmatpush1.msra.mxu0 0.0
    %2831 = vmatprep.subr.mxu0 0.0
    %2832 = vmatpush1.msra.mxu0 0.0
    %2833 = vmatprep.subr.mxu0 0.0
    %2834 = vmatpush1.msra.mxu0 0.0
    %2835 = vmatprep.subr.mxu0 0.0
    %2836 = vmatpush1.msra.mxu0 0.0
    %2837 = vmatprep.subr.mxu0 0.0
    %2838 = vmatpush1.msra.mxu0 0.0
    %2839 = vmatprep.subr.mxu0 0.0
    %2840 = vmatpush1.msra.mxu0 0.0
    %2841 = vmatprep.subr.mxu0 0.0
    %2842 = vmatpush1.msra.mxu0 0.0
    %2843 = vmatprep.subr.mxu0 0.0
    %2844 = vmatpush1.msra.mxu0 0.0
    %2845 = vmatprep.subr.mxu0 0.0
    %2846 = vmatpush1.msra.mxu0 0.0
    %2847 = vmatprep.subr.mxu0 0.0
    %2848 = vmatpush1.msra.mxu0 0.0
    %2849 = vmatprep.subr.mxu0 0.0
    %2850 = vmatpush1.msra.mxu0 0.0
    %2851 = vmatprep.subr.mxu0 0.0
    %2852 = vmatpush1.msra.mxu0 0.0
    %2853 = vmatprep.subr.mxu0 0.0
    %2854 = vmatpush1.msra.mxu0 0.0
    %2855 = vmatprep.subr.mxu0 0.0
    %2856 = vmatpush1.msra.mxu0 0.0
    %2857 = vmatprep.subr.mxu0 0.0
    %2858 = vmatpush1.msra.mxu0 0.0
    %2859 = vmatprep.subr.mxu0 0.0
    %2860 = vmatpush1.msra.mxu0 0.0
    %2861 = vmatprep.subr.mxu0 0.0
    %2862 = vmatpush1.msra.mxu0 0.0
    %2863 = vmatprep.subr.mxu0 0.0
    %2864 = vmatpush1.msra.mxu0 0.0
    %2865 = vmatprep.subr.mxu0 0.0
    %2866 = vmatpush1.msra.mxu0 0.0
    %2867 = vmatprep.subr.mxu0 0.0
    %2868 = vmatpush1.msra.mxu0 0.0
    %2869 = vmatprep.subr.mxu0 0.0
    %2870 = vmatpush1.msra.mxu0 0.0
    %2871 = vmatprep.subr.mxu0 0.0
    %2872 = vmatpush1.msra.mxu0 0.0
    %2873 = vmatprep.subr.mxu0 0.0
    %2874 = vmatpush1.msra.mxu0 0.0
    %2875 = vmatprep.subr.mxu0 0.0
    %2876 = vmatpush1.msra.mxu0 0.0
    %2877 = vmatprep.subr.mxu0 0.0
    %2878 = vmatpush1.msra.mxu0 0.0
    %2879 = vmatprep.subr.mxu0 0.0
    %2880 = vmatpush1.msra.mxu0 0.0
    %2881 = vmatprep.subr.mxu0 0.0
    %2882 = vmatpush1.msra.mxu0 0.0
    %2883 = vmatprep.mubr.f32.mxu0 0.0
    %2884 = vmatmul.mubr.f32.gmra.mrb[0].mxu0 %v2462
    %v2885 = vpop.f32.mrb[0].mxu0
    %v2886 = vadd.f32 0.0, %v2885
    %v2887 = vpop.f32.mrb[0].mxu0
    %v2888 = vadd.f32 0.0, %v2887
    %2889 = vdwg.mxu0
    %2890 = vmatprep.subr.mxu0 %v2457
    %2891 = vmatpush1.msra.mxu0 %v2456
    %2892 = vmatprep.subr.mxu0 0.0
    %2893 = vmatpush1.msra.mxu0 0.0
    %2894 = vmatprep.subr.mxu0 0.0
    %2895 = vmatpush1.msra.mxu0 0.0
    %2896 = vmatprep.subr.mxu0 0.0
    %2897 = vmatpush1.msra.mxu0 0.0
    %2898 = vmatprep.subr.mxu0 0.0
    %2899 = vmatpush1.msra.mxu0 0.0
    %2900 = vmatprep.subr.mxu0 0.0
    %2901 = vmatpush1.msra.mxu0 0.0
    %2902 = vmatprep.subr.mxu0 0.0
    %2903 = vmatpush1.msra.mxu0 0.0
    %2904 = vmatprep.subr.mxu0 0.0
    %2905 = vmatpush1.msra.mxu0 0.0
    %2906 = vmatprep.subr.mxu0 0.0
    %2907 = vmatpush1.msra.mxu0 0.0
    %2908 = vmatprep.subr.mxu0 0.0
    %2909 = vmatpush1.msra.mxu0 0.0
    %2910 = vmatprep.subr.mxu0 0.0
    %2911 = vmatpush1.msra.mxu0 0.0
    %2912 = vmatprep.subr.mxu0 0.0
    %2913 = vmatpush1.msra.mxu0 0.0
    %2914 = vmatprep.subr.mxu0 0.0
    %2915 = vmatpush1.msra.mxu0 0.0
    %2916 = vmatprep.subr.mxu0 0.0
    %2917 = vmatpush1.msra.mxu0 0.0
    %2918 = vmatprep.subr.mxu0 0.0
    %2919 = vmatpush1.msra.mxu0 0.0
    %2920 = vmatprep.subr.mxu0 0.0
    %2921 = vmatpush1.msra.mxu0 0.0
    %2922 = vmatprep.subr.mxu0 0.0
    %2923 = vmatpush1.msra.mxu0 0.0
    %2924 = vmatprep.subr.mxu0 0.0
    %2925 = vmatpush1.msra.mxu0 0.0
    %2926 = vmatprep.subr.mxu0 0.0
    %2927 = vmatpush1.msra.mxu0 0.0
    %2928 = vmatprep.subr.mxu0 0.0
    %2929 = vmatpush1.msra.mxu0 0.0
    %2930 = vmatprep.subr.mxu0 0.0
    %2931 = vmatpush1.msra.mxu0 0.0
    %2932 = vmatprep.subr.mxu0 0.0
    %2933 = vmatpush1.msra.mxu0 0.0
    %2934 = vmatprep.subr.mxu0 0.0
    %2935 = vmatpush1.msra.mxu0 0.0
    %2936 = vmatprep.subr.mxu0 0.0
    %2937 = vmatpush1.msra.mxu0 0.0
    %2938 = vmatprep.subr.mxu0 0.0
    %2939 = vmatpush1.msra.mxu0 0.0
    %2940 = vmatprep.subr.mxu0 0.0
    %2941 = vmatpush1.msra.mxu0 0.0
    %2942 = vmatprep.subr.mxu0 0.0
    %2943 = vmatpush1.msra.mxu0 0.0
    %2944 = vmatprep.subr.mxu0 0.0
    %2945 = vmatpush1.msra.mxu0 0.0
    %2946 = vmatprep.subr.mxu0 0.0
    %2947 = vmatpush1.msra.mxu0 0.0
    %2948 = vmatprep.subr.mxu0 0.0
    %2949 = vmatpush1.msra.mxu0 0.0
    %2950 = vmatprep.subr.mxu0 0.0
    %2951 = vmatpush1.msra.mxu0 0.0
    %2952 = vmatprep.subr.mxu0 0.0
    %2953 = vmatpush1.msra.mxu0 0.0
    %2954 = vmatprep.mubr.f32.mxu0 0.0
    %2955 = vmatmul.mubr.f32.gmra.mrb[0].mxu0 %v2462
    %v2956 = vpop.f32.mrb[0].mxu0
    %v2957 = vadd.f32 0.0, %v2956
    %v2958 = vpop.f32.mrb[0].mxu0
    %v2959 = vadd.f32 0.0, %v2958
    %2960 = vdwg.mxu0
    %2961 = vmatprep.subr.mxu0 %v2459
    %2962 = vmatpush1.msra.mxu0 %v2458
    %2963 = vmatprep.subr.mxu0 0.0
    %2964 = vmatpush1.msra.mxu0 0.0
    %2965 = vmatprep.subr.mxu0 0.0
    %2966 = vmatpush1.msra.mxu0 0.0
    %2967 = vmatprep.subr.mxu0 0.0
    %2968 = vmatpush1.msra.mxu0 0.0
    %2969 = vmatprep.subr.mxu0 0.0
    %2970 = vmatpush1.msra.mxu0 0.0
    %2971 = vmatprep.subr.mxu0 0.0
    %2972 = vmatpush1.msra.mxu0 0.0
    %2973 = vmatprep.subr.mxu0 0.0
    %2974 = vmatpush1.msra.mxu0 0.0
    %2975 = vmatprep.subr.mxu0 0.0
    %2976 = vmatpush1.msra.mxu0 0.0
    %2977 = vmatprep.subr.mxu0 0.0
    %2978 = vmatpush1.msra.mxu0 0.0
    %2979 = vmatprep.subr.mxu0 0.0
    %2980 = vmatpush1.msra.mxu0 0.0
    %2981 = vmatprep.subr.mxu0 0.0
    %2982 = vmatpush1.msra.mxu0 0.0
    %2983 = vmatprep.subr.mxu0 0.0
    %2984 = vmatpush1.msra.mxu0 0.0
    %2985 = vmatprep.subr.mxu0 0.0
    %2986 = vmatpush1.msra.mxu0 0.0
    %2987 = vmatprep.subr.mxu0 0.0
    %2988 = vmatpush1.msra.mxu0 0.0
    %2989 = vmatprep.subr.mxu0 0.0
    %2990 = vmatpush1.msra.mxu0 0.0
    %2991 = vmatprep.subr.mxu0 0.0
    %2992 = vmatpush1.msra.mxu0 0.0
    %2993 = vmatprep.subr.mxu0 0.0
    %2994 = vmatpush1.msra.mxu0 0.0
    %2995 = vmatprep.subr.mxu0 0.0
    %2996 = vmatpush1.msra.mxu0 0.0
    %2997 = vmatprep.subr.mxu0 0.0
    %2998 = vmatpush1.msra.mxu0 0.0
    %2999 = vmatprep.subr.mxu0 0.0
    %3000 = vmatpush1.msra.mxu0 0.0
    %3001 = vmatprep.subr.mxu0 0.0
    %3002 = vmatpush1.msra.mxu0 0.0
    %3003 = vmatprep.subr.mxu0 0.0
    %3004 = vmatpush1.msra.mxu0 0.0
    %3005 = vmatprep.subr.mxu0 0.0
    %3006 = vmatpush1.msra.mxu0 0.0
    %3007 = vmatprep.subr.mxu0 0.0
    %3008 = vmatpush1.msra.mxu0 0.0
    %3009 = vmatprep.subr.mxu0 0.0
    %3010 = vmatpush1.msra.mxu0 0.0
    %3011 = vmatprep.subr.mxu0 0.0
    %3012 = vmatpush1.msra.mxu0 0.0
    %3013 = vmatprep.subr.mxu0 0.0
    %3014 = vmatpush1.msra.mxu0 0.0
    %3015 = vmatprep.subr.mxu0 0.0
    %3016 = vmatpush1.msra.mxu0 0.0
    %3017 = vmatprep.subr.mxu0 0.0
    %3018 = vmatpush1.msra.mxu0 0.0
    %3019 = vmatprep.subr.mxu0 0.0
    %3020 = vmatpush1.msra.mxu0 0.0
    %3021 = vmatprep.subr.mxu0 0.0
    %3022 = vmatpush1.msra.mxu0 0.0
    %3023 = vmatprep.subr.mxu0 0.0
    %3024 = vmatpush1.msra.mxu0 0.0
    %3025 = vmatprep.mubr.f32.mxu0 0.0
    %3026 = vmatmul.mubr.f32.gmra.mrb[0].mxu0 %v2462
    %v3027 = vpop.f32.mrb[0].mxu0
    %v3028 = vadd.f32 0.0, %v3027
    %v3029 = vpop.f32.mrb[0].mxu0
    %v3030 = vadd.f32 0.0, %v3029
    %3031 = vdwg.mxu0
    %3032 = vst [vmem:[#allocation3] sm:$0xff] %v2531
    %3033 = vst [vmem:[#allocation3 + $0x8] sm:$0xff] %v2533
    %3034 = vst [vmem:[#allocation3 + $0x10] sm:$0xff] %v2602
    %3035 = vst [vmem:[#allocation3 + $0x18] sm:$0xff] %v2604
    %3036 = vst [vmem:[#allocation3 + $0x20] sm:$0xff] %v2673
    %3037 = vst [vmem:[#allocation3 + $0x28] sm:$0xff] %v2675
    %3038 = vst [vmem:[#allocation3 + $0x30] sm:$0xff] %v2744
    %3039 = vst [vmem:[#allocation3 + $0x38] sm:$0xff] %v2746
    %3040 = vst [vmem:[#allocation3 + $0x40] sm:$0xff] %v2815
    %3041 = vst [vmem:[#allocation3 + $0x48] sm:$0xff] %v2817
    %3042 = vst [vmem:[#allocation3 + $0x50] sm:$0xff] %v2886
    %3043 = vst [vmem:[#allocation3 + $0x58] sm:$0xff] %v2888
    %3044 = vst [vmem:[#allocation3 + $0x60] sm:$0xff] %v2957
    %3045 = vst [vmem:[#allocation3 + $0x68] sm:$0xff] %v2959
    %3046 = vst [vmem:[#allocation3 + $0x70] sm:$0xff] %v3028
    %3047 = vst [vmem:[#allocation3 + $0x78] sm:$0xff] %v3030
    %v3048 = vld [vmem:[#allocation3 + $0x8] sm:$0xff]
    %v3049 = vld [vmem:[#allocation3 + $0x10] sm:$0xff]
    %v3050 = vld [vmem:[#allocation3 + $0x18] sm:$0xff]
    %v3051 = vld [vmem:[#allocation3 + $0x20] sm:$0xff]
    %v3052 = vld [vmem:[#allocation3 + $0x28] sm:$0xff]
    %v3053 = vld [vmem:[#allocation3 + $0x30] sm:$0xff]
    %v3054 = vld [vmem:[#allocation3 + $0x38] sm:$0xff]
    %v3055 = vld [vmem:[#allocation3 + $0x40] sm:$0xff]
    %v3056 = vld [vmem:[#allocation3 + $0x48] sm:$0xff]
    %v3057 = vld [vmem:[#allocation3 + $0x50] sm:$0xff]
    %v3058 = vld [vmem:[#allocation3 + $0x58] sm:$0xff]
    %v3059 = vld [vmem:[#allocation3 + $0x60] sm:$0xff]
    %v3060 = vld [vmem:[#allocation3 + $0x68] sm:$0xff]
    %v3061 = vld [vmem:[#allocation3 + $0x70] sm:$0xff]
    %v3062 = vld [vmem:[#allocation3 + $0x78] sm:$0xff]
    %v3063 = vld [vmem:[%s4] sm:$0xff]
    %v3064 = vld [vmem:[#allocation2] sm:$0xff]
    %v3065 = vld [vmem:[#allocation2 + $0x8] sm:$0xff]
    %v3066 = vld [vmem:[#allocation2 + $0x10] sm:$0xff]
    %v3067 = vld [vmem:[#allocation2 + $0x18] sm:$0xff]
    %v3068 = vld [vmem:[#allocation2 + $0x20] sm:$0xff]
    %v3069 = vld [vmem:[#allocation2 + $0x28] sm:$0xff]
    %v3070 = vld [vmem:[#allocation2 + $0x30] sm:$0xff]
    %v3071 = vld [vmem:[#allocation2 + $0x38] sm:$0xff]
    %v3072 = vld [vmem:[#allocation2 + $0x40] sm:$0xff]
    %v3073 = vld [vmem:[#allocation2 + $0x48] sm:$0xff]
    %v3074 = vld [vmem:[#allocation2 + $0x50] sm:$0xff]
    %v3075 = vld [vmem:[#allocation2 + $0x58] sm:$0xff]
    %v3076 = vld [vmem:[#allocation2 + $0x60] sm:$0xff]
    %v3077 = vld [vmem:[#allocation2 + $0x68] sm:$0xff]
    %v3078 = vld [vmem:[#allocation2 + $0x70] sm:$0xff]
    %v3080 = vsel %vm2460, %v3063, 0
    %3082 = vmatprep.subr.mxu0 %v3065
    %3083 = vmatpush1.msra.mxu0 %v3064
    %3084 = vmatprep.subr.mxu0 0.0
    %3085 = vmatpush1.msra.mxu0 0.0
    %3086 = vmatprep.subr.mxu0 0.0
    %3087 = vmatpush1.msra.mxu0 0.0
    %3088 = vmatprep.subr.mxu0 0.0
    %3089 = vmatpush1.msra.mxu0 0.0
    %3090 = vmatprep.subr.mxu0 0.0
    %3091 = vmatpush1.msra.mxu0 0.0
    %3092 = vmatprep.subr.mxu0 0.0
    %3093 = vmatpush1.msra.mxu0 0.0
    %3094 = vmatprep.subr.mxu0 0.0
    %3095 = vmatpush1.msra.mxu0 0.0
    %3096 = vmatprep.subr.mxu0 0.0
    %3097 = vmatpush1.msra.mxu0 0.0
    %3098 = vmatprep.subr.mxu0 0.0
    %3099 = vmatpush1.msra.mxu0 0.0
    %3100 = vmatprep.subr.mxu0 0.0
    %3101 = vmatpush1.msra.mxu0 0.0
    %3102 = vmatprep.subr.mxu0 0.0
    %3103 = vmatpush1.msra.mxu0 0.0
    %3104 = vmatprep.subr.mxu0 0.0
    %3105 = vmatpush1.msra.mxu0 0.0
    %3106 = vmatprep.subr.mxu0 0.0
    %3107 = vmatpush1.msra.mxu0 0.0
    %3108 = vmatprep.subr.mxu0 0.0
    %3109 = vmatpush1.msra.mxu0 0.0
    %3110 = vmatprep.subr.mxu0 0.0
    %3111 = vmatpush1.msra.mxu0 0.0
    %3112 = vmatprep.subr.mxu0 0.0
    %3113 = vmatpush1.msra.mxu0 0.0
    %3114 = vmatprep.subr.mxu0 0.0
    %3115 = vmatpush1.msra.mxu0 0.0
    %3116 = vmatprep.subr.mxu0 0.0
    %3117 = vmatpush1.msra.mxu0 0.0
    %3118 = vmatprep.subr.mxu0 0.0
    %3119 = vmatpush1.msra.mxu0 0.0
    %3120 = vmatprep.subr.mxu0 0.0
    %3121 = vmatpush1.msra.mxu0 0.0
    %3122 = vmatprep.subr.mxu0 0.0
    %3123 = vmatpush1.msra.mxu0 0.0
    %3124 = vmatprep.subr.mxu0 0.0
    %3125 = vmatpush1.msra.mxu0 0.0
    %3126 = vmatprep.subr.mxu0 0.0
    %3127 = vmatpush1.msra.mxu0 0.0
    %3128 = vmatprep.subr.mxu0 0.0
    %3129 = vmatpush1.msra.mxu0 0.0
    %3130 = vmatprep.subr.mxu0 0.0
    %3131 = vmatpush1.msra.mxu0 0.0
    %3132 = vmatprep.subr.mxu0 0.0
    %3133 = vmatpush1.msra.mxu0 0.0
    %3134 = vmatprep.subr.mxu0 0.0
    %3135 = vmatpush1.msra.mxu0 0.0
    %3136 = vmatprep.subr.mxu0 0.0
    %3137 = vmatpush1.msra.mxu0 0.0
    %3138 = vmatprep.subr.mxu0 0.0
    %3139 = vmatpush1.msra.mxu0 0.0
    %3140 = vmatprep.subr.mxu0 0.0
    %3141 = vmatpush1.msra.mxu0 0.0
    %3142 = vmatprep.subr.mxu0 0.0
    %3143 = vmatpush1.msra.mxu0 0.0
    %3144 = vmatprep.subr.mxu0 0.0
    %3145 = vmatpush1.msra.mxu0 0.0
    %3146 = vmatprep.mubr.f32.mxu0 0.0
    %3147 = vmatmul.mubr.f32.gmra.mrb[0].mxu0 %v3080
    %v3148 = vpop.f32.mrb[0].mxu0
    %v3149 = vadd.f32 0.0, %v3148
    %v3150 = vpop.f32.mrb[0].mxu0
    %v3151 = vadd.f32 0.0, %v3150
    %3152 = vdwg.mxu0
    %3153 = vmatprep.subr.mxu0 %v3067
    %3154 = vmatpush1.msra.mxu0 %v3066
    %3155 = vmatprep.subr.mxu0 0.0
    %3156 = vmatpush1.msra.mxu0 0.0
    %3157 = vmatprep.subr.mxu0 0.0
    %3158 = vmatpush1.msra.mxu0 0.0
    %3159 = vmatprep.subr.mxu0 0.0
    %3160 = vmatpush1.msra.mxu0 0.0
    %3161 = vmatprep.subr.mxu0 0.0
    %3162 = vmatpush1.msra.mxu0 0.0
    %3163 = vmatprep.subr.mxu0 0.0
    %3164 = vmatpush1.msra.mxu0 0.0
    %3165 = vmatprep.subr.mxu0 0.0
    %3166 = vmatpush1.msra.mxu0 0.0
    %3167 = vmatprep.subr.mxu0 0.0
    %3168 = vmatpush1.msra.mxu0 0.0
    %3169 = vmatprep.subr.mxu0 0.0
    %3170 = vmatpush1.msra.mxu0 0.0
    %3171 = vmatprep.subr.mxu0 0.0
    %3172 = vmatpush1.msra.mxu0 0.0
    %3173 = vmatprep.subr.mxu0 0.0
    %3174 = vmatpush1.msra.mxu0 0.0
    %3175 = vmatprep.subr.mxu0 0.0
    %3176 = vmatpush1.msra.mxu0 0.0
    %3177 = vmatprep.subr.mxu0 0.0
    %3178 = vmatpush1.msra.mxu0 0.0
    %3179 = vmatprep.subr.mxu0 0.0
    %3180 = vmatpush1.msra.mxu0 0.0
    %3181 = vmatprep.subr.mxu0 0.0
    %3182 = vmatpush1.msra.mxu0 0.0
    %3183 = vmatprep.subr.mxu0 0.0
    %3184 = vmatpush1.msra.mxu0 0.0
    %3185 = vmatprep.subr.mxu0 0.0
    %3186 = vmatpush1.msra.mxu0 0.0
    %3187 = vmatprep.subr.mxu0 0.0
    %3188 = vmatpush1.msra.mxu0 0.0
    %3189 = vmatprep.subr.mxu0 0.0
    %3190 = vmatpush1.msra.mxu0 0.0
    %3191 = vmatprep.subr.mxu0 0.0
    %3192 = vmatpush1.msra.mxu0 0.0
    %3193 = vmatprep.subr.mxu0 0.0
    %3194 = vmatpush1.msra.mxu0 0.0
    %3195 = vmatprep.subr.mxu0 0.0
    %3196 = vmatpush1.msra.mxu0 0.0
    %3197 = vmatprep.subr.mxu0 0.0
    %3198 = vmatpush1.msra.mxu0 0.0
    %3199 = vmatprep.subr.mxu0 0.0
    %3200 = vmatpush1.msra.mxu0 0.0
    %3201 = vmatprep.subr.mxu0 0.0
    %3202 = vmatpush1.msra.mxu0 0.0
    %3203 = vmatprep.subr.mxu0 0.0
    %3204 = vmatpush1.msra.mxu0 0.0
    %3205 = vmatprep.subr.mxu0 0.0
    %3206 = vmatpush1.msra.mxu0 0.0
    %3207 = vmatprep.subr.mxu0 0.0
    %3208 = vmatpush1.msra.mxu0 0.0
    %3209 = vmatprep.subr.mxu0 0.0
    %3210 = vmatpush1.msra.mxu0 0.0
    %3211 = vmatprep.subr.mxu0 0.0
    %3212 = vmatpush1.msra.mxu0 0.0
    %3213 = vmatprep.subr.mxu0 0.0
    %3214 = vmatpush1.msra.mxu0 0.0
    %3215 = vmatprep.subr.mxu0 0.0
    %3216 = vmatpush1.msra.mxu0 0.0
    %3217 = vmatprep.mubr.f32.mxu0 0.0
    %3218 = vmatmul.mubr.f32.gmra.mrb[0].mxu0 %v3080
    %v3219 = vpop.f32.mrb[0].mxu0
    %v3220 = vadd.f32 0.0, %v3219
    %v3221 = vpop.f32.mrb[0].mxu0
    %v3222 = vadd.f32 0.0, %v3221
    %3223 = vdwg.mxu0
    %3224 = vmatprep.subr.mxu0 %v3069
    %3225 = vmatpush1.msra.mxu0 %v3068
    %3226 = vmatprep.subr.mxu0 0.0
    %3227 = vmatpush1.msra.mxu0 0.0
    %3228 = vmatprep.subr.mxu0 0.0
    %3229 = vmatpush1.msra.mxu0 0.0
    %3230 = vmatprep.subr.mxu0 0.0
    %3231 = vmatpush1.msra.mxu0 0.0
    %3232 = vmatprep.subr.mxu0 0.0
    %3233 = vmatpush1.msra.mxu0 0.0
    %3234 = vmatprep.subr.mxu0 0.0
    %3235 = vmatpush1.msra.mxu0 0.0
    %3236 = vmatprep.subr.mxu0 0.0
    %3237 = vmatpush1.msra.mxu0 0.0
    %3238 = vmatprep.subr.mxu0 0.0
    %3239 = vmatpush1.msra.mxu0 0.0
    %3240 = vmatprep.subr.mxu0 0.0
    %3241 = vmatpush1.msra.mxu0 0.0
    %3242 = vmatprep.subr.mxu0 0.0
    %3243 = vmatpush1.msra.mxu0 0.0
    %3244 = vmatprep.subr.mxu0 0.0
    %3245 = vmatpush1.msra.mxu0 0.0
    %3246 = vmatprep.subr.mxu0 0.0
    %3247 = vmatpush1.msra.mxu0 0.0
    %3248 = vmatprep.subr.mxu0 0.0
    %3249 = vmatpush1.msra.mxu0 0.0
    %3250 = vmatprep.subr.mxu0 0.0
    %3251 = vmatpush1.msra.mxu0 0.0
    %3252 = vmatprep.subr.mxu0 0.0
    %3253 = vmatpush1.msra.mxu0 0.0
    %3254 = vmatprep.subr.mxu0 0.0
    %3255 = vmatpush1.msra.mxu0 0.0
    %3256 = vmatprep.subr.mxu0 0.0
    %3257 = vmatpush1.msra.mxu0 0.0
    %3258 = vmatprep.subr.mxu0 0.0
    %3259 = vmatpush1.msra.mxu0 0.0
    %3260 = vmatprep.subr.mxu0 0.0
    %3261 = vmatpush1.msra.mxu0 0.0
    %3262 = vmatprep.subr.mxu0 0.0
    %3263 = vmatpush1.msra.mxu0 0.0
    %3264 = vmatprep.subr.mxu0 0.0
    %3265 = vmatpush1.msra.mxu0 0.0
    %3266 = vmatprep.subr.mxu0 0.0
    %3267 = vmatpush1.msra.mxu0 0.0
    %3268 = vmatprep.subr.mxu0 0.0
    %3269 = vmatpush1.msra.mxu0 0.0
    %3270 = vmatprep.subr.mxu0 0.0
    %3271 = vmatpush1.msra.mxu0 0.0
    %3272 = vmatprep.subr.mxu0 0.0
    %3273 = vmatpush1.msra.mxu0 0.0
    %3274 = vmatprep.subr.mxu0 0.0
    %3275 = vmatpush1.msra.mxu0 0.0
    %3276 = vmatprep.subr.mxu0 0.0
    %3277 = vmatpush1.msra.mxu0 0.0
    %3278 = vmatprep.subr.mxu0 0.0
    %3279 = vmatpush1.msra.mxu0 0.0
    %3280 = vmatprep.subr.mxu0 0.0
    %3281 = vmatpush1.msra.mxu0 0.0
    %3282 = vmatprep.subr.mxu0 0.0
    %3283 = vmatpush1.msra.mxu0 0.0
    %3284 = vmatprep.subr.mxu0 0.0
    %3285 = vmatpush1.msra.mxu0 0.0
    %3286 = vmatprep.subr.mxu0 0.0
    %3287 = vmatpush1.msra.mxu0 0.0
    %3288 = vmatprep.mubr.f32.mxu0 0.0
    %3289 = vmatmul.mubr.f32.gmra.mrb[0].mxu0 %v3080
    %v3290 = vpop.f32.mrb[0].mxu0
    %v3291 = vadd.f32 0.0, %v3290
    %v3292 = vpop.f32.mrb[0].mxu0
    %v3293 = vadd.f32 0.0, %v3292
    %3294 = vdwg.mxu0
    %3295 = vmatprep.subr.mxu0 %v3071
    %3296 = vmatpush1.msra.mxu0 %v3070
    %3297 = vmatprep.subr.mxu0 0.0
    %3298 = vmatpush1.msra.mxu0 0.0
    %3299 = vmatprep.subr.mxu0 0.0
    %3300 = vmatpush1.msra.mxu0 0.0
    %3301 = vmatprep.subr.mxu0 0.0
    %3302 = vmatpush1.msra.mxu0 0.0
    %3303 = vmatprep.subr.mxu0 0.0
    %3304 = vmatpush1.msra.mxu0 0.0
    %3305 = vmatprep.subr.mxu0 0.0
    %3306 = vmatpush1.msra.mxu0 0.0
    %3307 = vmatprep.subr.mxu0 0.0
    %3308 = vmatpush1.msra.mxu0 0.0
    %3309 = vmatprep.subr.mxu0 0.0
    %3310 = vmatpush1.msra.mxu0 0.0
    %3311 = vmatprep.subr.mxu0 0.0
    %3312 = vmatpush1.msra.mxu0 0.0
    %3313 = vmatprep.subr.mxu0 0.0
    %3314 = vmatpush1.msra.mxu0 0.0
    %3315 = vmatprep.subr.mxu0 0.0
    %3316 = vmatpush1.msra.mxu0 0.0
    %3317 = vmatprep.subr.mxu0 0.0
    %3318 = vmatpush1.msra.mxu0 0.0
    %3319 = vmatprep.subr.mxu0 0.0
    %3320 = vmatpush1.msra.mxu0 0.0
    %3321 = vmatprep.subr.mxu0 0.0
    %3322 = vmatpush1.msra.mxu0 0.0
    %3323 = vmatprep.subr.mxu0 0.0
    %3324 = vmatpush1.msra.mxu0 0.0
    %3325 = vmatprep.subr.mxu0 0.0
    %3326 = vmatpush1.msra.mxu0 0.0
    %3327 = vmatprep.subr.mxu0 0.0
    %3328 = vmatpush1.msra.mxu0 0.0
    %3329 = vmatprep.subr.mxu0 0.0
    %3330 = vmatpush1.msra.mxu0 0.0
    %3331 = vmatprep.subr.mxu0 0.0
    %3332 = vmatpush1.msra.mxu0 0.0
    %3333 = vmatprep.subr.mxu0 0.0
    %3334 = vmatpush1.msra.mxu0 0.0
    %3335 = vmatprep.subr.mxu0 0.0
    %3336 = vmatpush1.msra.mxu0 0.0
    %3337 = vmatprep.subr.mxu0 0.0
    %3338 = vmatpush1.msra.mxu0 0.0
    %3339 = vmatprep.subr.mxu0 0.0
    %3340 = vmatpush1.msra.mxu0 0.0
    %3341 = vmatprep.subr.mxu0 0.0
    %3342 = vmatpush1.msra.mxu0 0.0
    %3343 = vmatprep.subr.mxu0 0.0
    %3344 = vmatpush1.msra.mxu0 0.0
    %3345 = vmatprep.subr.mxu0 0.0
    %3346 = vmatpush1.msra.mxu0 0.0
    %3347 = vmatprep.subr.mxu0 0.0
    %3348 = vmatpush1.msra.mxu0 0.0
    %3349 = vmatprep.subr.mxu0 0.0
    %3350 = vmatpush1.msra.mxu0 0.0
    %3351 = vmatprep.subr.mxu0 0.0
    %3352 = vmatpush1.msra.mxu0 0.0
    %3353 = vmatprep.subr.mxu0 0.0
    %3354 = vmatpush1.msra.mxu0 0.0
    %3355 = vmatprep.subr.mxu0 0.0
    %3356 = vmatpush1.msra.mxu0 0.0
    %3357 = vmatprep.subr.mxu0 0.0
    %3358 = vmatpush1.msra.mxu0 0.0
    %3359 = vmatprep.mubr.f32.mxu0 0.0
    %3360 = vmatmul.mubr.f32.gmra.mrb[0].mxu0 %v3080
    %v3361 = vpop.f32.mrb[0].mxu0
    %v3362 = vadd.f32 0.0, %v3361
    %v3363 = vpop.f32.mrb[0].mxu0
    %v3364 = vadd.f32 0.0, %v3363
    %3365 = vdwg.mxu0
    %3366 = vmatprep.subr.mxu0 %v3073
    %3367 = vmatpush1.msra.mxu0 %v3072
    %3368 = vmatprep.subr.mxu0 0.0
    %3369 = vmatpush1.msra.mxu0 0.0
    %3370 = vmatprep.subr.mxu0 0.0
    %3371 = vmatpush1.msra.mxu0 0.0
    %3372 = vmatprep.subr.mxu0 0.0
    %3373 = vmatpush1.msra.mxu0 0.0
    %3374 = vmatprep.subr.mxu0 0.0
    %3375 = vmatpush1.msra.mxu0 0.0
    %3376 = vmatprep.subr.mxu0 0.0
    %3377 = vmatpush1.msra.mxu0 0.0
    %3378 = vmatprep.subr.mxu0 0.0
    %3379 = vmatpush1.msra.mxu0 0.0
    %3380 = vmatprep.subr.mxu0 0.0
    %3381 = vmatpush1.msra.mxu0 0.0
    %3382 = vmatprep.subr.mxu0 0.0
    %3383 = vmatpush1.msra.mxu0 0.0
    %3384 = vmatprep.subr.mxu0 0.0
    %3385 = vmatpush1.msra.mxu0 0.0
    %3386 = vmatprep.subr.mxu0 0.0
    %3387 = vmatpush1.msra.mxu0 0.0
    %3388 = vmatprep.subr.mxu0 0.0
    %3389 = vmatpush1.msra.mxu0 0.0
    %3390 = vmatprep.subr.mxu0 0.0
    %3391 = vmatpush1.msra.mxu0 0.0
    %3392 = vmatprep.subr.mxu0 0.0
    %3393 = vmatpush1.msra.mxu0 0.0
    %3394 = vmatprep.subr.mxu0 0.0
    %3395 = vmatpush1.msra.mxu0 0.0
    %3396 = vmatprep.subr.mxu0 0.0
    %3397 = vmatpush1.msra.mxu0 0.0
    %3398 = vmatprep.subr.mxu0 0.0
    %3399 = vmatpush1.msra.mxu0 0.0
    %3400 = vmatprep.subr.mxu0 0.0
    %3401 = vmatpush1.msra.mxu0 0.0
    %3402 = vmatprep.subr.mxu0 0.0
    %3403 = vmatpush1.msra.mxu0 0.0
    %3404 = vmatprep.subr.mxu0 0.0
    %3405 = vmatpush1.msra.mxu0 0.0
    %3406 = vmatprep.subr.mxu0 0.0
    %3407 = vmatpush1.msra.mxu0 0.0
    %3408 = vmatprep.subr.mxu0 0.0
    %3409 = vmatpush1.msra.mxu0 0.0
    %3410 = vmatprep.subr.mxu0 0.0
    %3411 = vmatpush1.msra.mxu0 0.0
    %3412 = vmatprep.subr.mxu0 0.0
    %3413 = vmatpush1.msra.mxu0 0.0
    %3414 = vmatprep.subr.mxu0 0.0
    %3415 = vmatpush1.msra.mxu0 0.0
    %3416 = vmatprep.subr.mxu0 0.0
    %3417 = vmatpush1.msra.mxu0 0.0
    %3418 = vmatprep.subr.mxu0 0.0
    %3419 = vmatpush1.msra.mxu0 0.0
    %3420 = vmatprep.subr.mxu0 0.0
    %3421 = vmatpush1.msra.mxu0 0.0
    %3422 = vmatprep.subr.mxu0 0.0
    %3423 = vmatpush1.msra.mxu0 0.0
    %3424 = vmatprep.subr.mxu0 0.0
    %3425 = vmatpush1.msra.mxu0 0.0
    %3426 = vmatprep.subr.mxu0 0.0
    %3427 = vmatpush1.msra.mxu0 0.0
    %3428 = vmatprep.subr.mxu0 0.0
    %3429 = vmatpush1.msra.mxu0 0.0
    %3430 = vmatprep.mubr.f32.mxu0 0.0
    %3431 = vmatmul.mubr.f32.gmra.mrb[0].mxu0 %v3080
    %v3432 = vpop.f32.mrb[0].mxu0
    %v3433 = vadd.f32 0.0, %v3432
    %v3434 = vpop.f32.mrb[0].mxu0
    %v3435 = vadd.f32 0.0, %v3434
    %3436 = vdwg.mxu0
    %3437 = vmatprep.subr.mxu0 %v3075
    %3438 = vmatpush1.msra.mxu0 %v3074
    %3439 = vmatprep.subr.mxu0 0.0
    %3440 = vmatpush1.msra.mxu0 0.0
    %3441 = vmatprep.subr.mxu0 0.0
    %3442 = vmatpush1.msra.mxu0 0.0
    %3443 = vmatprep.subr.mxu0 0.0
    %3444 = vmatpush1.msra.mxu0 0.0
    %3445 = vmatprep.subr.mxu0 0.0
    %3446 = vmatpush1.msra.mxu0 0.0
    %3447 = vmatprep.subr.mxu0 0.0
    %3448 = vmatpush1.msra.mxu0 0.0
    %3449 = vmatprep.subr.mxu0 0.0
    %3450 = vmatpush1.msra.mxu0 0.0
    %3451 = vmatprep.subr.mxu0 0.0
    %3452 = vmatpush1.msra.mxu0 0.0
    %3453 = vmatprep.subr.mxu0 0.0
    %3454 = vmatpush1.msra.mxu0 0.0
    %3455 = vmatprep.subr.mxu0 0.0
    %3456 = vmatpush1.msra.mxu0 0.0
    %3457 = vmatprep.subr.mxu0 0.0
    %3458 = vmatpush1.msra.mxu0 0.0
    %3459 = vmatprep.subr.mxu0 0.0
    %3460 = vmatpush1.msra.mxu0 0.0
    %3461 = vmatprep.subr.mxu0 0.0
    %3462 = vmatpush1.msra.mxu0 0.0
    %3463 = vmatprep.subr.mxu0 0.0
    %3464 = vmatpush1.msra.mxu0 0.0
    %3465 = vmatprep.subr.mxu0 0.0
    %3466 = vmatpush1.msra.mxu0 0.0
    %3467 = vmatprep.subr.mxu0 0.0
    %3468 = vmatpush1.msra.mxu0 0.0
    %3469 = vmatprep.subr.mxu0 0.0
    %3470 = vmatpush1.msra.mxu0 0.0
    %3471 = vmatprep.subr.mxu0 0.0
    %3472 = vmatpush1.msra.mxu0 0.0
    %3473 = vmatprep.subr.mxu0 0.0
    %3474 = vmatpush1.msra.mxu0 0.0
    %3475 = vmatprep.subr.mxu0 0.0
    %3476 = vmatpush1.msra.mxu0 0.0
    %3477 = vmatprep.subr.mxu0 0.0
    %3478 = vmatpush1.msra.mxu0 0.0
    %3479 = vmatprep.subr.mxu0 0.0
    %3480 = vmatpush1.msra.mxu0 0.0
    %3481 = vmatprep.subr.mxu0 0.0
    %3482 = vmatpush1.msra.mxu0 0.0
    %3483 = vmatprep.subr.mxu0 0.0
    %3484 = vmatpush1.msra.mxu0 0.0
    %3485 = vmatprep.subr.mxu0 0.0
    %3486 = vmatpush1.msra.mxu0 0.0
    %3487 = vmatprep.subr.mxu0 0.0
    %3488 = vmatpush1.msra.mxu0 0.0
    %3489 = vmatprep.subr.mxu0 0.0
    %3490 = vmatpush1.msra.mxu0 0.0
    %3491 = vmatprep.subr.mxu0 0.0
    %3492 = vmatpush1.msra.mxu0 0.0
    %3493 = vmatprep.subr.mxu0 0.0
    %3494 = vmatpush1.msra.mxu0 0.0
    %3495 = vmatprep.subr.mxu0 0.0
    %3496 = vmatpush1.msra.mxu0 0.0
    %3497 = vmatprep.subr.mxu0 0.0
    %3498 = vmatpush1.msra.mxu0 0.0
    %3499 = vmatprep.subr.mxu0 0.0
    %3500 = vmatpush1.msra.mxu0 0.0
    %3501 = vmatprep.mubr.f32.mxu0 0.0
    %3502 = vmatmul.mubr.f32.gmra.mrb[0].mxu0 %v3080
    %v3503 = vpop.f32.mrb[0].mxu0
    %v3504 = vadd.f32 0.0, %v3503
    %v3505 = vpop.f32.mrb[0].mxu0
    %v3506 = vadd.f32 0.0, %v3505
    %3507 = vdwg.mxu0
    %3508 = vmatprep.subr.mxu0 %v3077
    %3509 = vmatpush1.msra.mxu0 %v3076
    %3510 = vmatprep.subr.mxu0 0.0
    %3511 = vmatpush1.msra.mxu0 0.0
    %3512 = vmatprep.subr.mxu0 0.0
    %3513 = vmatpush1.msra.mxu0 0.0
    %3514 = vmatprep.subr.mxu0 0.0
    %3515 = vmatpush1.msra.mxu0 0.0
    %3516 = vmatprep.subr.mxu0 0.0
    %3517 = vmatpush1.msra.mxu0 0.0
    %3518 = vmatprep.subr.mxu0 0.0
    %3519 = vmatpush1.msra.mxu0 0.0
    %3520 = vmatprep.subr.mxu0 0.0
    %3521 = vmatpush1.msra.mxu0 0.0
    %3522 = vmatprep.subr.mxu0 0.0
    %3523 = vmatpush1.msra.mxu0 0.0
    %3524 = vmatprep.subr.mxu0 0.0
    %3525 = vmatpush1.msra.mxu0 0.0
    %3526 = vmatprep.subr.mxu0 0.0
    %3527 = vmatpush1.msra.mxu0 0.0
    %3528 = vmatprep.subr.mxu0 0.0
    %3529 = vmatpush1.msra.mxu0 0.0
    %3530 = vmatprep.subr.mxu0 0.0
    %3531 = vmatpush1.msra.mxu0 0.0
    %3532 = vmatprep.subr.mxu0 0.0
    %3533 = vmatpush1.msra.mxu0 0.0
    %3534 = vmatprep.subr.mxu0 0.0
    %3535 = vmatpush1.msra.mxu0 0.0
    %3536 = vmatprep.subr.mxu0 0.0
    %3537 = vmatpush1.msra.mxu0 0.0
    %3538 = vmatprep.subr.mxu0 0.0
    %3539 = vmatpush1.msra.mxu0 0.0
    %3540 = vmatprep.subr.mxu0 0.0
    %3541 = vmatpush1.msra.mxu0 0.0
    %3542 = vmatprep.subr.mxu0 0.0
    %3543 = vmatpush1.msra.mxu0 0.0
    %3544 = vmatprep.subr.mxu0 0.0
    %3545 = vmatpush1.msra.mxu0 0.0
    %3546 = vmatprep.subr.mxu0 0.0
    %3547 = vmatpush1.msra.mxu0 0.0
    %3548 = vmatprep.subr.mxu0 0.0
    %3549 = vmatpush1.msra.mxu0 0.0
    %3550 = vmatprep.subr.mxu0 0.0
    %3551 = vmatpush1.msra.mxu0 0.0
    %3552 = vmatprep.subr.mxu0 0.0
    %3553 = vmatpush1.msra.mxu0 0.0
    %3554 = vmatprep.subr.mxu0 0.0
    %3555 = vmatpush1.msra.mxu0 0.0
    %3556 = vmatprep.subr.mxu0 0.0
    %3557 = vmatpush1.msra.mxu0 0.0
    %3558 = vmatprep.subr.mxu0 0.0
    %3559 = vmatpush1.msra.mxu0 0.0
    %3560 = vmatprep.subr.mxu0 0.0
    %3561 = vmatpush1.msra.mxu0 0.0
    %3562 = vmatprep.subr.mxu0 0.0
    %3563 = vmatpush1.msra.mxu0 0.0
    %3564 = vmatprep.subr.mxu0 0.0
    %3565 = vmatpush1.msra.mxu0 0.0
    %3566 = vmatprep.subr.mxu0 0.0
    %3567 = vmatpush1.msra.mxu0 0.0
    %3568 = vmatprep.subr.mxu0 0.0
    %3569 = vmatpush1.msra.mxu0 0.0
    %3570 = vmatprep.subr.mxu0 0.0
    %3571 = vmatpush1.msra.mxu0 0.0
    %3572 = vmatprep.mubr.f32.mxu0 0.0
    %3573 = vmatmul.mubr.f32.gmra.mrb[0].mxu0 %v3080
    %v3574 = vpop.f32.mrb[0].mxu0
    %v3575 = vadd.f32 0.0, %v3574
    %v3576 = vpop.f32.mrb[0].mxu0
    %v3577 = vadd.f32 0.0, %v3576
    %3578 = vdwg.mxu0
    %3579 = vmatprep.subr.mxu0 0.0
    %3580 = vmatpush1.msra.mxu0 %v3078
    %3581 = vmatprep.subr.mxu0 0.0
    %3582 = vmatpush1.msra.mxu0 0.0
    %3583 = vmatprep.subr.mxu0 0.0
    %3584 = vmatpush1.msra.mxu0 0.0
    %3585 = vmatprep.subr.mxu0 0.0
    %3586 = vmatpush1.msra.mxu0 0.0
    %3587 = vmatprep.subr.mxu0 0.0
    %3588 = vmatpush1.msra.mxu0 0.0
    %3589 = vmatprep.subr.mxu0 0.0
    %3590 = vmatpush1.msra.mxu0 0.0
    %3591 = vmatprep.subr.mxu0 0.0
    %3592 = vmatpush1.msra.mxu0 0.0
    %3593 = vmatprep.subr.mxu0 0.0
    %3594 = vmatpush1.msra.mxu0 0.0
    %3595 = vmatprep.subr.mxu0 0.0
    %3596 = vmatpush1.msra.mxu0 0.0
    %3597 = vmatprep.subr.mxu0 0.0
    %3598 = vmatpush1.msra.mxu0 0.0
    %3599 = vmatprep.subr.mxu0 0.0
    %3600 = vmatpush1.msra.mxu0 0.0
    %3601 = vmatprep.subr.mxu0 0.0
    %3602 = vmatpush1.msra.mxu0 0.0
    %3603 = vmatprep.subr.mxu0 0.0
    %3604 = vmatpush1.msra.mxu0 0.0
    %3605 = vmatprep.subr.mxu0 0.0
    %3606 = vmatpush1.msra.mxu0 0.0
    %3607 = vmatprep.subr.mxu0 0.0
    %3608 = vmatpush1.msra.mxu0 0.0
    %3609 = vmatprep.subr.mxu0 0.0
    %3610 = vmatpush1.msra.mxu0 0.0
    %3611 = vmatprep.subr.mxu0 0.0
    %3612 = vmatpush1.msra.mxu0 0.0
    %3613 = vmatprep.subr.mxu0 0.0
    %3614 = vmatpush1.msra.mxu0 0.0
    %3615 = vmatprep.subr.mxu0 0.0
    %3616 = vmatpush1.msra.mxu0 0.0
    %3617 = vmatprep.subr.mxu0 0.0
    %3618 = vmatpush1.msra.mxu0 0.0
    %3619 = vmatprep.subr.mxu0 0.0
    %3620 = vmatpush1.msra.mxu0 0.0
    %3621 = vmatprep.subr.mxu0 0.0
    %3622 = vmatpush1.msra.mxu0 0.0
    %3623 = vmatprep.subr.mxu0 0.0
    %3624 = vmatpush1.msra.mxu0 0.0
    %3625 = vmatprep.subr.mxu0 0.0
    %3626 = vmatpush1.msra.mxu0 0.0
    %3627 = vmatprep.subr.mxu0 0.0
    %3628 = vmatpush1.msra.mxu0 0.0
    %3629 = vmatprep.subr.mxu0 0.0
    %3630 = vmatpush1.msra.mxu0 0.0
    %3631 = vmatprep.subr.mxu0 0.0
    %3632 = vmatpush1.msra.mxu0 0.0
    %3633 = vmatprep.subr.mxu0 0.0
    %3634 = vmatpush1.msra.mxu0 0.0
    %3635 = vmatprep.subr.mxu0 0.0
    %3636 = vmatpush1.msra.mxu0 0.0
    %3637 = vmatprep.subr.mxu0 0.0
    %3638 = vmatpush1.msra.mxu0 0.0
    %3639 = vmatprep.subr.mxu0 0.0
    %3640 = vmatpush1.msra.mxu0 0.0
    %3641 = vmatprep.subr.mxu0 0.0
    %3642 = vmatpush1.msra.mxu0 0.0
    %3643 = vmatprep.mubr.f32.mxu0 0.0
    %3644 = vmatmul.mubr.f32.gmra.mrb[0].mxu0 %v3080
    %v3645 = vpop.f32.mrb[0].mxu0
    %v3646 = vadd.f32 0.0, %v3645
    %v3647 = vpop.f32.mrb[0].mxu0
    %3648 = vdwg.mxu0
    %v3649 = vadd.f32 %v3048, %v3149
    %v3650 = vadd.f32 %v3049, %v3151
    %v3651 = vadd.f32 %v3050, %v3220
    %v3652 = vadd.f32 %v3051, %v3222
    %v3653 = vadd.f32 %v3052, %v3291
    %v3654 = vadd.f32 %v3053, %v3293
    %v3655 = vadd.f32 %v3054, %v3362
    %v3656 = vadd.f32 %v3055, %v3364
    %v3657 = vadd.f32 %v3056, %v3433
    %v3658 = vadd.f32 %v3057, %v3435
    %v3659 = vadd.f32 %v3058, %v3504
    %v3660 = vadd.f32 %v3059, %v3506
    %v3661 = vadd.f32 %v3060, %v3575
    %v3662 = vadd.f32 %v3061, %v3577
    %v3663 = vadd.f32 %v3062, %v3646
    %3664 = vst [vmem:[#allocation3 + $0x8] sm:$0xff] %v3649
    %3665 = vst [vmem:[#allocation3 + $0x10] sm:$0xff] %v3650
    %3666 = vst [vmem:[#allocation3 + $0x18] sm:$0xff] %v3651
    %3667 = vst [vmem:[#allocation3 + $0x20] sm:$0xff] %v3652
    %3668 = vst [vmem:[#allocation3 + $0x28] sm:$0xff] %v3653
    %3669 = vst [vmem:[#allocation3 + $0x30] sm:$0xff] %v3654
    %3670 = vst [vmem:[#allocation3 + $0x38] sm:$0xff] %v3655
    %3671 = vst [vmem:[#allocation3 + $0x40] sm:$0xff] %v3656
    %3672 = vst [vmem:[#allocation3 + $0x48] sm:$0xff] %v3657
    %3673 = vst [vmem:[#allocation3 + $0x50] sm:$0xff] %v3658
    %3674 = vst [vmem:[#allocation3 + $0x58] sm:$0xff] %v3659
    %3675 = vst [vmem:[#allocation3 + $0x60] sm:$0xff] %v3660
    %3676 = vst [vmem:[#allocation3 + $0x68] sm:$0xff] %v3661
    %3677 = vst [vmem:[#allocation3 + $0x70] sm:$0xff] %v3662
    %3678 = vst [vmem:[#allocation3 + $0x78] sm:$0xff] %v3663
    %v3679 = vld [vmem:[#allocation3] sm:$0xff]
    %v3680 = vld [vmem:[#allocation3 + $0x8] sm:$0xff]
    %v3681 = vld [vmem:[#allocation3 + $0x10] sm:$0xff]
    %v3682 = vld [vmem:[#allocation3 + $0x18] sm:$0xff]
    %v3683 = vld [vmem:[#allocation3 + $0x20] sm:$0xff]
    %v3684 = vld [vmem:[#allocation3 + $0x28] sm:$0xff]
    %v3685 = vld [vmem:[#allocation3 + $0x30] sm:$0xff]
    %v3686 = vld [vmem:[#allocation3 + $0x38] sm:$0xff]
    %v3687 = vld [vmem:[#allocation3 + $0x40] sm:$0xff]
    %v3688 = vld [vmem:[#allocation3 + $0x48] sm:$0xff]
    %v3689 = vld [vmem:[#allocation3 + $0x50] sm:$0xff]
    %v3690 = vld [vmem:[#allocation3 + $0x58] sm:$0xff]
    %v3691 = vld [vmem:[#allocation3 + $0x60] sm:$0xff]
    %v3692 = vld [vmem:[#allocation3 + $0x68] sm:$0xff]
    %v3693 = vld [vmem:[#allocation3 + $0x70] sm:$0xff]
    %s3694 = scalar_lea.vmem %s4, 16
    %v3695 = vld [vmem:[%s3694] sm:$0xff]
    %v3696 = vld [vmem:[#allocation2 + $0x8] sm:$0xff]
    %v3697 = vld [vmem:[#allocation2 + $0x10] sm:$0xff]
    %v3698 = vld [vmem:[#allocation2 + $0x18] sm:$0xff]
    %v3699 = vld [vmem:[#allocation2 + $0x20] sm:$0xff]
    %v3700 = vld [vmem:[#allocation2 + $0x28] sm:$0xff]
    %v3701 = vld [vmem:[#allocation2 + $0x30] sm:$0xff]
    %v3702 = vld [vmem:[#allocation2 + $0x38] sm:$0xff]
    %v3703 = vld [vmem:[#allocation2 + $0x40] sm:$0xff]
    %v3704 = vld [vmem:[#allocation2 + $0x48] sm:$0xff]
    %v3705 = vld [vmem:[#allocation2 + $0x50] sm:$0xff]
    %v3706 = vld [vmem:[#allocation2 + $0x58] sm:$0xff]
    %v3707 = vld [vmem:[#allocation2 + $0x60] sm:$0xff]
    %v3708 = vld [vmem:[#allocation2 + $0x68] sm:$0xff]
    %v3709 = vld [vmem:[#allocation2 + $0x70] sm:$0xff]
    %v3710 = vld [vmem:[#allocation2 + $0x78] sm:$0xff]
    %v3712 = vsel %vm2460, %v3695, 0
    %3714 = vmatprep.subr.mxu0 %v3697
    %3715 = vmatpush1.msra.mxu0 %v3696
    %3716 = vmatprep.subr.mxu0 0.0
    %3717 = vmatpush1.msra.mxu0 0.0
    %3718 = vmatprep.subr.mxu0 0.0
    %3719 = vmatpush1.msra.mxu0 0.0
    %3720 = vmatprep.subr.mxu0 0.0
    %3721 = vmatpush1.msra.mxu0 0.0
    %3722 = vmatprep.subr.mxu0 0.0
    %3723 = vmatpush1.msra.mxu0 0.0
    %3724 = vmatprep.subr.mxu0 0.0
    %3725 = vmatpush1.msra.mxu0 0.0
    %3726 = vmatprep.subr.mxu0 0.0
    %3727 = vmatpush1.msra.mxu0 0.0
    %3728 = vmatprep.subr.mxu0 0.0
    %3729 = vmatpush1.msra.mxu0 0.0
    %3730 = vmatprep.subr.mxu0 0.0
    %3731 = vmatpush1.msra.mxu0 0.0
    %3732 = vmatprep.subr.mxu0 0.0
    %3733 = vmatpush1.msra.mxu0 0.0
    %3734 = vmatprep.subr.mxu0 0.0
    %3735 = vmatpush1.msra.mxu0 0.0
    %3736 = vmatprep.subr.mxu0 0.0
    %3737 = vmatpush1.msra.mxu0 0.0
    %3738 = vmatprep.subr.mxu0 0.0
    %3739 = vmatpush1.msra.mxu0 0.0
    %3740 = vmatprep.subr.mxu0 0.0
    %3741 = vmatpush1.msra.mxu0 0.0
    %3742 = vmatprep.subr.mxu0 0.0
    %3743 = vmatpush1.msra.mxu0 0.0
    %3744 = vmatprep.subr.mxu0 0.0
    %3745 = vmatpush1.msra.mxu0 0.0
    %3746 = vmatprep.subr.mxu0 0.0
    %3747 = vmatpush1.msra.mxu0 0.0
    %3748 = vmatprep.subr.mxu0 0.0
    %3749 = vmatpush1.msra.mxu0 0.0
    %3750 = vmatprep.subr.mxu0 0.0
    %3751 = vmatpush1.msra.mxu0 0.0
    %3752 = vmatprep.subr.mxu0 0.0
    %3753 = vmatpush1.msra.mxu0 0.0
    %3754 = vmatprep.subr.mxu0 0.0
    %3755 = vmatpush1.msra.mxu0 0.0
    %3756 = vmatprep.subr.mxu0 0.0
    %3757 = vmatpush1.msra.mxu0 0.0
    %3758 = vmatprep.subr.mxu0 0.0
    %3759 = vmatpush1.msra.mxu0 0.0
    %3760 = vmatprep.subr.mxu0 0.0
    %3761 = vmatpush1.msra.mxu0 0.0
    %3762 = vmatprep.subr.mxu0 0.0
    %3763 = vmatpush1.msra.mxu0 0.0
    %3764 = vmatprep.subr.mxu0 0.0
    %3765 = vmatpush1.msra.mxu0 0.0
    %3766 = vmatprep.subr.mxu0 0.0
    %3767 = vmatpush1.msra.mxu0 0.0
    %3768 = vmatprep.subr.mxu0 0.0
    %3769 = vmatpush1.msra.mxu0 0.0
    %3770 = vmatprep.subr.mxu0 0.0
    %3771 = vmatpush1.msra.mxu0 0.0
    %3772 = vmatprep.subr.mxu0 0.0
    %3773 = vmatpush1.msra.mxu0 0.0
    %3774 = vmatprep.subr.mxu0 0.0
    %3775 = vmatpush1.msra.mxu0 0.0
    %3776 = vmatprep.subr.mxu0 0.0
    %3777 = vmatpush1.msra.mxu0 0.0
    %3778 = vmatprep.mubr.f32.mxu0 0.0
    %3779 = vmatmul.mubr.f32.gmra.mrb[0].mxu0 %v3712
    %v3780 = vpop.f32.mrb[0].mxu0
    %v3781 = vadd.f32 0.0, %v3780
    %v3782 = vpop.f32.mrb[0].mxu0
    %v3783 = vadd.f32 0.0, %v3782
    %3784 = vdwg.mxu0
    %3785 = vmatprep.subr.mxu0 %v3699
    %3786 = vmatpush1.msra.mxu0 %v3698
    %3787 = vmatprep.subr.mxu0 0.0
    %3788 = vmatpush1.msra.mxu0 0.0
    %3789 = vmatprep.subr.mxu0 0.0
    %3790 = vmatpush1.msra.mxu0 0.0
    %3791 = vmatprep.subr.mxu0 0.0
    %3792 = vmatpush1.msra.mxu0 0.0
    %3793 = vmatprep.subr.mxu0 0.0
    %3794 = vmatpush1.msra.mxu0 0.0
    %3795 = vmatprep.subr.mxu0 0.0
    %3796 = vmatpush1.msra.mxu0 0.0
    %3797 = vmatprep.subr.mxu0 0.0
    %3798 = vmatpush1.msra.mxu0 0.0
    %3799 = vmatprep.subr.mxu0 0.0
    %3800 = vmatpush1.msra.mxu0 0.0
    %3801 = vmatprep.subr.mxu0 0.0
    %3802 = vmatpush1.msra.mxu0 0.0
    %3803 = vmatprep.subr.mxu0 0.0
    %3804 = vmatpush1.msra.mxu0 0.0
    %3805 = vmatprep.subr.mxu0 0.0
    %3806 = vmatpush1.msra.mxu0 0.0
    %3807 = vmatprep.subr.mxu0 0.0
    %3808 = vmatpush1.msra.mxu0 0.0
    %3809 = vmatprep.subr.mxu0 0.0
    %3810 = vmatpush1.msra.mxu0 0.0
    %3811 = vmatprep.subr.mxu0 0.0
    %3812 = vmatpush1.msra.mxu0 0.0
    %3813 = vmatprep.subr.mxu0 0.0
    %3814 = vmatpush1.msra.mxu0 0.0
    %3815 = vmatprep.subr.mxu0 0.0
    %3816 = vmatpush1.msra.mxu0 0.0
    %3817 = vmatprep.subr.mxu0 0.0
    %3818 = vmatpush1.msra.mxu0 0.0
    %3819 = vmatprep.subr.mxu0 0.0
    %3820 = vmatpush1.msra.mxu0 0.0
    %3821 = vmatprep.subr.mxu0 0.0
    %3822 = vmatpush1.msra.mxu0 0.0
    %3823 = vmatprep.subr.mxu0 0.0
    %3824 = vmatpush1.msra.mxu0 0.0
    %3825 = vmatprep.subr.mxu0 0.0
    %3826 = vmatpush1.msra.mxu0 0.0
    %3827 = vmatprep.subr.mxu0 0.0
    %3828 = vmatpush1.msra.mxu0 0.0
    %3829 = vmatprep.subr.mxu0 0.0
    %3830 = vmatpush1.msra.mxu0 0.0
    %3831 = vmatprep.subr.mxu0 0.0
    %3832 = vmatpush1.msra.mxu0 0.0
    %3833 = vmatprep.subr.mxu0 0.0
    %3834 = vmatpush1.msra.mxu0 0.0
    %3835 = vmatprep.subr.mxu0 0.0
    %3836 = vmatpush1.msra.mxu0 0.0
    %3837 = vmatprep.subr.mxu0 0.0
    %3838 = vmatpush1.msra.mxu0 0.0
    %3839 = vmatprep.subr.mxu0 0.0
    %3840 = vmatpush1.msra.mxu0 0.0
    %3841 = vmatprep.subr.mxu0 0.0
    %3842 = vmatpush1.msra.mxu0 0.0
    %3843 = vmatprep.subr.mxu0 0.0
    %3844 = vmatpush1.msra.mxu0 0.0
    %3845 = vmatprep.subr.mxu0 0.0
    %3846 = vmatpush1.msra.mxu0 0.0
    %3847 = vmatprep.subr.mxu0 0.0
    %3848 = vmatpush1.msra.mxu0 0.0
    %3849 = vmatprep.mubr.f32.mxu0 0.0
    %3850 = vmatmul.mubr.f32.gmra.mrb[0].mxu0 %v3712
    %v3851 = vpop.f32.mrb[0].mxu0
    %v3852 = vadd.f32 0.0, %v3851
    %v3853 = vpop.f32.mrb[0].mxu0
    %v3854 = vadd.f32 0.0, %v3853
    %3855 = vdwg.mxu0
    %3856 = vmatprep.subr.mxu0 %v3701
    %3857 = vmatpush1.msra.mxu0 %v3700
    %3858 = vmatprep.subr.mxu0 0.0
    %3859 = vmatpush1.msra.mxu0 0.0
    %3860 = vmatprep.subr.mxu0 0.0
    %3861 = vmatpush1.msra.mxu0 0.0
    %3862 = vmatprep.subr.mxu0 0.0
    %3863 = vmatpush1.msra.mxu0 0.0
    %3864 = vmatprep.subr.mxu0 0.0
    %3865 = vmatpush1.msra.mxu0 0.0
    %3866 = vmatprep.subr.mxu0 0.0
    %3867 = vmatpush1.msra.mxu0 0.0
    %3868 = vmatprep.subr.mxu0 0.0
    %3869 = vmatpush1.msra.mxu0 0.0
    %3870 = vmatprep.subr.mxu0 0.0
    %3871 = vmatpush1.msra.mxu0 0.0
    %3872 = vmatprep.subr.mxu0 0.0
    %3873 = vmatpush1.msra.mxu0 0.0
    %3874 = vmatprep.subr.mxu0 0.0
    %3875 = vmatpush1.msra.mxu0 0.0
    %3876 = vmatprep.subr.mxu0 0.0
    %3877 = vmatpush1.msra.mxu0 0.0
    %3878 = vmatprep.subr.mxu0 0.0
    %3879 = vmatpush1.msra.mxu0 0.0
    %3880 = vmatprep.subr.mxu0 0.0
    %3881 = vmatpush1.msra.mxu0 0.0
    %3882 = vmatprep.subr.mxu0 0.0
    %3883 = vmatpush1.msra.mxu0 0.0
    %3884 = vmatprep.subr.mxu0 0.0
    %3885 = vmatpush1.msra.mxu0 0.0
    %3886 = vmatprep.subr.mxu0 0.0
    %3887 = vmatpush1.msra.mxu0 0.0
    %3888 = vmatprep.subr.mxu0 0.0
    %3889 = vmatpush1.msra.mxu0 0.0
    %3890 = vmatprep.subr.mxu0 0.0
    %3891 = vmatpush1.msra.mxu0 0.0
    %3892 = vmatprep.subr.mxu0 0.0
    %3893 = vmatpush1.msra.mxu0 0.0
    %3894 = vmatprep.subr.mxu0 0.0
    %3895 = vmatpush1.msra.mxu0 0.0
    %3896 = vmatprep.subr.mxu0 0.0
    %3897 = vmatpush1.msra.mxu0 0.0
    %3898 = vmatprep.subr.mxu0 0.0
    %3899 = vmatpush1.msra.mxu0 0.0
    %3900 = vmatprep.subr.mxu0 0.0
    %3901 = vmatpush1.msra.mxu0 0.0
    %3902 = vmatprep.subr.mxu0 0.0
    %3903 = vmatpush1.msra.mxu0 0.0
    %3904 = vmatprep.subr.mxu0 0.0
    %3905 = vmatpush1.msra.mxu0 0.0
    %3906 = vmatprep.subr.mxu0 0.0
    %3907 = vmatpush1.msra.mxu0 0.0
    %3908 = vmatprep.subr.mxu0 0.0
    %3909 = vmatpush1.msra.mxu0 0.0
    %3910 = vmatprep.subr.mxu0 0.0
    %3911 = vmatpush1.msra.mxu0 0.0
    %3912 = vmatprep.subr.mxu0 0.0
    %3913 = vmatpush1.msra.mxu0 0.0
    %3914 = vmatprep.subr.mxu0 0.0
    %3915 = vmatpush1.msra.mxu0 0.0
    %3916 = vmatprep.subr.mxu0 0.0
    %3917 = vmatpush1.msra.mxu0 0.0
    %3918 = vmatprep.subr.mxu0 0.0
    %3919 = vmatpush1.msra.mxu0 0.0
    %3920 = vmatprep.mubr.f32.mxu0 0.0
    %3921 = vmatmul.mubr.f32.gmra.mrb[0].mxu0 %v3712
    %v3922 = vpop.f32.mrb[0].mxu0
    %v3923 = vadd.f32 0.0, %v3922
    %v3924 = vpop.f32.mrb[0].mxu0
    %v3925 = vadd.f32 0.0, %v3924
    %3926 = vdwg.mxu0
    %3927 = vmatprep.subr.mxu0 %v3703
    %3928 = vmatpush1.msra.mxu0 %v3702
    %3929 = vmatprep.subr.mxu0 0.0
    %3930 = vmatpush1.msra.mxu0 0.0
    %3931 = vmatprep.subr.mxu0 0.0
    %3932 = vmatpush1.msra.mxu0 0.0
    %3933 = vmatprep.subr.mxu0 0.0
    %3934 = vmatpush1.msra.mxu0 0.0
    %3935 = vmatprep.subr.mxu0 0.0
    %3936 = vmatpush1.msra.mxu0 0.0
    %3937 = vmatprep.subr.mxu0 0.0
    %3938 = vmatpush1.msra.mxu0 0.0
    %3939 = vmatprep.subr.mxu0 0.0
    %3940 = vmatpush1.msra.mxu0 0.0
    %3941 = vmatprep.subr.mxu0 0.0
    %3942 = vmatpush1.msra.mxu0 0.0
    %3943 = vmatprep.subr.mxu0 0.0
    %3944 = vmatpush1.msra.mxu0 0.0
    %3945 = vmatprep.subr.mxu0 0.0
    %3946 = vmatpush1.msra.mxu0 0.0
    %3947 = vmatprep.subr.mxu0 0.0
    %3948 = vmatpush1.msra.mxu0 0.0
    %3949 = vmatprep.subr.mxu0 0.0
    %3950 = vmatpush1.msra.mxu0 0.0
    %3951 = vmatprep.subr.mxu0 0.0
    %3952 = vmatpush1.msra.mxu0 0.0
    %3953 = vmatprep.subr.mxu0 0.0
    %3954 = vmatpush1.msra.mxu0 0.0
    %3955 = vmatprep.subr.mxu0 0.0
    %3956 = vmatpush1.msra.mxu0 0.0
    %3957 = vmatprep.subr.mxu0 0.0
    %3958 = vmatpush1.msra.mxu0 0.0
    %3959 = vmatprep.subr.mxu0 0.0
    %3960 = vmatpush1.msra.mxu0 0.0
    %3961 = vmatprep.subr.mxu0 0.0
    %3962 = vmatpush1.msra.mxu0 0.0
    %3963 = vmatprep.subr.mxu0 0.0
    %3964 = vmatpush1.msra.mxu0 0.0
    %3965 = vmatprep.subr.mxu0 0.0
    %3966 = vmatpush1.msra.mxu0 0.0
    %3967 = vmatprep.subr.mxu0 0.0
    %3968 = vmatpush1.msra.mxu0 0.0
    %3969 = vmatprep.subr.mxu0 0.0
    %3970 = vmatpush1.msra.mxu0 0.0
    %3971 = vmatprep.subr.mxu0 0.0
    %3972 = vmatpush1.msra.mxu0 0.0
    %3973 = vmatprep.subr.mxu0 0.0
    %3974 = vmatpush1.msra.mxu0 0.0
    %3975 = vmatprep.subr.mxu0 0.0
    %3976 = vmatpush1.msra.mxu0 0.0
    %3977 = vmatprep.subr.mxu0 0.0
    %3978 = vmatpush1.msra.mxu0 0.0
    %3979 = vmatprep.subr.mxu0 0.0
    %3980 = vmatpush1.msra.mxu0 0.0
    %3981 = vmatprep.subr.mxu0 0.0
    %3982 = vmatpush1.msra.mxu0 0.0
    %3983 = vmatprep.subr.mxu0 0.0
    %3984 = vmatpush1.msra.mxu0 0.0
    %3985 = vmatprep.subr.mxu0 0.0
    %3986 = vmatpush1.msra.mxu0 0.0
    %3987 = vmatprep.subr.mxu0 0.0
    %3988 = vmatpush1.msra.mxu0 0.0
    %3989 = vmatprep.subr.mxu0 0.0
    %3990 = vmatpush1.msra.mxu0 0.0
    %3991 = vmatprep.mubr.f32.mxu0 0.0
    %3992 = vmatmul.mubr.f32.gmra.mrb[0].mxu0 %v3712
    %v3993 = vpop.f32.mrb[0].mxu0
    %v3994 = vadd.f32 0.0, %v3993
    %v3995 = vpop.f32.mrb[0].mxu0
    %v3996 = vadd.f32 0.0, %v3995
    %3997 = vdwg.mxu0
    %3998 = vmatprep.subr.mxu0 %v3705
    %3999 = vmatpush1.msra.mxu0 %v3704
    %4000 = vmatprep.subr.mxu0 0.0
    %4001 = vmatpush1.msra.mxu0 0.0
    %4002 = vmatprep.subr.mxu0 0.0
    %4003 = vmatpush1.msra.mxu0 0.0
    %4004 = vmatprep.subr.mxu0 0.0
    %4005 = vmatpush1.msra.mxu0 0.0
    %4006 = vmatprep.subr.mxu0 0.0
    %4007 = vmatpush1.msra.mxu0 0.0
    %4008 = vmatprep.subr.mxu0 0.0
    %4009 = vmatpush1.msra.mxu0 0.0
    %4010 = vmatprep.subr.mxu0 0.0
    %4011 = vmatpush1.msra.mxu0 0.0
    %4012 = vmatprep.subr.mxu0 0.0
    %4013 = vmatpush1.msra.mxu0 0.0
    %4014 = vmatprep.subr.mxu0 0.0
    %4015 = vmatpush1.msra.mxu0 0.0
    %4016 = vmatprep.subr.mxu0 0.0
    %4017 = vmatpush1.msra.mxu0 0.0
    %4018 = vmatprep.subr.mxu0 0.0
    %4019 = vmatpush1.msra.mxu0 0.0
    %4020 = vmatprep.subr.mxu0 0.0
    %4021 = vmatpush1.msra.mxu0 0.0
    %4022 = vmatprep.subr.mxu0 0.0
    %4023 = vmatpush1.msra.mxu0 0.0
    %4024 = vmatprep.subr.mxu0 0.0
    %4025 = vmatpush1.msra.mxu0 0.0
    %4026 = vmatprep.subr.mxu0 0.0
    %4027 = vmatpush1.msra.mxu0 0.0
    %4028 = vmatprep.subr.mxu0 0.0
    %4029 = vmatpush1.msra.mxu0 0.0
    %4030 = vmatprep.subr.mxu0 0.0
    %4031 = vmatpush1.msra.mxu0 0.0
    %4032 = vmatprep.subr.mxu0 0.0
    %4033 = vmatpush1.msra.mxu0 0.0
    %4034 = vmatprep.subr.mxu0 0.0
    %4035 = vmatpush1.msra.mxu0 0.0
    %4036 = vmatprep.subr.mxu0 0.0
    %4037 = vmatpush1.msra.mxu0 0.0
    %4038 = vmatprep.subr.mxu0 0.0
    %4039 = vmatpush1.msra.mxu0 0.0
    %4040 = vmatprep.subr.mxu0 0.0
    %4041 = vmatpush1.msra.mxu0 0.0
    %4042 = vmatprep.subr.mxu0 0.0
    %4043 = vmatpush1.msra.mxu0 0.0
    %4044 = vmatprep.subr.mxu0 0.0
    %4045 = vmatpush1.msra.mxu0 0.0
    %4046 = vmatprep.subr.mxu0 0.0
    %4047 = vmatpush1.msra.mxu0 0.0
    %4048 = vmatprep.subr.mxu0 0.0
    %4049 = vmatpush1.msra.mxu0 0.0
    %4050 = vmatprep.subr.mxu0 0.0
    %4051 = vmatpush1.msra.mxu0 0.0
    %4052 = vmatprep.subr.mxu0 0.0
    %4053 = vmatpush1.msra.mxu0 0.0
    %4054 = vmatprep.subr.mxu0 0.0
    %4055 = vmatpush1.msra.mxu0 0.0
    %4056 = vmatprep.subr.mxu0 0.0
    %4057 = vmatpush1.msra.mxu0 0.0
    %4058 = vmatprep.subr.mxu0 0.0
    %4059 = vmatpush1.msra.mxu0 0.0
    %4060 = vmatprep.subr.mxu0 0.0
    %4061 = vmatpush1.msra.mxu0 0.0
    %4062 = vmatprep.mubr.f32.mxu0 0.0
    %4063 = vmatmul.mubr.f32.gmra.mrb[0].mxu0 %v3712
    %v4064 = vpop.f32.mrb[0].mxu0
    %v4065 = vadd.f32 0.0, %v4064
    %v4066 = vpop.f32.mrb[0].mxu0
    %v4067 = vadd.f32 0.0, %v4066
    %4068 = vdwg.mxu0
    %4069 = vmatprep.subr.mxu0 %v3707
    %4070 = vmatpush1.msra.mxu0 %v3706
    %4071 = vmatprep.subr.mxu0 0.0
    %4072 = vmatpush1.msra.mxu0 0.0
    %4073 = vmatprep.subr.mxu0 0.0
    %4074 = vmatpush1.msra.mxu0 0.0
    %4075 = vmatprep.subr.mxu0 0.0
    %4076 = vmatpush1.msra.mxu0 0.0
    %4077 = vmatprep.subr.mxu0 0.0
    %4078 = vmatpush1.msra.mxu0 0.0
    %4079 = vmatprep.subr.mxu0 0.0
    %4080 = vmatpush1.msra.mxu0 0.0
    %4081 = vmatprep.subr.mxu0 0.0
    %4082 = vmatpush1.msra.mxu0 0.0
    %4083 = vmatprep.subr.mxu0 0.0
    %4084 = vmatpush1.msra.mxu0 0.0
    %4085 = vmatprep.subr.mxu0 0.0
    %4086 = vmatpush1.msra.mxu0 0.0
    %4087 = vmatprep.subr.mxu0 0.0
    %4088 = vmatpush1.msra.mxu0 0.0
    %4089 = vmatprep.subr.mxu0 0.0
    %4090 = vmatpush1.msra.mxu0 0.0
    %4091 = vmatprep.subr.mxu0 0.0
    %4092 = vmatpush1.msra.mxu0 0.0
    %4093 = vmatprep.subr.mxu0 0.0
    %4094 = vmatpush1.msra.mxu0 0.0
    %4095 = vmatprep.subr.mxu0 0.0
    %4096 = vmatpush1.msra.mxu0 0.0
    %4097 = vmatprep.subr.mxu0 0.0
    %4098 = vmatpush1.msra.mxu0 0.0
    %4099 = vmatprep.subr.mxu0 0.0
    %4100 = vmatpush1.msra.mxu0 0.0
    %4101 = vmatprep.subr.mxu0 0.0
    %4102 = vmatpush1.msra.mxu0 0.0
    %4103 = vmatprep.subr.mxu0 0.0
    %4104 = vmatpush1.msra.mxu0 0.0
    %4105 = vmatprep.subr.mxu0 0.0
    %4106 = vmatpush1.msra.mxu0 0.0
    %4107 = vmatprep.subr.mxu0 0.0
    %4108 = vmatpush1.msra.mxu0 0.0
    %4109 = vmatprep.subr.mxu0 0.0
    %4110 = vmatpush1.msra.mxu0 0.0
    %4111 = vmatprep.subr.mxu0 0.0
    %4112 = vmatpush1.msra.mxu0 0.0
    %4113 = vmatprep.subr.mxu0 0.0
    %4114 = vmatpush1.msra.mxu0 0.0
    %4115 = vmatprep.subr.mxu0 0.0
    %4116 = vmatpush1.msra.mxu0 0.0
    %4117 = vmatprep.subr.mxu0 0.0
    %4118 = vmatpush1.msra.mxu0 0.0
    %4119 = vmatprep.subr.mxu0 0.0
    %4120 = vmatpush1.msra.mxu0 0.0
    %4121 = vmatprep.subr.mxu0 0.0
    %4122 = vmatpush1.msra.mxu0 0.0
    %4123 = vmatprep.subr.mxu0 0.0
    %4124 = vmatpush1.msra.mxu0 0.0
    %4125 = vmatprep.subr.mxu0 0.0
    %4126 = vmatpush1.msra.mxu0 0.0
    %4127 = vmatprep.subr.mxu0 0.0
    %4128 = vmatpush1.msra.mxu0 0.0
    %4129 = vmatprep.subr.mxu0 0.0
    %4130 = vmatpush1.msra.mxu0 0.0
    %4131 = vmatprep.subr.mxu0 0.0
    %4132 = vmatpush1.msra.mxu0 0.0
    %4133 = vmatprep.mubr.f32.mxu0 0.0
    %4134 = vmatmul.mubr.f32.gmra.mrb[0].mxu0 %v3712
    %v4135 = vpop.f32.mrb[0].mxu0
    %v4136 = vadd.f32 0.0, %v4135
    %v4137 = vpop.f32.mrb[0].mxu0
    %v4138 = vadd.f32 0.0, %v4137
    %4139 = vdwg.mxu0
    %4140 = vmatprep.subr.mxu0 %v3709
    %4141 = vmatpush1.msra.mxu0 %v3708
    %4142 = vmatprep.subr.mxu0 0.0
    %4143 = vmatpush1.msra.mxu0 0.0
    %4144 = vmatprep.subr.mxu0 0.0
    %4145 = vmatpush1.msra.mxu0 0.0
    %4146 = vmatprep.subr.mxu0 0.0
    %4147 = vmatpush1.msra.mxu0 0.0
    %4148 = vmatprep.subr.mxu0 0.0
    %4149 = vmatpush1.msra.mxu0 0.0
    %4150 = vmatprep.subr.mxu0 0.0
    %4151 = vmatpush1.msra.mxu0 0.0
    %4152 = vmatprep.subr.mxu0 0.0
    %4153 = vmatpush1.msra.mxu0 0.0
    %4154 = vmatprep.subr.mxu0 0.0
    %4155 = vmatpush1.msra.mxu0 0.0
    %4156 = vmatprep.subr.mxu0 0.0
    %4157 = vmatpush1.msra.mxu0 0.0
    %4158 = vmatprep.subr.mxu0 0.0
    %4159 = vmatpush1.msra.mxu0 0.0
    %4160 = vmatprep.subr.mxu0 0.0
    %4161 = vmatpush1.msra.mxu0 0.0
    %4162 = vmatprep.subr.mxu0 0.0
    %4163 = vmatpush1.msra.mxu0 0.0
    %4164 = vmatprep.subr.mxu0 0.0
    %4165 = vmatpush1.msra.mxu0 0.0
    %4166 = vmatprep.subr.mxu0 0.0
    %4167 = vmatpush1.msra.mxu0 0.0
    %4168 = vmatprep.subr.mxu0 0.0
    %4169 = vmatpush1.msra.mxu0 0.0
    %4170 = vmatprep.subr.mxu0 0.0
    %4171 = vmatpush1.msra.mxu0 0.0
    %4172 = vmatprep.subr.mxu0 0.0
    %4173 = vmatpush1.msra.mxu0 0.0
    %4174 = vmatprep.subr.mxu0 0.0
    %4175 = vmatpush1.msra.mxu0 0.0
    %4176 = vmatprep.subr.mxu0 0.0
    %4177 = vmatpush1.msra.mxu0 0.0
    %4178 = vmatprep.subr.mxu0 0.0
    %4179 = vmatpush1.msra.mxu0 0.0
    %4180 = vmatprep.subr.mxu0 0.0
    %4181 = vmatpush1.msra.mxu0 0.0
    %4182 = vmatprep.subr.mxu0 0.0
    %4183 = vmatpush1.msra.mxu0 0.0
    %4184 = vmatprep.subr.mxu0 0.0
    %4185 = vmatpush1.msra.mxu0 0.0
    %4186 = vmatprep.subr.mxu0 0.0
    %4187 = vmatpush1.msra.mxu0 0.0
    %4188 = vmatprep.subr.mxu0 0.0
    %4189 = vmatpush1.msra.mxu0 0.0
    %4190 = vmatprep.subr.mxu0 0.0
    %4191 = vmatpush1.msra.mxu0 0.0
    %4192 = vmatprep.subr.mxu0 0.0
    %4193 = vmatpush1.msra.mxu0 0.0
    %4194 = vmatprep.subr.mxu0 0.0
    %4195 = vmatpush1.msra.mxu0 0.0
    %4196 = vmatprep.subr.mxu0 0.0
    %4197 = vmatpush1.msra.mxu0 0.0
    %4198 = vmatprep.subr.mxu0 0.0
    %4199 = vmatpush1.msra.mxu0 0.0
    %4200 = vmatprep.subr.mxu0 0.0
    %4201 = vmatpush1.msra.mxu0 0.0
    %4202 = vmatprep.subr.mxu0 0.0
    %4203 = vmatpush1.msra.mxu0 0.0
    %4204 = vmatprep.mubr.f32.mxu0 0.0
    %4205 = vmatmul.mubr.f32.gmra.mrb[0].mxu0 %v3712
    %v4206 = vpop.f32.mrb[0].mxu0
    %v4207 = vadd.f32 0.0, %v4206
    %v4208 = vpop.f32.mrb[0].mxu0
    %v4209 = vadd.f32 0.0, %v4208
    %4210 = vdwg.mxu0
    %4211 = vmatprep.subr.mxu0 0.0
    %4212 = vmatpush1.msra.mxu0 %v3710
    %4213 = vmatprep.subr.mxu0 0.0
    %4214 = vmatpush1.msra.mxu0 0.0
    %4215 = vmatprep.subr.mxu0 0.0
    %4216 = vmatpush1.msra.mxu0 0.0
    %4217 = vmatprep.subr.mxu0 0.0
    %4218 = vmatpush1.msra.mxu0 0.0
    %4219 = vmatprep.subr.mxu0 0.0
    %4220 = vmatpush1.msra.mxu0 0.0
    %4221 = vmatprep.subr.mxu0 0.0
    %4222 = vmatpush1.msra.mxu0 0.0
    %4223 = vmatprep.subr.mxu0 0.0
    %4224 = vmatpush1.msra.mxu0 0.0
    %4225 = vmatprep.subr.mxu0 0.0
    %4226 = vmatpush1.msra.mxu0 0.0
    %4227 = vmatprep.subr.mxu0 0.0
    %4228 = vmatpush1.msra.mxu0 0.0
    %4229 = vmatprep.subr.mxu0 0.0
    %4230 = vmatpush1.msra.mxu0 0.0
    %4231 = vmatprep.subr.mxu0 0.0
    %4232 = vmatpush1.msra.mxu0 0.0
    %4233 = vmatprep.subr.mxu0 0.0
    %4234 = vmatpush1.msra.mxu0 0.0
    %4235 = vmatprep.subr.mxu0 0.0
    %4236 = vmatpush1.msra.mxu0 0.0
    %4237 = vmatprep.subr.mxu0 0.0
    %4238 = vmatpush1.msra.mxu0 0.0
    %4239 = vmatprep.subr.mxu0 0.0
    %4240 = vmatpush1.msra.mxu0 0.0
    %4241 = vmatprep.subr.mxu0 0.0
    %4242 = vmatpush1.msra.mxu0 0.0
    %4243 = vmatprep.subr.mxu0 0.0
    %4244 = vmatpush1.msra.mxu0 0.0
    %4245 = vmatprep.subr.mxu0 0.0
    %4246 = vmatpush1.msra.mxu0 0.0
    %4247 = vmatprep.subr.mxu0 0.0
    %4248 = vmatpush1.msra.mxu0 0.0
    %4249 = vmatprep.subr.mxu0 0.0
    %4250 = vmatpush1.msra.mxu0 0.0
    %4251 = vmatprep.subr.mxu0 0.0
    %4252 = vmatpush1.msra.mxu0 0.0
    %4253 = vmatprep.subr.mxu0 0.0
    %4254 = vmatpush1.msra.mxu0 0.0
    %4255 = vmatprep.subr.mxu0 0.0
    %4256 = vmatpush1.msra.mxu0 0.0
    %4257 = vmatprep.subr.mxu0 0.0
    %4258 = vmatpush1.msra.mxu0 0.0
    %4259 = vmatprep.subr.mxu0 0.0
    %4260 = vmatpush1.msra.mxu0 0.0
    %4261 = vmatprep.subr.mxu0 0.0
    %4262 = vmatpush1.msra.mxu0 0.0
    %4263 = vmatprep.subr.mxu0 0.0
    %4264 = vmatpush1.msra.mxu0 0.0
    %4265 = vmatprep.subr.mxu0 0.0
    %4266 = vmatpush1.msra.mxu0 0.0
    %4267 = vmatprep.subr.mxu0 0.0
    %4268 = vmatpush1.msra.mxu0 0.0
    %4269 = vmatprep.subr.mxu0 0.0
    %4270 = vmatpush1.msra.mxu0 0.0
    %4271 = vmatprep.subr.mxu0 0.0
    %4272 = vmatpush1.msra.mxu0 0.0
    %4273 = vmatprep.subr.mxu0 0.0
    %4274 = vmatpush1.msra.mxu0 0.0
    %4275 = vmatprep.mubr.f32.mxu0 0.0
    %4276 = vmatmul.mubr.f32.gmra.mrb[0].mxu0 %v3712
    %v4277 = vpop.f32.mrb[0].mxu0
    %v4278 = vadd.f32 0.0, %v4277
    %v4279 = vpop.f32.mrb[0].mxu0
    %4280 = vdwg.mxu0
    %v4281 = vadd.f32 %v3679, %v3781
    %v4282 = vadd.f32 %v3680, %v3783
    %v4283 = vadd.f32 %v3681, %v3852
    %v4284 = vadd.f32 %v3682, %v3854
    %v4285 = vadd.f32 %v3683, %v3923
    %v4286 = vadd.f32 %v3684, %v3925
    %v4287 = vadd.f32 %v3685, %v3994
    %v4288 = vadd.f32 %v3686, %v3996
    %v4289 = vadd.f32 %v3687, %v4065
    %v4290 = vadd.f32 %v3688, %v4067
    %v4291 = vadd.f32 %v3689, %v4136
    %v4292 = vadd.f32 %v3690, %v4138
    %v4293 = vadd.f32 %v3691, %v4207
    %v4294 = vadd.f32 %v3692, %v4209
    %v4295 = vadd.f32 %v3693, %v4278
    %4296 = vst [vmem:[#allocation3] sm:$0xff] %v4281
    %4297 = vst [vmem:[#allocation3 + $0x8] sm:$0xff] %v4282
    %4298 = vst [vmem:[#allocation3 + $0x10] sm:$0xff] %v4283
    %4299 = vst [vmem:[#allocation3 + $0x18] sm:$0xff] %v4284
    %4300 = vst [vmem:[#allocation3 + $0x20] sm:$0xff] %v4285
    %4301 = vst [vmem:[#allocation3 + $0x28] sm:$0xff] %v4286
    %4302 = vst [vmem:[#allocation3 + $0x30] sm:$0xff] %v4287
    %4303 = vst [vmem:[#allocation3 + $0x38] sm:$0xff] %v4288
    %4304 = vst [vmem:[#allocation3 + $0x40] sm:$0xff] %v4289
    %4305 = vst [vmem:[#allocation3 + $0x48] sm:$0xff] %v4290
    %4306 = vst [vmem:[#allocation3 + $0x50] sm:$0xff] %v4291
    %4307 = vst [vmem:[#allocation3 + $0x58] sm:$0xff] %v4292
    %4308 = vst [vmem:[#allocation3 + $0x60] sm:$0xff] %v4293
    %4309 = vst [vmem:[#allocation3 + $0x68] sm:$0xff] %v4294
    %4310 = vst [vmem:[#allocation3 + $0x70] sm:$0xff] %v4295
    %v4311 = vld [vmem:[#allocation3] sm:$0xff]
    %v4312 = vld [vmem:[#allocation3 + $0x8] sm:$0xff]
    %v4313 = vld [vmem:[#allocation3 + $0x10] sm:$0xff]
    %v4314 = vld [vmem:[#allocation3 + $0x18] sm:$0xff]
    %v4315 = vld [vmem:[#allocation3 + $0x20] sm:$0xff]
    %v4316 = vld [vmem:[#allocation3 + $0x28] sm:$0xff]
    %v4317 = vld [vmem:[#allocation3 + $0x30] sm:$0xff]
    %v4318 = vld [vmem:[#allocation3 + $0x38] sm:$0xff]
    %v4319 = vld [vmem:[#allocation3 + $0x40] sm:$0xff]
    %v4320 = vld [vmem:[#allocation3 + $0x48] sm:$0xff]
    %v4321 = vld [vmem:[#allocation3 + $0x50] sm:$0xff]
    %v4322 = vld [vmem:[#allocation3 + $0x58] sm:$0xff]
    %v4323 = vld [vmem:[#allocation3 + $0x60] sm:$0xff]
    %v4324 = vld [vmem:[#allocation3 + $0x68] sm:$0xff]
    %v4325 = vld [vmem:[#allocation3 + $0x70] sm:$0xff]
    %v4326 = vld [vmem:[#allocation3 + $0x78] sm:$0xff]
    %v4327 = vld [vmem:[%s5] sm:$0xff]
    %v4328 = vld [vmem:[%s6] sm:$0xff]
    %v4329 = vadd.f32 %v4311, %v4312
    %v4330 = vadd.f32 %v4329, %v4313
    %v4331 = vadd.f32 %v4330, %v4314
    %v4332 = vadd.f32 %v4331, %v4315
    %v4333 = vadd.f32 %v4332, %v4316
    %v4334 = vadd.f32 %v4333, %v4317
    %v4335 = vadd.f32 %v4334, %v4318
    %v4336 = vadd.f32 %v4335, %v4319
    %v4337 = vadd.f32 %v4336, %v4320
    %v4338 = vadd.f32 %v4337, %v4321
    %v4339 = vadd.f32 %v4338, %v4322
    %v4340 = vadd.f32 %v4339, %v4323
    %v4341 = vadd.f32 %v4340, %v4324
    %v4342 = vadd.f32 %v4341, %v4325
    %v4343 = vadd.f32 %v4342, %v4326
    %4344 = vadd.xlane.f32.xlu0 %v4343
    %v4345 = vpop.xlane.xlu0 %4344
    %v4346 = vmul.f32 %v4345, 0.001953125
    %v4347 = vsub.f32 %v4311, %v4346
    %v4348 = vsub.f32 %v4312, %v4346
    %v4349 = vsub.f32 %v4313, %v4346
    %v4350 = vsub.f32 %v4314, %v4346
    %v4351 = vsub.f32 %v4315, %v4346
    %v4352 = vsub.f32 %v4316, %v4346
    %v4353 = vsub.f32 %v4317, %v4346
    %v4354 = vsub.f32 %v4318, %v4346
    %v4355 = vsub.f32 %v4319, %v4346
    %v4356 = vsub.f32 %v4320, %v4346
    %v4357 = vsub.f32 %v4321, %v4346
    %v4358 = vsub.f32 %v4322, %v4346
    %v4359 = vsub.f32 %v4323, %v4346
    %v4360 = vsub.f32 %v4324, %v4346
    %v4361 = vsub.f32 %v4325, %v4346
    %v4362 = vsub.f32 %v4326, %v4346
    %v4363 = vmul.f32 %v4347, %v4347
    %v4364 = vmul.f32 %v4348, %v4348
    %v4365 = vmul.f32 %v4349, %v4349
    %v4366 = vmul.f32 %v4350, %v4350
    %v4367 = vmul.f32 %v4351, %v4351
    %v4368 = vmul.f32 %v4352, %v4352
    %v4369 = vmul.f32 %v4353, %v4353
    %v4370 = vmul.f32 %v4354, %v4354
    %v4371 = vmul.f32 %v4355, %v4355
    %v4372 = vmul.f32 %v4356, %v4356
    %v4373 = vmul.f32 %v4357, %v4357
    %v4374 = vmul.f32 %v4358, %v4358
    %v4375 = vmul.f32 %v4359, %v4359
    %v4376 = vmul.f32 %v4360, %v4360
    %v4377 = vmul.f32 %v4361, %v4361
    %v4378 = vmul.f32 %v4362, %v4362
    %v4379 = vmul.f32 %v4363, %v163
    %v4380 = vmul.f32 %v4364, %v164
    %v4381 = vmul.f32 %v4365, %v165
    %v4382 = vmul.f32 %v4366, %v166
    %v4383 = vmul.f32 %v4367, %v167
    %v4384 = vmul.f32 %v4368, %v168
    %v4385 = vmul.f32 %v4369, %v169
    %v4386 = vmul.f32 %v4370, %v170
    %v4387 = vmul.f32 %v4371, %v171
    %v4388 = vmul.f32 %v4372, %v172
    %v4389 = vmul.f32 %v4373, %v173
    %v4390 = vmul.f32 %v4374, %v174
    %v4391 = vmul.f32 %v4375, %v175
    %v4392 = vmul.f32 %v4376, %v176
    %v4393 = vmul.f32 %v4377, %v177
    %v4394 = vmul.f32 %v4378, %v178
    %v4395 = vadd.f32 %v4379, %v4380
    %v4396 = vadd.f32 %v4395, %v4381
    %v4397 = vadd.f32 %v4396, %v4382
    %v4398 = vadd.f32 %v4397, %v4383
    %v4399 = vadd.f32 %v4398, %v4384
    %v4400 = vadd.f32 %v4399, %v4385
    %v4401 = vadd.f32 %v4400, %v4386
    %v4402 = vadd.f32 %v4401, %v4387
    %v4403 = vadd.f32 %v4402, %v4388
    %v4404 = vadd.f32 %v4403, %v4389
    %v4405 = vadd.f32 %v4404, %v4390
    %v4406 = vadd.f32 %v4405, %v4391
    %v4407 = vadd.f32 %v4406, %v4392
    %v4408 = vadd.f32 %v4407, %v4393
    %v4409 = vadd.f32 %v4408, %v4394
    %4410 = vadd.xlane.f32.xlu0 %v4409
    %v4411 = vpop.xlane.xlu0 %4410
    %v4412 = vmul.f32 %v4411, 0.001953125
    %v4413 = vadd.f32 %v4412, 1e-05
    %v4414 = vrsqrt.pop %v4413
    %v4415 = vmul.f32 %v4327, %v4414
    %4417 = vset.pattern.permute.xlu0 0
    %4418 = vperm.xlu0 %4417, %v4415
    %v4419 = vpop.permute.xlu0 %4418
    %v4421 = vmul.f32 %v4311, %v4419
    %v4422 = vmul.f32 %v4312, %v4419
    %v4423 = vmul.f32 %v4313, %v4419
    %v4424 = vmul.f32 %v4314, %v4419
    %v4425 = vmul.f32 %v4315, %v4419
    %v4426 = vmul.f32 %v4316, %v4419
    %v4427 = vmul.f32 %v4317, %v4419
    %v4428 = vmul.f32 %v4318, %v4419
    %v4429 = vmul.f32 %v4319, %v4419
    %v4430 = vmul.f32 %v4320, %v4419
    %v4431 = vmul.f32 %v4321, %v4419
    %v4432 = vmul.f32 %v4322, %v4419
    %v4433 = vmul.f32 %v4323, %v4419
    %v4434 = vmul.f32 %v4324, %v4419
    %v4435 = vmul.f32 %v4325, %v4419
    %v4436 = vmul.f32 %v4326, %v4419
    %v4437 = vmul.f32 %v4346, %v4415
    %v4438 = vsub.f32 %v4328, %v4437
    %4440 = vset.pattern.permute.xlu0 0
    %4441 = vperm.xlu0 %4440, %v4438
    %v4442 = vpop.permute.xlu0 %4441
    %v4444 = vadd.f32 %v4421, %v4442
    %v4445 = vadd.f32 %v4422, %v4442
    %v4446 = vadd.f32 %v4423, %v4442
    %v4447 = vadd.f32 %v4424, %v4442
    %v4448 = vadd.f32 %v4425, %v4442
    %v4449 = vadd.f32 %v4426, %v4442
    %v4450 = vadd.f32 %v4427, %v4442
    %v4451 = vadd.f32 %v4428, %v4442
    %v4452 = vadd.f32 %v4429, %v4442
    %v4453 = vadd.f32 %v4430, %v4442
    %v4454 = vadd.f32 %v4431, %v4442
    %v4455 = vadd.f32 %v4432, %v4442
    %v4456 = vadd.f32 %v4433, %v4442
    %v4457 = vadd.f32 %v4434, %v4442
    %v4458 = vadd.f32 %v4435, %v4442
    %v4459 = vadd.f32 %v4436, %v4442
    %vm4460 = vcmp.gt.f32.partialorder %v4444, 0.0
    %vm4461 = vcmp.gt.f32.partialorder %v4445, 0.0
    %vm4462 = vcmp.gt.f32.partialorder %v4446, 0.0
    %vm4463 = vcmp.gt.f32.partialorder %v4447, 0.0
    %vm4464 = vcmp.gt.f32.partialorder %v4448, 0.0
    %vm4465 = vcmp.gt.f32.partialorder %v4449, 0.0
    %vm4466 = vcmp.gt.f32.partialorder %v4450, 0.0
    %vm4467 = vcmp.gt.f32.partialorder %v4451, 0.0
    %vm4468 = vcmp.gt.f32.partialorder %v4452, 0.0
    %vm4469 = vcmp.gt.f32.partialorder %v4453, 0.0
    %vm4470 = vcmp.gt.f32.partialorder %v4454, 0.0
    %vm4471 = vcmp.gt.f32.partialorder %v4455, 0.0
    %vm4472 = vcmp.gt.f32.partialorder %v4456, 0.0
    %vm4473 = vcmp.gt.f32.partialorder %v4457, 0.0
    %vm4474 = vcmp.gt.f32.partialorder %v4458, 0.0
    %vm4475 = vcmp.gt.f32.partialorder %v4459, 0.0
    %v4476 = vmin.f32 %v4444, 0.0
    %v4477 = vmin.f32 %v4445, 0.0
    %v4478 = vmin.f32 %v4446, 0.0
    %v4479 = vmin.f32 %v4447, 0.0
    %v4480 = vmin.f32 %v4448, 0.0
    %v4481 = vmin.f32 %v4449, 0.0
    %v4482 = vmin.f32 %v4450, 0.0
    %v4483 = vmin.f32 %v4451, 0.0
    %v4484 = vmin.f32 %v4452, 0.0
    %v4485 = vmin.f32 %v4453, 0.0
    %v4486 = vmin.f32 %v4454, 0.0
    %v4487 = vmin.f32 %v4455, 0.0
    %v4488 = vmin.f32 %v4456, 0.0
    %v4489 = vmin.f32 %v4457, 0.0
    %v4490 = vmin.f32 %v4458, 0.0
    %v4491 = vmin.f32 %v4459, 0.0
    %v4492 = vmul.f32 %v4476, 1.442695
    %v4493 = vpow.pop %v4492
    %v4494 = vmul.f32 %v4477, 1.442695
    %v4495 = vpow.pop %v4494
    %v4496 = vmul.f32 %v4478, 1.442695
    %v4497 = vpow.pop %v4496
    %v4498 = vmul.f32 %v4479, 1.442695
    %v4499 = vpow.pop %v4498
    %v4500 = vmul.f32 %v4480, 1.442695
    %v4501 = vpow.pop %v4500
    %v4502 = vmul.f32 %v4481, 1.442695
    %v4503 = vpow.pop %v4502
    %v4504 = vmul.f32 %v4482, 1.442695
    %v4505 = vpow.pop %v4504
    %v4506 = vmul.f32 %v4483, 1.442695
    %v4507 = vpow.pop %v4506
    %v4508 = vmul.f32 %v4484, 1.442695
    %v4509 = vpow.pop %v4508
    %v4510 = vmul.f32 %v4485, 1.442695
    %v4511 = vpow.pop %v4510
    %v4512 = vmul.f32 %v4486, 1.442695
    %v4513 = vpow.pop %v4512
    %v4514 = vmul.f32 %v4487, 1.442695
    %v4515 = vpow.pop %v4514
    %v4516 = vmul.f32 %v4488, 1.442695
    %v4517 = vpow.pop %v4516
    %v4518 = vmul.f32 %v4489, 1.442695
    %v4519 = vpow.pop %v4518
    %v4520 = vmul.f32 %v4490, 1.442695
    %v4521 = vpow.pop %v4520
    %v4522 = vmul.f32 %v4491, 1.442695
    %v4523 = vpow.pop %v4522
    %v4524 = vsub.f32 %v4493, 1.0
    %v4525 = vsub.f32 %v4495, 1.0
    %v4526 = vsub.f32 %v4497, 1.0
    %v4527 = vsub.f32 %v4499, 1.0
    %v4528 = vsub.f32 %v4501, 1.0
    %v4529 = vsub.f32 %v4503, 1.0
    %v4530 = vsub.f32 %v4505, 1.0
    %v4531 = vsub.f32 %v4507, 1.0
    %v4532 = vsub.f32 %v4509, 1.0
    %v4533 = vsub.f32 %v4511, 1.0
    %v4534 = vsub.f32 %v4513, 1.0
    %v4535 = vsub.f32 %v4515, 1.0
    %v4536 = vsub.f32 %v4517, 1.0
    %v4537 = vsub.f32 %v4519, 1.0
    %v4538 = vsub.f32 %v4521, 1.0
    %v4539 = vsub.f32 %v4523, 1.0
    %v4540 = vsel %vm4460, %v4444, %v4524
    %v4541 = vsel %vm4461, %v4445, %v4525
    %v4542 = vsel %vm4462, %v4446, %v4526
    %v4543 = vsel %vm4463, %v4447, %v4527
    %v4544 = vsel %vm4464, %v4448, %v4528
    %v4545 = vsel %vm4465, %v4449, %v4529
    %v4546 = vsel %vm4466, %v4450, %v4530
    %v4547 = vsel %vm4467, %v4451, %v4531
    %v4548 = vsel %vm4468, %v4452, %v4532
    %v4549 = vsel %vm4469, %v4453, %v4533
    %v4550 = vsel %vm4470, %v4454, %v4534
    %v4551 = vsel %vm4471, %v4455, %v4535
    %v4552 = vsel %vm4472, %v4456, %v4536
    %v4553 = vsel %vm4473, %v4457, %v4537
    %v4554 = vsel %vm4474, %v4458, %v4538
    %v4555 = vsel %vm4475, %v4459, %v4539
    %v4556 = vld [vmem:[%s7] sm:$0xff]
    %v4557 = vld [vmem:[%s0] sm:$0xff]
    %v4558 = vld [vmem:[%s0 + $0x8] sm:$0xff]
    %v4559 = vld [vmem:[%s0 + $0x10] sm:$0xff]
    %v4560 = vld [vmem:[%s0 + $0x18] sm:$0xff]
    %v4561 = vld [vmem:[%s0 + $0x20] sm:$0xff]
    %v4562 = vld [vmem:[%s0 + $0x28] sm:$0xff]
    %v4563 = vld [vmem:[%s0 + $0x30] sm:$0xff]
    %v4564 = vld [vmem:[%s0 + $0x38] sm:$0xff]
    %v4573 = vcombine.high %v4557, %v4557
    %v4574 = vcombine.high %v4558, %v4558
    %v4575 = vcombine.high %v4559, %v4559
    %v4576 = vcombine.high %v4560, %v4560
    %v4577 = vcombine.high %v4561, %v4561
    %v4578 = vcombine.high %v4562, %v4562
    %v4579 = vcombine.high %v4563, %v4563
    %v4580 = vcombine.high %v4564, %v4564
    %v4582 = vsel %vm205, %v4556, 0
    %v4584 = vsel %vm209, %v4557, 0
    %v4586 = vsel %vm209, %v4573, 0
    %v4588 = vsel %vm209, %v4558, 0
    %v4590 = vsel %vm209, %v4574, 0
    %v4592 = vsel %vm209, %v4559, 0
    %v4594 = vsel %vm209, %v4575, 0
    %v4596 = vsel %vm209, %v4560, 0
    %v4598 = vsel %vm209, %v4576, 0
    %v4600 = vsel %vm209, %v4561, 0
    %v4602 = vsel %vm209, %v4577, 0
    %v4604 = vsel %vm209, %v4562, 0
    %v4606 = vsel %vm209, %v4578, 0
    %v4608 = vsel %vm209, %v4563, 0
    %v4610 = vsel %vm209, %v4579, 0
    %v4612 = vsel %vm209, %v4564, 0
    %v4614 = vsel %vm209, %v4580, 0
    %4616 = vmatprep.subr.mxu0 %v4586
    %4617 = vmatpush1.msra.mxu0 %v4584
    %4618 = vmatprep.subr.mxu0 0.0
    %4619 = vmatpush1.msra.mxu0 0.0
    %4620 = vmatprep.subr.mxu0 0.0
    %4621 = vmatpush1.msra.mxu0 0.0
    %4622 = vmatprep.subr.mxu0 0.0
    %4623 = vmatpush1.msra.mxu0 0.0
    %4624 = vmatprep.subr.mxu0 0.0
    %4625 = vmatpush1.msra.mxu0 0.0
    %4626 = vmatprep.subr.mxu0 0.0
    %4627 = vmatpush1.msra.mxu0 0.0
    %4628 = vmatprep.subr.mxu0 0.0
    %4629 = vmatpush1.msra.mxu0 0.0
    %4630 = vmatprep.subr.mxu0 0.0
    %4631 = vmatpush1.msra.mxu0 0.0
    %4632 = vmatprep.subr.mxu0 0.0
    %4633 = vmatpush1.msra.mxu0 0.0
    %4634 = vmatprep.subr.mxu0 0.0
    %4635 = vmatpush1.msra.mxu0 0.0
    %4636 = vmatprep.subr.mxu0 0.0
    %4637 = vmatpush1.msra.mxu0 0.0
    %4638 = vmatprep.subr.mxu0 0.0
    %4639 = vmatpush1.msra.mxu0 0.0
    %4640 = vmatprep.subr.mxu0 0.0
    %4641 = vmatpush1.msra.mxu0 0.0
    %4642 = vmatprep.subr.mxu0 0.0
    %4643 = vmatpush1.msra.mxu0 0.0
    %4644 = vmatprep.subr.mxu0 0.0
    %4645 = vmatpush1.msra.mxu0 0.0
    %4646 = vmatprep.subr.mxu0 0.0
    %4647 = vmatpush1.msra.mxu0 0.0
    %4648 = vmatprep.subr.mxu0 0.0
    %4649 = vmatpush1.msra.mxu0 0.0
    %4650 = vmatprep.subr.mxu0 0.0
    %4651 = vmatpush1.msra.mxu0 0.0
    %4652 = vmatprep.subr.mxu0 0.0
    %4653 = vmatpush1.msra.mxu0 0.0
    %4654 = vmatprep.subr.mxu0 0.0
    %4655 = vmatpush1.msra.mxu0 0.0
    %4656 = vmatprep.subr.mxu0 0.0
    %4657 = vmatpush1.msra.mxu0 0.0
    %4658 = vmatprep.subr.mxu0 0.0
    %4659 = vmatpush1.msra.mxu0 0.0
    %4660 = vmatprep.subr.mxu0 0.0
    %4661 = vmatpush1.msra.mxu0 0.0
    %4662 = vmatprep.subr.mxu0 0.0
    %4663 = vmatpush1.msra.mxu0 0.0
    %4664 = vmatprep.subr.mxu0 0.0
    %4665 = vmatpush1.msra.mxu0 0.0
    %4666 = vmatprep.subr.mxu0 0.0
    %4667 = vmatpush1.msra.mxu0 0.0
    %4668 = vmatprep.subr.mxu0 0.0
    %4669 = vmatpush1.msra.mxu0 0.0
    %4670 = vmatprep.subr.mxu0 0.0
    %4671 = vmatpush1.msra.mxu0 0.0
    %4672 = vmatprep.subr.mxu0 0.0
    %4673 = vmatpush1.msra.mxu0 0.0
    %4674 = vmatprep.subr.mxu0 0.0
    %4675 = vmatpush1.msra.mxu0 0.0
    %4676 = vmatprep.subr.mxu0 0.0
    %4677 = vmatpush1.msra.mxu0 0.0
    %4678 = vmatprep.subr.mxu0 0.0
    %4679 = vmatpush1.msra.mxu0 0.0
    %4680 = vmatprep.mubr.f32.mxu0 0.0
    %4681 = vmatmul.mubr.f32.gmra.mrb[0].mxu0 %v4582
    %v4682 = vpop.f32.mrb[0].mxu0
    %v4683 = vadd.f32 0.0, %v4682
    %v4684 = vpop.f32.mrb[0].mxu0
    %v4685 = vadd.f32 0.0, %v4684
    %4686 = vdwg.mxu0
    %4687 = vmatprep.subr.mxu0 %v4590
    %4688 = vmatpush1.msra.mxu0 %v4588
    %4689 = vmatprep.subr.mxu0 0.0
    %4690 = vmatpush1.msra.mxu0 0.0
    %4691 = vmatprep.subr.mxu0 0.0
    %4692 = vmatpush1.msra.mxu0 0.0
    %4693 = vmatprep.subr.mxu0 0.0
    %4694 = vmatpush1.msra.mxu0 0.0
    %4695 = vmatprep.subr.mxu0 0.0
    %4696 = vmatpush1.msra.mxu0 0.0
    %4697 = vmatprep.subr.mxu0 0.0
    %4698 = vmatpush1.msra.mxu0 0.0
    %4699 = vmatprep.subr.mxu0 0.0
    %4700 = vmatpush1.msra.mxu0 0.0
    %4701 = vmatprep.subr.mxu0 0.0
    %4702 = vmatpush1.msra.mxu0 0.0
    %4703 = vmatprep.subr.mxu0 0.0
    %4704 = vmatpush1.msra.mxu0 0.0
    %4705 = vmatprep.subr.mxu0 0.0
    %4706 = vmatpush1.msra.mxu0 0.0
    %4707 = vmatprep.subr.mxu0 0.0
    %4708 = vmatpush1.msra.mxu0 0.0
    %4709 = vmatprep.subr.mxu0 0.0
    %4710 = vmatpush1.msra.mxu0 0.0
    %4711 = vmatprep.subr.mxu0 0.0
    %4712 = vmatpush1.msra.mxu0 0.0
    %4713 = vmatprep.subr.mxu0 0.0
    %4714 = vmatpush1.msra.mxu0 0.0
    %4715 = vmatprep.subr.mxu0 0.0
    %4716 = vmatpush1.msra.mxu0 0.0
    %4717 = vmatprep.subr.mxu0 0.0
    %4718 = vmatpush1.msra.mxu0 0.0
    %4719 = vmatprep.subr.mxu0 0.0
    %4720 = vmatpush1.msra.mxu0 0.0
    %4721 = vmatprep.subr.mxu0 0.0
    %4722 = vmatpush1.msra.mxu0 0.0
    %4723 = vmatprep.subr.mxu0 0.0
    %4724 = vmatpush1.msra.mxu0 0.0
    %4725 = vmatprep.subr.mxu0 0.0
    %4726 = vmatpush1.msra.mxu0 0.0
    %4727 = vmatprep.subr.mxu0 0.0
    %4728 = vmatpush1.msra.mxu0 0.0
    %4729 = vmatprep.subr.mxu0 0.0
    %4730 = vmatpush1.msra.mxu0 0.0
    %4731 = vmatprep.subr.mxu0 0.0
    %4732 = vmatpush1.msra.mxu0 0.0
    %4733 = vmatprep.subr.mxu0 0.0
    %4734 = vmatpush1.msra.mxu0 0.0
    %4735 = vmatprep.subr.mxu0 0.0
    %4736 = vmatpush1.msra.mxu0 0.0
    %4737 = vmatprep.subr.mxu0 0.0
    %4738 = vmatpush1.msra.mxu0 0.0
    %4739 = vmatprep.subr.mxu0 0.0
    %4740 = vmatpush1.msra.mxu0 0.0
    %4741 = vmatprep.subr.mxu0 0.0
    %4742 = vmatpush1.msra.mxu0 0.0
    %4743 = vmatprep.subr.mxu0 0.0
    %4744 = vmatpush1.msra.mxu0 0.0
    %4745 = vmatprep.subr.mxu0 0.0
    %4746 = vmatpush1.msra.mxu0 0.0
    %4747 = vmatprep.subr.mxu0 0.0
    %4748 = vmatpush1.msra.mxu0 0.0
    %4749 = vmatprep.subr.mxu0 0.0
    %4750 = vmatpush1.msra.mxu0 0.0
    %4751 = vmatprep.mubr.f32.mxu0 0.0
    %4752 = vmatmul.mubr.f32.gmra.mrb[0].mxu0 %v4582
    %v4753 = vpop.f32.mrb[0].mxu0
    %v4754 = vadd.f32 0.0, %v4753
    %v4755 = vpop.f32.mrb[0].mxu0
    %v4756 = vadd.f32 0.0, %v4755
    %4757 = vdwg.mxu0
    %4758 = vmatprep.subr.mxu0 %v4594
    %4759 = vmatpush1.msra.mxu0 %v4592
    %4760 = vmatprep.subr.mxu0 0.0
    %4761 = vmatpush1.msra.mxu0 0.0
    %4762 = vmatprep.subr.mxu0 0.0
    %4763 = vmatpush1.msra.mxu0 0.0
    %4764 = vmatprep.subr.mxu0 0.0
    %4765 = vmatpush1.msra.mxu0 0.0
    %4766 = vmatprep.subr.mxu0 0.0
    %4767 = vmatpush1.msra.mxu0 0.0
    %4768 = vmatprep.subr.mxu0 0.0
    %4769 = vmatpush1.msra.mxu0 0.0
    %4770 = vmatprep.subr.mxu0 0.0
    %4771 = vmatpush1.msra.mxu0 0.0
    %4772 = vmatprep.subr.mxu0 0.0
    %4773 = vmatpush1.msra.mxu0 0.0
    %4774 = vmatprep.subr.mxu0 0.0
    %4775 = vmatpush1.msra.mxu0 0.0
    %4776 = vmatprep.subr.mxu0 0.0
    %4777 = vmatpush1.msra.mxu0 0.0
    %4778 = vmatprep.subr.mxu0 0.0
    %4779 = vmatpush1.msra.mxu0 0.0
    %4780 = vmatprep.subr.mxu0 0.0
    %4781 = vmatpush1.msra.mxu0 0.0
    %4782 = vmatprep.subr.mxu0 0.0
    %4783 = vmatpush1.msra.mxu0 0.0
    %4784 = vmatprep.subr.mxu0 0.0
    %4785 = vmatpush1.msra.mxu0 0.0
    %4786 = vmatprep.subr.mxu0 0.0
    %4787 = vmatpush1.msra.mxu0 0.0
    %4788 = vmatprep.subr.mxu0 0.0
    %4789 = vmatpush1.msra.mxu0 0.0
    %4790 = vmatprep.subr.mxu0 0.0
    %4791 = vmatpush1.msra.mxu0 0.0
    %4792 = vmatprep.subr.mxu0 0.0
    %4793 = vmatpush1.msra.mxu0 0.0
    %4794 = vmatprep.subr.mxu0 0.0
    %4795 = vmatpush1.msra.mxu0 0.0
    %4796 = vmatprep.subr.mxu0 0.0
    %4797 = vmatpush1.msra.mxu0 0.0
    %4798 = vmatprep.subr.mxu0 0.0
    %4799 = vmatpush1.msra.mxu0 0.0
    %4800 = vmatprep.subr.mxu0 0.0
    %4801 = vmatpush1.msra.mxu0 0.0
    %4802 = vmatprep.subr.mxu0 0.0
    %4803 = vmatpush1.msra.mxu0 0.0
    %4804 = vmatprep.subr.mxu0 0.0
    %4805 = vmatpush1.msra.mxu0 0.0
    %4806 = vmatprep.subr.mxu0 0.0
    %4807 = vmatpush1.msra.mxu0 0.0
    %4808 = vmatprep.subr.mxu0 0.0
    %4809 = vmatpush1.msra.mxu0 0.0
    %4810 = vmatprep.subr.mxu0 0.0
    %4811 = vmatpush1.msra.mxu0 0.0
    %4812 = vmatprep.subr.mxu0 0.0
    %4813 = vmatpush1.msra.mxu0 0.0
    %4814 = vmatprep.subr.mxu0 0.0
    %4815 = vmatpush1.msra.mxu0 0.0
    %4816 = vmatprep.subr.mxu0 0.0
    %4817 = vmatpush1.msra.mxu0 0.0
    %4818 = vmatprep.subr.mxu0 0.0
    %4819 = vmatpush1.msra.mxu0 0.0
    %4820 = vmatprep.subr.mxu0 0.0
    %4821 = vmatpush1.msra.mxu0 0.0
    %4822 = vmatprep.mubr.f32.mxu0 0.0
    %4823 = vmatmul.mubr.f32.gmra.mrb[0].mxu0 %v4582
    %v4824 = vpop.f32.mrb[0].mxu0
    %v4825 = vadd.f32 0.0, %v4824
    %v4826 = vpop.f32.mrb[0].mxu0
    %v4827 = vadd.f32 0.0, %v4826
    %4828 = vdwg.mxu0
    %4829 = vmatprep.subr.mxu0 %v4598
    %4830 = vmatpush1.msra.mxu0 %v4596
    %4831 = vmatprep.subr.mxu0 0.0
    %4832 = vmatpush1.msra.mxu0 0.0
    %4833 = vmatprep.subr.mxu0 0.0
    %4834 = vmatpush1.msra.mxu0 0.0
    %4835 = vmatprep.subr.mxu0 0.0
    %4836 = vmatpush1.msra.mxu0 0.0
    %4837 = vmatprep.subr.mxu0 0.0
    %4838 = vmatpush1.msra.mxu0 0.0
    %4839 = vmatprep.subr.mxu0 0.0
    %4840 = vmatpush1.msra.mxu0 0.0
    %4841 = vmatprep.subr.mxu0 0.0
    %4842 = vmatpush1.msra.mxu0 0.0
    %4843 = vmatprep.subr.mxu0 0.0
    %4844 = vmatpush1.msra.mxu0 0.0
    %4845 = vmatprep.subr.mxu0 0.0
    %4846 = vmatpush1.msra.mxu0 0.0
    %4847 = vmatprep.subr.mxu0 0.0
    %4848 = vmatpush1.msra.mxu0 0.0
    %4849 = vmatprep.subr.mxu0 0.0
    %4850 = vmatpush1.msra.mxu0 0.0
    %4851 = vmatprep.subr.mxu0 0.0
    %4852 = vmatpush1.msra.mxu0 0.0
    %4853 = vmatprep.subr.mxu0 0.0
    %4854 = vmatpush1.msra.mxu0 0.0
    %4855 = vmatprep.subr.mxu0 0.0
    %4856 = vmatpush1.msra.mxu0 0.0
    %4857 = vmatprep.subr.mxu0 0.0
    %4858 = vmatpush1.msra.mxu0 0.0
    %4859 = vmatprep.subr.mxu0 0.0
    %4860 = vmatpush1.msra.mxu0 0.0
    %4861 = vmatprep.subr.mxu0 0.0
    %4862 = vmatpush1.msra.mxu0 0.0
    %4863 = vmatprep.subr.mxu0 0.0
    %4864 = vmatpush1.msra.mxu0 0.0
    %4865 = vmatprep.subr.mxu0 0.0
    %4866 = vmatpush1.msra.mxu0 0.0
    %4867 = vmatprep.subr.mxu0 0.0
    %4868 = vmatpush1.msra.mxu0 0.0
    %4869 = vmatprep.subr.mxu0 0.0
    %4870 = vmatpush1.msra.mxu0 0.0
    %4871 = vmatprep.subr.mxu0 0.0
    %4872 = vmatpush1.msra.mxu0 0.0
    %4873 = vmatprep.subr.mxu0 0.0
    %4874 = vmatpush1.msra.mxu0 0.0
    %4875 = vmatprep.subr.mxu0 0.0
    %4876 = vmatpush1.msra.mxu0 0.0
    %4877 = vmatprep.subr.mxu0 0.0
    %4878 = vmatpush1.msra.mxu0 0.0
    %4879 = vmatprep.subr.mxu0 0.0
    %4880 = vmatpush1.msra.mxu0 0.0
    %4881 = vmatprep.subr.mxu0 0.0
    %4882 = vmatpush1.msra.mxu0 0.0
    %4883 = vmatprep.subr.mxu0 0.0
    %4884 = vmatpush1.msra.mxu0 0.0
    %4885 = vmatprep.subr.mxu0 0.0
    %4886 = vmatpush1.msra.mxu0 0.0
    %4887 = vmatprep.subr.mxu0 0.0
    %4888 = vmatpush1.msra.mxu0 0.0
    %4889 = vmatprep.subr.mxu0 0.0
    %4890 = vmatpush1.msra.mxu0 0.0
    %4891 = vmatprep.subr.mxu0 0.0
    %4892 = vmatpush1.msra.mxu0 0.0
    %4893 = vmatprep.mubr.f32.mxu0 0.0
    %4894 = vmatmul.mubr.f32.gmra.mrb[0].mxu0 %v4582
    %v4895 = vpop.f32.mrb[0].mxu0
    %v4896 = vadd.f32 0.0, %v4895
    %v4897 = vpop.f32.mrb[0].mxu0
    %v4898 = vadd.f32 0.0, %v4897
    %4899 = vdwg.mxu0
    %4900 = vmatprep.subr.mxu0 %v4602
    %4901 = vmatpush1.msra.mxu0 %v4600
    %4902 = vmatprep.subr.mxu0 0.0
    %4903 = vmatpush1.msra.mxu0 0.0
    %4904 = vmatprep.subr.mxu0 0.0
    %4905 = vmatpush1.msra.mxu0 0.0
    %4906 = vmatprep.subr.mxu0 0.0
    %4907 = vmatpush1.msra.mxu0 0.0
    %4908 = vmatprep.subr.mxu0 0.0
    %4909 = vmatpush1.msra.mxu0 0.0
    %4910 = vmatprep.subr.mxu0 0.0
    %4911 = vmatpush1.msra.mxu0 0.0
    %4912 = vmatprep.subr.mxu0 0.0
    %4913 = vmatpush1.msra.mxu0 0.0
    %4914 = vmatprep.subr.mxu0 0.0
    %4915 = vmatpush1.msra.mxu0 0.0
    %4916 = vmatprep.subr.mxu0 0.0
    %4917 = vmatpush1.msra.mxu0 0.0
    %4918 = vmatprep.subr.mxu0 0.0
    %4919 = vmatpush1.msra.mxu0 0.0
    %4920 = vmatprep.subr.mxu0 0.0
    %4921 = vmatpush1.msra.mxu0 0.0
    %4922 = vmatprep.subr.mxu0 0.0
    %4923 = vmatpush1.msra.mxu0 0.0
    %4924 = vmatprep.subr.mxu0 0.0
    %4925 = vmatpush1.msra.mxu0 0.0
    %4926 = vmatprep.subr.mxu0 0.0
    %4927 = vmatpush1.msra.mxu0 0.0
    %4928 = vmatprep.subr.mxu0 0.0
    %4929 = vmatpush1.msra.mxu0 0.0
    %4930 = vmatprep.subr.mxu0 0.0
    %4931 = vmatpush1.msra.mxu0 0.0
    %4932 = vmatprep.subr.mxu0 0.0
    %4933 = vmatpush1.msra.mxu0 0.0
    %4934 = vmatprep.subr.mxu0 0.0
    %4935 = vmatpush1.msra.mxu0 0.0
    %4936 = vmatprep.subr.mxu0 0.0
    %4937 = vmatpush1.msra.mxu0 0.0
    %4938 = vmatprep.subr.mxu0 0.0
    %4939 = vmatpush1.msra.mxu0 0.0
    %4940 = vmatprep.subr.mxu0 0.0
    %4941 = vmatpush1.msra.mxu0 0.0
    %4942 = vmatprep.subr.mxu0 0.0
    %4943 = vmatpush1.msra.mxu0 0.0
    %4944 = vmatprep.subr.mxu0 0.0
    %4945 = vmatpush1.msra.mxu0 0.0
    %4946 = vmatprep.subr.mxu0 0.0
    %4947 = vmatpush1.msra.mxu0 0.0
    %4948 = vmatprep.subr.mxu0 0.0
    %4949 = vmatpush1.msra.mxu0 0.0
    %4950 = vmatprep.subr.mxu0 0.0
    %4951 = vmatpush1.msra.mxu0 0.0
    %4952 = vmatprep.subr.mxu0 0.0
    %4953 = vmatpush1.msra.mxu0 0.0
    %4954 = vmatprep.subr.mxu0 0.0
    %4955 = vmatpush1.msra.mxu0 0.0
    %4956 = vmatprep.subr.mxu0 0.0
    %4957 = vmatpush1.msra.mxu0 0.0
    %4958 = vmatprep.subr.mxu0 0.0
    %4959 = vmatpush1.msra.mxu0 0.0
    %4960 = vmatprep.subr.mxu0 0.0
    %4961 = vmatpush1.msra.mxu0 0.0
    %4962 = vmatprep.subr.mxu0 0.0
    %4963 = vmatpush1.msra.mxu0 0.0
    %4964 = vmatprep.mubr.f32.mxu0 0.0
    %4965 = vmatmul.mubr.f32.gmra.mrb[0].mxu0 %v4582
    %v4966 = vpop.f32.mrb[0].mxu0
    %v4967 = vadd.f32 0.0, %v4966
    %v4968 = vpop.f32.mrb[0].mxu0
    %v4969 = vadd.f32 0.0, %v4968
    %4970 = vdwg.mxu0
    %4971 = vmatprep.subr.mxu0 %v4606
    %4972 = vmatpush1.msra.mxu0 %v4604
    %4973 = vmatprep.subr.mxu0 0.0
    %4974 = vmatpush1.msra.mxu0 0.0
    %4975 = vmatprep.subr.mxu0 0.0
    %4976 = vmatpush1.msra.mxu0 0.0
    %4977 = vmatprep.subr.mxu0 0.0
    %4978 = vmatpush1.msra.mxu0 0.0
    %4979 = vmatprep.subr.mxu0 0.0
    %4980 = vmatpush1.msra.mxu0 0.0
    %4981 = vmatprep.subr.mxu0 0.0
    %4982 = vmatpush1.msra.mxu0 0.0
    %4983 = vmatprep.subr.mxu0 0.0
    %4984 = vmatpush1.msra.mxu0 0.0
    %4985 = vmatprep.subr.mxu0 0.0
    %4986 = vmatpush1.msra.mxu0 0.0
    %4987 = vmatprep.subr.mxu0 0.0
    %4988 = vmatpush1.msra.mxu0 0.0
    %4989 = vmatprep.subr.mxu0 0.0
    %4990 = vmatpush1.msra.mxu0 0.0
    %4991 = vmatprep.subr.mxu0 0.0
    %4992 = vmatpush1.msra.mxu0 0.0
    %4993 = vmatprep.subr.mxu0 0.0
    %4994 = vmatpush1.msra.mxu0 0.0
    %4995 = vmatprep.subr.mxu0 0.0
    %4996 = vmatpush1.msra.mxu0 0.0
    %4997 = vmatprep.subr.mxu0 0.0
    %4998 = vmatpush1.msra.mxu0 0.0
    %4999 = vmatprep.subr.mxu0 0.0
    %5000 = vmatpush1.msra.mxu0 0.0
    %5001 = vmatprep.subr.mxu0 0.0
    %5002 = vmatpush1.msra.mxu0 0.0
    %5003 = vmatprep.subr.mxu0 0.0
    %5004 = vmatpush1.msra.mxu0 0.0
    %5005 = vmatprep.subr.mxu0 0.0
    %5006 = vmatpush1.msra.mxu0 0.0
    %5007 = vmatprep.subr.mxu0 0.0
    %5008 = vmatpush1.msra.mxu0 0.0
    %5009 = vmatprep.subr.mxu0 0.0
    %5010 = vmatpush1.msra.mxu0 0.0
    %5011 = vmatprep.subr.mxu0 0.0
    %5012 = vmatpush1.msra.mxu0 0.0
    %5013 = vmatprep.subr.mxu0 0.0
    %5014 = vmatpush1.msra.mxu0 0.0
    %5015 = vmatprep.subr.mxu0 0.0
    %5016 = vmatpush1.msra.mxu0 0.0
    %5017 = vmatprep.subr.mxu0 0.0
    %5018 = vmatpush1.msra.mxu0 0.0
    %5019 = vmatprep.subr.mxu0 0.0
    %5020 = vmatpush1.msra.mxu0 0.0
    %5021 = vmatprep.subr.mxu0 0.0
    %5022 = vmatpush1.msra.mxu0 0.0
    %5023 = vmatprep.subr.mxu0 0.0
    %5024 = vmatpush1.msra.mxu0 0.0
    %5025 = vmatprep.subr.mxu0 0.0
    %5026 = vmatpush1.msra.mxu0 0.0
    %5027 = vmatprep.subr.mxu0 0.0
    %5028 = vmatpush1.msra.mxu0 0.0
    %5029 = vmatprep.subr.mxu0 0.0
    %5030 = vmatpush1.msra.mxu0 0.0
    %5031 = vmatprep.subr.mxu0 0.0
    %5032 = vmatpush1.msra.mxu0 0.0
    %5033 = vmatprep.subr.mxu0 0.0
    %5034 = vmatpush1.msra.mxu0 0.0
    %5035 = vmatprep.mubr.f32.mxu0 0.0
    %5036 = vmatmul.mubr.f32.gmra.mrb[0].mxu0 %v4582
    %v5037 = vpop.f32.mrb[0].mxu0
    %v5038 = vadd.f32 0.0, %v5037
    %v5039 = vpop.f32.mrb[0].mxu0
    %v5040 = vadd.f32 0.0, %v5039
    %5041 = vdwg.mxu0
    %5042 = vmatprep.subr.mxu0 %v4610
    %5043 = vmatpush1.msra.mxu0 %v4608
    %5044 = vmatprep.subr.mxu0 0.0
    %5045 = vmatpush1.msra.mxu0 0.0
    %5046 = vmatprep.subr.mxu0 0.0
    %5047 = vmatpush1.msra.mxu0 0.0
    %5048 = vmatprep.subr.mxu0 0.0
    %5049 = vmatpush1.msra.mxu0 0.0
    %5050 = vmatprep.subr.mxu0 0.0
    %5051 = vmatpush1.msra.mxu0 0.0
    %5052 = vmatprep.subr.mxu0 0.0
    %5053 = vmatpush1.msra.mxu0 0.0
    %5054 = vmatprep.subr.mxu0 0.0
    %5055 = vmatpush1.msra.mxu0 0.0
    %5056 = vmatprep.subr.mxu0 0.0
    %5057 = vmatpush1.msra.mxu0 0.0
    %5058 = vmatprep.subr.mxu0 0.0
    %5059 = vmatpush1.msra.mxu0 0.0
    %5060 = vmatprep.subr.mxu0 0.0
    %5061 = vmatpush1.msra.mxu0 0.0
    %5062 = vmatprep.subr.mxu0 0.0
    %5063 = vmatpush1.msra.mxu0 0.0
    %5064 = vmatprep.subr.mxu0 0.0
    %5065 = vmatpush1.msra.mxu0 0.0
    %5066 = vmatprep.subr.mxu0 0.0
    %5067 = vmatpush1.msra.mxu0 0.0
    %5068 = vmatprep.subr.mxu0 0.0
    %5069 = vmatpush1.msra.mxu0 0.0
    %5070 = vmatprep.subr.mxu0 0.0
    %5071 = vmatpush1.msra.mxu0 0.0
    %5072 = vmatprep.subr.mxu0 0.0
    %5073 = vmatpush1.msra.mxu0 0.0
    %5074 = vmatprep.subr.mxu0 0.0
    %5075 = vmatpush1.msra.mxu0 0.0
    %5076 = vmatprep.subr.mxu0 0.0
    %5077 = vmatpush1.msra.mxu0 0.0
    %5078 = vmatprep.subr.mxu0 0.0
    %5079 = vmatpush1.msra.mxu0 0.0
    %5080 = vmatprep.subr.mxu0 0.0
    %5081 = vmatpush1.msra.mxu0 0.0
    %5082 = vmatprep.subr.mxu0 0.0
    %5083 = vmatpush1.msra.mxu0 0.0
    %5084 = vmatprep.subr.mxu0 0.0
    %5085 = vmatpush1.msra.mxu0 0.0
    %5086 = vmatprep.subr.mxu0 0.0
    %5087 = vmatpush1.msra.mxu0 0.0
    %5088 = vmatprep.subr.mxu0 0.0
    %5089 = vmatpush1.msra.mxu0 0.0
    %5090 = vmatprep.subr.mxu0 0.0
    %5091 = vmatpush1.msra.mxu0 0.0
    %5092 = vmatprep.subr.mxu0 0.0
    %5093 = vmatpush1.msra.mxu0 0.0
    %5094 = vmatprep.subr.mxu0 0.0
    %5095 = vmatpush1.msra.mxu0 0.0
    %5096 = vmatprep.subr.mxu0 0.0
    %5097 = vmatpush1.msra.mxu0 0.0
    %5098 = vmatprep.subr.mxu0 0.0
    %5099 = vmatpush1.msra.mxu0 0.0
    %5100 = vmatprep.subr.mxu0 0.0
    %5101 = vmatpush1.msra.mxu0 0.0
    %5102 = vmatprep.subr.mxu0 0.0
    %5103 = vmatpush1.msra.mxu0 0.0
    %5104 = vmatprep.subr.mxu0 0.0
    %5105 = vmatpush1.msra.mxu0 0.0
    %5106 = vmatprep.mubr.f32.mxu0 0.0
    %5107 = vmatmul.mubr.f32.gmra.mrb[0].mxu0 %v4582
    %v5108 = vpop.f32.mrb[0].mxu0
    %v5109 = vadd.f32 0.0, %v5108
    %v5110 = vpop.f32.mrb[0].mxu0
    %v5111 = vadd.f32 0.0, %v5110
    %5112 = vdwg.mxu0
    %5113 = vmatprep.subr.mxu0 %v4614
    %5114 = vmatpush1.msra.mxu0 %v4612
    %5115 = vmatprep.subr.mxu0 0.0
    %5116 = vmatpush1.msra.mxu0 0.0
    %5117 = vmatprep.subr.mxu0 0.0
    %5118 = vmatpush1.msra.mxu0 0.0
    %5119 = vmatprep.subr.mxu0 0.0
    %5120 = vmatpush1.msra.mxu0 0.0
    %5121 = vmatprep.subr.mxu0 0.0
    %5122 = vmatpush1.msra.mxu0 0.0
    %5123 = vmatprep.subr.mxu0 0.0
    %5124 = vmatpush1.msra.mxu0 0.0
    %5125 = vmatprep.subr.mxu0 0.0
    %5126 = vmatpush1.msra.mxu0 0.0
    %5127 = vmatprep.subr.mxu0 0.0
    %5128 = vmatpush1.msra.mxu0 0.0
    %5129 = vmatprep.subr.mxu0 0.0
    %5130 = vmatpush1.msra.mxu0 0.0
    %5131 = vmatprep.subr.mxu0 0.0
    %5132 = vmatpush1.msra.mxu0 0.0
    %5133 = vmatprep.subr.mxu0 0.0
    %5134 = vmatpush1.msra.mxu0 0.0
    %5135 = vmatprep.subr.mxu0 0.0
    %5136 = vmatpush1.msra.mxu0 0.0
    %5137 = vmatprep.subr.mxu0 0.0
    %5138 = vmatpush1.msra.mxu0 0.0
    %5139 = vmatprep.subr.mxu0 0.0
    %5140 = vmatpush1.msra.mxu0 0.0
    %5141 = vmatprep.subr.mxu0 0.0
    %5142 = vmatpush1.msra.mxu0 0.0
    %5143 = vmatprep.subr.mxu0 0.0
    %5144 = vmatpush1.msra.mxu0 0.0
    %5145 = vmatprep.subr.mxu0 0.0
    %5146 = vmatpush1.msra.mxu0 0.0
    %5147 = vmatprep.subr.mxu0 0.0
    %5148 = vmatpush1.msra.mxu0 0.0
    %5149 = vmatprep.subr.mxu0 0.0
    %5150 = vmatpush1.msra.mxu0 0.0
    %5151 = vmatprep.subr.mxu0 0.0
    %5152 = vmatpush1.msra.mxu0 0.0
    %5153 = vmatprep.subr.mxu0 0.0
    %5154 = vmatpush1.msra.mxu0 0.0
    %5155 = vmatprep.subr.mxu0 0.0
    %5156 = vmatpush1.msra.mxu0 0.0
    %5157 = vmatprep.subr.mxu0 0.0
    %5158 = vmatpush1.msra.mxu0 0.0
    %5159 = vmatprep.subr.mxu0 0.0
    %5160 = vmatpush1.msra.mxu0 0.0
    %5161 = vmatprep.subr.mxu0 0.0
    %5162 = vmatpush1.msra.mxu0 0.0
    %5163 = vmatprep.subr.mxu0 0.0
    %5164 = vmatpush1.msra.mxu0 0.0
    %5165 = vmatprep.subr.mxu0 0.0
    %5166 = vmatpush1.msra.mxu0 0.0
    %5167 = vmatprep.subr.mxu0 0.0
    %5168 = vmatpush1.msra.mxu0 0.0
    %5169 = vmatprep.subr.mxu0 0.0
    %5170 = vmatpush1.msra.mxu0 0.0
    %5171 = vmatprep.subr.mxu0 0.0
    %5172 = vmatpush1.msra.mxu0 0.0
    %5173 = vmatprep.subr.mxu0 0.0
    %5174 = vmatpush1.msra.mxu0 0.0
    %5175 = vmatprep.subr.mxu0 0.0
    %5176 = vmatpush1.msra.mxu0 0.0
    %5177 = vmatprep.mubr.f32.mxu0 0.0
    %5178 = vmatmul.mubr.f32.gmra.mrb[0].mxu0 %v4582
    %v5179 = vpop.f32.mrb[0].mxu0
    %v5180 = vadd.f32 0.0, %v5179
    %v5181 = vpop.f32.mrb[0].mxu0
    %v5182 = vadd.f32 0.0, %v5181
    %5183 = vdwg.mxu0
    %v5184 = vadd.f32 %v4540, %v4683
    %v5185 = vadd.f32 %v4541, %v4685
    %v5186 = vadd.f32 %v4542, %v4754
    %v5187 = vadd.f32 %v4543, %v4756
    %v5188 = vadd.f32 %v4544, %v4825
    %v5189 = vadd.f32 %v4545, %v4827
    %v5190 = vadd.f32 %v4546, %v4896
    %v5191 = vadd.f32 %v4547, %v4898
    %v5192 = vadd.f32 %v4548, %v4967
    %v5193 = vadd.f32 %v4549, %v4969
    %v5194 = vadd.f32 %v4550, %v5038
    %v5195 = vadd.f32 %v4551, %v5040
    %v5196 = vadd.f32 %v4552, %v5109
    %v5197 = vadd.f32 %v4553, %v5111
    %v5198 = vadd.f32 %v4554, %v5180
    %v5199 = vadd.f32 %v4555, %v5182
    %v5200 = vld [vmem:[%s8] sm:$0xff]
    %5202 = vset.pattern.permute.xlu0 0
    %5203 = vperm.xlu0 %5202, %v5200
    %v5204 = vpop.permute.xlu0 %5203
    %v5206 = vadd.f32 %v5184, %v5204
    %v5207 = vadd.f32 %v5185, %v5204
    %v5208 = vadd.f32 %v5186, %v5204
    %v5209 = vadd.f32 %v5187, %v5204
    %v5210 = vadd.f32 %v5188, %v5204
    %v5211 = vadd.f32 %v5189, %v5204
    %v5212 = vadd.f32 %v5190, %v5204
    %v5213 = vadd.f32 %v5191, %v5204
    %v5214 = vadd.f32 %v5192, %v5204
    %v5215 = vadd.f32 %v5193, %v5204
    %v5216 = vadd.f32 %v5194, %v5204
    %v5217 = vadd.f32 %v5195, %v5204
    %v5218 = vadd.f32 %v5196, %v5204
    %v5219 = vadd.f32 %v5197, %v5204
    %v5220 = vadd.f32 %v5198, %v5204
    %v5221 = vadd.f32 %v5199, %v5204
    %5222 = vst [vmem:[#allocation3] sm:$0xff] %v5206
    %5223 = vst [vmem:[#allocation3 + $0x8] sm:$0xff] %v5207
    %5224 = vst [vmem:[#allocation3 + $0x10] sm:$0xff] %v5208
    %5225 = vst [vmem:[#allocation3 + $0x18] sm:$0xff] %v5209
    %5226 = vst [vmem:[#allocation3 + $0x20] sm:$0xff] %v5210
    %5227 = vst [vmem:[#allocation3 + $0x28] sm:$0xff] %v5211
    %5228 = vst [vmem:[#allocation3 + $0x30] sm:$0xff] %v5212
    %5229 = vst [vmem:[#allocation3 + $0x38] sm:$0xff] %v5213
    %5230 = vst [vmem:[#allocation3 + $0x40] sm:$0xff] %v5214
    %5231 = vst [vmem:[#allocation3 + $0x48] sm:$0xff] %v5215
    %5232 = vst [vmem:[#allocation3 + $0x50] sm:$0xff] %v5216
    %5233 = vst [vmem:[#allocation3 + $0x58] sm:$0xff] %v5217
    %5234 = vst [vmem:[#allocation3 + $0x60] sm:$0xff] %v5218
    %5235 = vst [vmem:[#allocation3 + $0x68] sm:$0xff] %v5219
    %5236 = vst [vmem:[#allocation3 + $0x70] sm:$0xff] %v5220
    %5237 = vst [vmem:[#allocation3 + $0x78] sm:$0xff] %v5221
    // Predicated region
    $region38: #{tpu_custom_call.1} parent=1 // pred_check
      _
    $region39: #{tpu_custom_call.1} parent=1 // pred_check_branch
      %5239 = sbr.rel (0) target = $region41
    $region40: #{tpu_custom_call.1} parent=1 // pred_region
      %s5241 = ssub.s32 2048, 2048
      %5242 = vsyncadd [#allocation4], %s5241
      %s5244 = sshll.u32 [#allocation3], 4
      %s5245 = int_to_ptr.vmem [resolvable:$true] %s5244
      %5247 = dma.vmem_to_hbm [thread:$0]  %s5245, 2048, %s9, [#allocation4]
    $region41: #{tpu_custom_call.1} parent=1 // pred_fallthru
      _
    // Predicated region
    $region42: #{tpu_custom_call.1} parent=1 // pred_check
      _
    $region43: #{tpu_custom_call.1} parent=1 // pred_check_branch
      %5249 = sbr.rel (0) target = $region45
    $region44: #{tpu_custom_call.1} parent=1 // pred_region
      %5250 = dma.done [#allocation4], 2048
    $region45: #{tpu_custom_call.1} parent=1 // pred_fallthru
      _
    %5251 = vsyncpa [#allocation4], 1

</llo_original>
